<compile_context>
chip_gen: v7x
topology: tpu7x:2x2x1
jax: 0.10.0
libtpu: 0.0.40
codegen_flags: <defaults>
</compile_context>

<pallas_src>
import jax
import jax.numpy as jnp
from jax import lax
from jax.experimental import pallas as pl
from jax.experimental.pallas import tpu as pltpu

MAPS = 32            # number of maps == LSTM sequence length
H = 49               # 7*7 = dim_feature = LSTM hidden size
HP = 128             # lane-aligned padded hidden size (one 128-lane block per gate)
G = 4 * HP           # packed gate width (i, f, g, o)
T = MAPS
UNROLL = 4           # manual unroll factor of the recurrence loops (T % UNROLL == 0)


# ----------------------------------------------------------------------------
# Fully fused forward kernel
# ----------------------------------------------------------------------------
def _fused_forward_kernel(
    x_ref,        # (B, 3, H*W)   f32   input, spatial dims flattened
    w1xf_ref,     # (T, 3, G)     bf16  resnet-standin slice folded with Wih_l1_fwd
    w1xr_ref,     # (T, 3, G)     bf16  same for layer-1 reverse
    b1f_ref,      # (T, 1, G)     f32   per-time bias (resnet bias fold + lstm biases), fwd
    b1r_ref,      # (T, 1, G)     f32   same, reverse
    whh1f_ref,    # (HP, G)       bf16  layer-1 fwd recurrent weights (padded)
    whh1r_ref,    # (HP, G)       bf16  layer-1 rev recurrent weights (padded)
    wih2a_ref,    # (HP, G)       bf16  layer-2(rev) input weights acting on layer-1 fwd h
    wih2b_ref,    # (HP, G)       bf16  layer-2(rev) input weights acting on layer-1 rev h
    b2_ref,       # (1, G)        f32   layer-2(rev) bias
    whh2_ref,     # (HP, G)       bf16  layer-2(rev) recurrent weights (padded)
    fwl_ref,      # (T, 1, HP)    f32   feed weights for lstm_feature, per time step
    wsg_ref,      # (3, HP)       f32   swin-standin folded into feed
    bsg_ref,      # (1, HP)       f32   swin/feed bias fold
    o_ref,        # (B, 2)        f32   gaze output
    xp1f_s,       # (T, B, G)     f32   scratch: hoisted layer-1 fwd input projection
    xp1r_s,       # (T, B, G)     f32   scratch: hoisted layer-1 rev input projection
    hseqf_s,      # (T, B, HP)    f32   scratch: layer-1 fwd hidden sequence
    hseqr_s,      # (T, B, HP)    f32   scratch: layer-1 rev hidden sequence
    xp2_s,        # (T, B, G)     f32   scratch: hoisted layer-2(rev) input projection
):
    B = x_ref.shape[0]

    # Backbone stand-ins start from a global spatial mean pool (glue).
    pooled = jnp.mean(x_ref[...], axis=-1)                    # (B, 3) f32
    pooled_b = pooled.astype(jnp.bfloat16)

    # ---- hoisted layer-1 input projections (both directions), off the recurrence
    def proj1_body(t, carry):
        xp1f_s[t] = (jnp.dot(pooled_b, w1xf_ref[t],
                             preferred_element_type=jnp.float32) + b1f_ref[t])
        xp1r_s[t] = (jnp.dot(pooled_b, w1xr_ref[t],
                             preferred_element_type=jnp.float32) + b1r_ref[t])
        return carry

    lax.fori_loop(0, T, proj1_body, 0)

    def cell(gates, c):
        # PyTorch packed gate order i, f, g, o; each gate in its own 128-lane block,
        # so these slices are lane-aligned views.  Padded lanes stay exactly 0:
        # gates_pad = 0 -> i = f = o = 0.5, g = 0 -> c_pad = 0 -> h_pad = 0.
        i_g = jax.nn.sigmoid(gates[:, 0 * HP:1 * HP])
        f_g = jax.nn.sigmoid(gates[:, 1 * HP:2 * HP])
        g_g = jnp.tanh(gates[:, 2 * HP:3 * HP])
        o_g = jax.nn.sigmoid(gates[:, 3 * HP:4 * HP])
        c_new = f_g * c + i_g * g_g
        h_new = o_g * jnp.tanh(c_new)
        return h_new, c_new

    # ---- layer-1 bidirectional recurrence: both directions fused in one loop
    def l1_step(s, h_f, c_f, h_r, c_r):
        g_f = xp1f_s[s] + jnp.dot(h_f.astype(jnp.bfloat16), whh1f_ref[...],
                                  preferred_element_type=jnp.float32)
        g_r = xp1r_s[T - 1 - s] + jnp.dot(h_r.astype(jnp.bfloat16), whh1r_ref[...],
                                          preferred_element_type=jnp.float32)
        h_f, c_f = cell(g_f, c_f)
        h_r, c_r = cell(g_r, c_r)
        hseqf_s[s] = h_f                 # output position s
        hseqr_s[T - 1 - s] = h_r         # reverse stream output position T-1-s
        return h_f, c_f, h_r, c_r

    def l1_body(i, carry):
        s = i * UNROLL
        for u in range(UNROLL):
            carry = l1_step(s + u, *carry)
        return carry

    zero = jnp.zeros((B, HP), jnp.float32)
    lax.fori_loop(0, T // UNROLL, l1_body, (zero, zero, zero, zero))

    # ---- hoisted layer-2 (reverse direction) input projection
    b2 = b2_ref[...]

    def proj2_body(t, carry):
        xa = hseqf_s[t].astype(jnp.bfloat16)
        xb = hseqr_s[t].astype(jnp.bfloat16)
        xp2_s[t] = (jnp.dot(xa, wih2a_ref[...], preferred_element_type=jnp.float32)
                    + jnp.dot(xb, wih2b_ref[...], preferred_element_type=jnp.float32)
                    + b2)
        return carry

    lax.fori_loop(0, T, proj2_body, 0)

    # ---- layer-2 reverse recurrence.  The layer-2 FORWARD direction is dead code:
    #      lstm_out[:, :, -1] (feature index 97) lies entirely in the reverse half.
    #      The feed contribution of lstm_feature is accumulated on the fly.
    def l2_step(s, h2, c2, acc):
        t = T - 1 - s
        g2 = xp2_s[t] + jnp.dot(h2.astype(jnp.bfloat16), whh2_ref[...],
                                preferred_element_type=jnp.float32)
        h2, c2 = cell(g2, c2)
        acc = acc + h2[:, H - 1:H] * fwl_ref[t]               # (B,1) * (1,HP)
        return h2, c2, acc

    def l2_body(i, carry):
        s = i * UNROLL
        for u in range(UNROLL):
            carry = l2_step(s + u, *carry)
        return carry

    _, _, acc = lax.fori_loop(0, T // UNROLL, l2_body, (zero, zero, zero))

    # ---- feed: gaze = tr_feature @ feed_w[:32] + lstm_feature @ feed_w[32:] + feed_b
    #      (swin stand-in folded into wsg/bsg; lstm part accumulated in `acc`)
    gz = (jnp.dot(pooled, wsg_ref[...], preferred_element_type=jnp.float32)
          + bsg_ref[...] + acc)                               # (B, HP)
    o_ref[...] = gz[:, 0:2]


# ----------------------------------------------------------------------------
# Parameters (deterministic, in-script) in the "original" parameterization
# ----------------------------------------------------------------------------
def init_params(key):
    ks = jax.random.split(key, 24)
    ki = iter(ks)

    def u(shape, scale):
        return jax.random.uniform(next(ki), shape, jnp.float32, -scale, scale)

    s = H ** -0.5
    p = {}

    # LSTM(input=49, hidden=49, num_layers=2, bidirectional=True).
    # Weights stored pre-transposed as (Din, 4H); PyTorch gate order i, f, g, o;
    # separate b_ih / b_hh like PyTorch.
    lstm = []
    for din in (H, 2 * H):
        dirs = []
        for _d in range(2):                       # [forward, reverse]
            dirs.append(dict(w_ih=u((din, 4 * H), s), w_hh=u((H, 4 * H), s),
                             b_ih=u((4 * H,), s), b_hh=u((4 * H,), s)))
        lstm.append(dirs)
    p["lstm"] = lstm

    # TODO(synk): resnet18(True, maps=32) backbone is not defined in the source;
    # deterministic global-mean-pool + linear stand-in producing the (B,32,7,7) feature map.
    p["resnet_w"] = u((3, MAPS * H), 0.1)
    p["resnet_b"] = u((MAPS * H,), 0.1)

    # TODO(synk): SwinTransformer backbone is not defined in the source; linear stand-in
    # producing (B, 32) so that feed(Linear(64, 2)) is shape-consistent.
    p["swin_w"] = u((3, MAPS), 0.1)
    p["swin_b"] = u((MAPS,), 0.1)

    sf = (2 * MAPS) ** -0.5
    p["feed_w"] = u((2 * MAPS, 2), sf)            # feed = nn.Linear(2*maps, 2)
    p["feed_b"] = u((2,), sf)
    return p


# ----------------------------------------------------------------------------
# One-time repacking into the fused-kernel layout (folds + lane-aligned padding)
# ----------------------------------------------------------------------------
def _pad_gate_cols(w):
    """(..., 4*H) -> (..., 4*HP): each PyTorch gate block starts on a 128-lane boundary."""
    pads = [(0, 0)] * (w.ndim - 1) + [(0, HP - H)]
    return jnp.concatenate(
        [jnp.pad(w[..., q * H:(q + 1) * H], pads) for q in range(4)], axis=-1)


def _pad_rows(w):
    """(<=HP, X) -> (HP, X) with zero rows."""
    return jnp.pad(w, ((0, HP - w.shape[0]), (0, 0)))


def pack_params(p):
    l1f, l1r = p["lstm"][0]
    l2r = p["lstm"][1][1]        # layer-2 reverse; layer-2 forward is provably unused

    rw3 = p["resnet_w"].reshape(3, T, H)          # (3, T, 49)
    rb2 = p["resnet_b"].reshape(T, H)             # (T, 49)

    def fold_l1(d):
        wih = _pad_gate_cols(d["w_ih"])                               # (49, 512)
        w1x = jnp.einsum("ctk,kg->tcg", rw3, wih)                     # (T, 3, 512)
        b = _pad_gate_cols(d["b_ih"] + d["b_hh"])                     # (512,)
        b_t = jnp.einsum("tk,kg->tg", rb2, wih) + b[None, :]          # (T, 512)
        whh = _pad_rows(_pad_gate_cols(d["w_hh"]))                    # (128, 512)
        return (w1x.astype(jnp.bfloat16),
                b_t.reshape(T, 1, G).astype(jnp.float32),
                whh.astype(jnp.bfloat16))

    w1xf, b1f, whh1f = fold_l1(l1f)
    w1xr, b1r, whh1r = fold_l1(l1r)

    wih2 = _pad_gate_cols(l2r["w_ih"])                                # (98, 512)
    wih2a = _pad_rows(wih2[:H]).astype(jnp.bfloat16)                  # acts on layer-1 fwd h
    wih2b = _pad_rows(wih2[H:]).astype(jnp.bfloat16)                  # acts on layer-1 rev h
    whh2 = _pad_rows(_pad_gate_cols(l2r["w_hh"])).astype(jnp.bfloat16)
    b2 = _pad_gate_cols(l2r["b_ih"] + l2r["b_hh"]).reshape(1, G).astype(jnp.float32)

    fw_tr, fw_lstm = p["feed_w"][:MAPS], p["feed_w"][MAPS:]           # (32,2), (32,2)
    fwl = jnp.pad(fw_lstm, ((0, 0), (0, HP - 2))).reshape(T, 1, HP)
    wsg = jnp.pad(p["swin_w"] @ fw_tr, ((0, 0), (0, HP - 2)))         # (3, 128)
    bsg = jnp.pad(p["swin_b"] @ fw_tr + p["feed_b"], (0, HP - 2)).reshape(1, HP)

    return dict(w1xf=w1xf, w1xr=w1xr, b1f=b1f, b1r=b1r, whh1f=whh1f, whh1r=whh1r,
                wih2a=wih2a, wih2b=wih2b, b2=b2, whh2=whh2, fwl=fwl, wsg=wsg, bsg=bsg)


# ----------------------------------------------------------------------------
# Forward wrapper: single pallas_call for the whole model
# ----------------------------------------------------------------------------
def _full_spec(shape):
    zeros = (0,) * len(shape)
    return pl.BlockSpec(shape, lambda i: zeros)


@jax.jit
def model_forward(packed, x):
    B = x.shape[0]
    x3 = x.reshape(B, x.shape[1], x.shape[2] * x.shape[3])    # free reshape (B, 3, H*W)

    args = (x3, packed["w1xf"], packed["w1xr"], packed["b1f"], packed["b1r"],
            packed["whh1f"], packed["whh1r"], packed["wih2a"], packed["wih2b"],
            packed["b2"], packed["whh2"], packed["fwl"], packed["wsg"], packed["bsg"])

    return pl.pallas_call(
        _fused_forward_kernel,
        out_shape=jax.ShapeDtypeStruct((B, 2), jnp.float32),
        grid=(1,),
        in_specs=[_full_spec(a.shape) for a in args],
        out_specs=pl.BlockSpec((B, 2), lambda i: (0, 0)),
        scratch_shapes=[
            pltpu.VMEM((T, B, G), jnp.float32),    # xp1 fwd
            pltpu.VMEM((T, B, G), jnp.float32),    # xp1 rev
            pltpu.VMEM((T, B, HP), jnp.float32),   # layer-1 fwd hidden sequence
            pltpu.VMEM((T, B, HP), jnp.float32),   # layer-1 rev hidden sequence
            pltpu.VMEM((T, B, G), jnp.float32),    # xp2 (layer-2 reverse)
        ],
        compiler_params=pltpu.CompilerParams(dimension_semantics=("arbitrary",)),
    )(*args)


if __name__ == "__main__":
    key = jax.random.PRNGKey(0)
    k_x, k_p = jax.random.split(key)

    B = 2
    x = jax.random.normal(k_x, (B, 3, 56, 56), jnp.float32)   # NCHW input
    params = init_params(k_p)
    packed = pack_params(params)                               # one-time repack

    out = model_forward(packed, x)
    jax.block_until_ready(out)
    assert out.shape == (B, 2), out.shape
    assert bool(jnp.all(jnp.isfinite(out)))
    print("KERNEL_OK")
</pallas_src>

<mosaic_0001>
module attributes {stable_mosaic.version = 11 : i64} {
  func.func @_fused_forward_kernel(%arg0: i32, %arg1: memref<2x3x3136xf32, #tpu.memory_space<vmem>>, %arg2: memref<32x3x512xbf16, #tpu.memory_space<vmem>>, %arg3: memref<32x3x512xbf16, #tpu.memory_space<vmem>>, %arg4: memref<32x1x512xf32, #tpu.memory_space<vmem>>, %arg5: memref<32x1x512xf32, #tpu.memory_space<vmem>>, %arg6: memref<128x512xbf16, #tpu.memory_space<vmem>>, %arg7: memref<128x512xbf16, #tpu.memory_space<vmem>>, %arg8: memref<128x512xbf16, #tpu.memory_space<vmem>>, %arg9: memref<128x512xbf16, #tpu.memory_space<vmem>>, %arg10: memref<1x512xf32, #tpu.memory_space<vmem>>, %arg11: memref<128x512xbf16, #tpu.memory_space<vmem>>, %arg12: memref<32x1x128xf32, #tpu.memory_space<vmem>>, %arg13: memref<3x128xf32, #tpu.memory_space<vmem>>, %arg14: memref<1x128xf32, #tpu.memory_space<vmem>>, %arg15: memref<2x2xf32, #tpu.memory_space<vmem>>, %arg16: memref<32x2x512xf32, #tpu.memory_space<vmem>>, %arg17: memref<32x2x512xf32, #tpu.memory_space<vmem>>, %arg18: memref<32x2x128xf32, #tpu.memory_space<vmem>>, %arg19: memref<32x2x128xf32, #tpu.memory_space<vmem>>, %arg20: memref<32x2x512xf32, #tpu.memory_space<vmem>>) attributes {dimension_semantics = [#tpu.dimension_semantics<arbitrary>], iteration_bounds = array<i64: 1>, scalar_prefetch = 0 : i64, scratch_operands = 5 : i64, tpu.core_type = #tpu.core_type<tc>, window_params = [{pipeline_mode = #tpu.pipeline_mode<synchronous>, transform_indices = @transform_0, window_bounds = array<i64: 2, 3, 3136>}, {pipeline_mode = #tpu.pipeline_mode<synchronous>, transform_indices = @transform_1, window_bounds = array<i64: 32, 3, 512>}, {pipeline_mode = #tpu.pipeline_mode<synchronous>, transform_indices = @transform_2, window_bounds = array<i64: 32, 3, 512>}, {pipeline_mode = #tpu.pipeline_mode<synchronous>, transform_indices = @transform_3, window_bounds = array<i64: 32, 1, 512>}, {pipeline_mode = #tpu.pipeline_mode<synchronous>, transform_indices = @transform_4, window_bounds = array<i64: 32, 1, 512>}, {pipeline_mode = #tpu.pipeline_mode<synchronous>, transform_indices = @transform_5, window_bounds = array<i64: 128, 512>}, {pipeline_mode = #tpu.pipeline_mode<synchronous>, transform_indices = @transform_6, window_bounds = array<i64: 128, 512>}, {pipeline_mode = #tpu.pipeline_mode<synchronous>, transform_indices = @transform_7, window_bounds = array<i64: 128, 512>}, {pipeline_mode = #tpu.pipeline_mode<synchronous>, transform_indices = @transform_8, window_bounds = array<i64: 128, 512>}, {pipeline_mode = #tpu.pipeline_mode<synchronous>, transform_indices = @transform_9, window_bounds = array<i64: 1, 512>}, {pipeline_mode = #tpu.pipeline_mode<synchronous>, transform_indices = @transform_10, window_bounds = array<i64: 128, 512>}, {pipeline_mode = #tpu.pipeline_mode<synchronous>, transform_indices = @transform_11, window_bounds = array<i64: 32, 1, 128>}, {pipeline_mode = #tpu.pipeline_mode<synchronous>, transform_indices = @transform_12, window_bounds = array<i64: 3, 128>}, {pipeline_mode = #tpu.pipeline_mode<synchronous>, transform_indices = @transform_13, window_bounds = array<i64: 1, 128>}, {pipeline_mode = #tpu.pipeline_mode<synchronous>, transform_indices = @transform_14, window_bounds = array<i64: 2, 2>}]} {
    %c0 = arith.constant 0 : index
    %c0_0 = arith.constant 0 : index
    %c0_1 = arith.constant 0 : index
    %0 = vector.load %arg1[%c0, %c0_0, %c0_1] : memref<2x3x3136xf32, #tpu.memory_space<vmem>>, vector<2x3x3136xf32>
    %cst = arith.constant dense<0.000000e+00> : vector<2x3xf32>
    %1 = vector.multi_reduction <add>, %0, %cst [2] : vector<2x3x3136xf32> to vector<2x3xf32>
    %cst_2 = arith.constant 3.136000e+03 : f32
    %2 = vector.broadcast %cst_2 : f32 to vector<2x3xf32>
    %3 = arith.divf %1, %2 : vector<2x3xf32>
    %4 = arith.truncf %3 : vector<2x3xf32> to vector<2x3xbf16>
    %c0_i32 = arith.constant 0 : i32
    %c32_i32 = arith.constant 32 : i32
    %5 = arith.addi %c0_i32, %c32_i32 : i32
    %c1_i32 = arith.constant 1 : i32
    scf.for %arg21 = %c0_i32 to %5 step %c1_i32  : i32 {
      %21 = arith.index_cast %arg21 : i32 to index
      %c0_25 = arith.constant 0 : index
      %c0_26 = arith.constant 0 : index
      %22 = vector.load %arg2[%21, %c0_25, %c0_26] : memref<32x3x512xbf16, #tpu.memory_space<vmem>>, vector<1x3x512xbf16>
      %23 = vector.shape_cast %22 : vector<1x3x512xbf16> to vector<3x512xbf16>
      %cst_27 = arith.constant dense<0.000000e+00> : vector<2x512xf32>
      %24 = tpu.matmul %4, %23, %cst_27 {dimension_numbers = #tpu.dot_dimension_numbers<[1], [0], [0], [1], [0, 0, 1, 1], [], []>} : vector<2x3xbf16>, vector<3x512xbf16>, vector<2x512xf32> -> vector<2x512xf32>
      %25 = arith.index_cast %arg21 : i32 to index
      %c0_28 = arith.constant 0 : index
      %c0_29 = arith.constant 0 : index
      %26 = vector.load %arg4[%25, %c0_28, %c0_29] : memref<32x1x512xf32, #tpu.memory_space<vmem>>, vector<1x1x512xf32>
      %27 = vector.shape_cast %26 : vector<1x1x512xf32> to vector<1x512xf32>
      %28 = vector.broadcast %27 : vector<1x512xf32> to vector<2x512xf32>
      %29 = arith.addf %24, %28 : vector<2x512xf32>
      %30 = arith.index_cast %arg21 : i32 to index
      %c0_30 = arith.constant 0 : index
      %c0_31 = arith.constant 0 : index
      %31 = vector.load %arg16[%30, %c0_30, %c0_31] : memref<32x2x512xf32, #tpu.memory_space<vmem>>, vector<1x2x512xf32>
      %32 = vector.shape_cast %31 : vector<1x2x512xf32> to vector<2x512xf32>
      %33 = vector.shape_cast %29 : vector<2x512xf32> to vector<1x2x512xf32>
      tpu.vector_store %arg16[%30, %c0_30, %c0_31], %33 {strides = array<i32>} : memref<32x2x512xf32, #tpu.memory_space<vmem>>, vector<1x2x512xf32>,
      %34 = arith.index_cast %arg21 : i32 to index
      %c0_32 = arith.constant 0 : index
      %c0_33 = arith.constant 0 : index
      %35 = vector.load %arg3[%34, %c0_32, %c0_33] : memref<32x3x512xbf16, #tpu.memory_space<vmem>>, vector<1x3x512xbf16>
      %36 = vector.shape_cast %35 : vector<1x3x512xbf16> to vector<3x512xbf16>
      %cst_34 = arith.constant dense<0.000000e+00> : vector<2x512xf32>
      %37 = tpu.matmul %4, %36, %cst_34 {dimension_numbers = #tpu.dot_dimension_numbers<[1], [0], [0], [1], [0, 0, 1, 1], [], []>} : vector<2x3xbf16>, vector<3x512xbf16>, vector<2x512xf32> -> vector<2x512xf32>
      %38 = arith.index_cast %arg21 : i32 to index
      %c0_35 = arith.constant 0 : index
      %c0_36 = arith.constant 0 : index
      %39 = vector.load %arg5[%38, %c0_35, %c0_36] : memref<32x1x512xf32, #tpu.memory_space<vmem>>, vector<1x1x512xf32>
      %40 = vector.shape_cast %39 : vector<1x1x512xf32> to vector<1x512xf32>
      %41 = vector.broadcast %40 : vector<1x512xf32> to vector<2x512xf32>
      %42 = arith.addf %37, %41 : vector<2x512xf32>
      %43 = arith.index_cast %arg21 : i32 to index
      %c0_37 = arith.constant 0 : index
      %c0_38 = arith.constant 0 : index
      %44 = vector.load %arg17[%43, %c0_37, %c0_38] : memref<32x2x512xf32, #tpu.memory_space<vmem>>, vector<1x2x512xf32>
      %45 = vector.shape_cast %44 : vector<1x2x512xf32> to vector<2x512xf32>
      %46 = vector.shape_cast %42 : vector<2x512xf32> to vector<1x2x512xf32>
      tpu.vector_store %arg17[%43, %c0_37, %c0_38], %46 {strides = array<i32>} : memref<32x2x512xf32, #tpu.memory_space<vmem>>, vector<1x2x512xf32>,
    }
    %c32_i32_3 = arith.constant 32 : i32
    %cst_4 = arith.constant 0.000000e+00 : f32
    %6 = vector.broadcast %cst_4 : f32 to vector<2x128xf32>
    %c0_i32_5 = arith.constant 0 : i32
    %c8_i32 = arith.constant 8 : i32
    %7 = arith.addi %c0_i32_5, %c8_i32 : i32
    %c1_i32_6 = arith.constant 1 : i32
    %8:4 = scf.for %arg21 = %c0_i32_5 to %7 step %c1_i32_6 iter_args(%arg22 = %6, %arg23 = %6, %arg24 = %6, %arg25 = %6) -> (vector<2x128xf32>, vector<2x128xf32>, vector<2x128xf32>, vector<2x128xf32>)  : i32 {
      %c4_i32 = arith.constant 4 : i32
      %21 = arith.muli %arg21, %c4_i32 : i32
      %c0_i32_25 = arith.constant 0 : i32
      %22 = arith.addi %21, %c0_i32_25 : i32
      %23 = arith.index_cast %22 : i32 to index
      %c0_26 = arith.constant 0 : index
      %c0_27 = arith.constant 0 : index
      %24 = vector.load %arg16[%23, %c0_26, %c0_27] : memref<32x2x512xf32, #tpu.memory_space<vmem>>, vector<1x2x512xf32>
      %25 = vector.shape_cast %24 : vector<1x2x512xf32> to vector<2x512xf32>
      %26 = arith.truncf %arg22 : vector<2x128xf32> to vector<2x128xbf16>
      %c0_28 = arith.constant 0 : index
      %c0_29 = arith.constant 0 : index
      %27 = vector.load %arg6[%c0_28, %c0_29] : memref<128x512xbf16, #tpu.memory_space<vmem>>, vector<128x512xbf16>
      %cst_30 = arith.constant dense<0.000000e+00> : vector<2x512xf32>
      %28 = tpu.matmul %26, %27, %cst_30 {dimension_numbers = #tpu.dot_dimension_numbers<[1], [0], [0], [1], [0, 0, 1, 1], [], []>} : vector<2x128xbf16>, vector<128x512xbf16>, vector<2x512xf32> -> vector<2x512xf32>
      %29 = arith.addf %25, %28 : vector<2x512xf32>
      %c31_i32 = arith.constant 31 : i32
      %30 = arith.subi %c31_i32, %22 : i32
      %31 = arith.index_cast %30 : i32 to index
      %c0_31 = arith.constant 0 : index
      %c0_32 = arith.constant 0 : index
      %32 = vector.load %arg17[%31, %c0_31, %c0_32] : memref<32x2x512xf32, #tpu.memory_space<vmem>>, vector<1x2x512xf32>
      %33 = vector.shape_cast %32 : vector<1x2x512xf32> to vector<2x512xf32>
      %34 = arith.truncf %arg24 : vector<2x128xf32> to vector<2x128xbf16>
      %c0_33 = arith.constant 0 : index
      %c0_34 = arith.constant 0 : index
      %35 = vector.load %arg7[%c0_33, %c0_34] : memref<128x512xbf16, #tpu.memory_space<vmem>>, vector<128x512xbf16>
      %cst_35 = arith.constant dense<0.000000e+00> : vector<2x512xf32>
      %36 = tpu.matmul %34, %35, %cst_35 {dimension_numbers = #tpu.dot_dimension_numbers<[1], [0], [0], [1], [0, 0, 1, 1], [], []>} : vector<2x128xbf16>, vector<128x512xbf16>, vector<2x512xf32> -> vector<2x512xf32>
      %37 = arith.addf %33, %36 : vector<2x512xf32>
      %38 = vector.extract_strided_slice %29 {offsets = [0, 0], sizes = [2, 128], strides = [1, 1]} : vector<2x512xf32> to vector<2x128xf32>
      %39 = arith.negf %38 : vector<2x128xf32>
      %40 = math.exp %39 : vector<2x128xf32>
      %cst_36 = arith.constant 1.000000e+00 : f32
      %41 = vector.broadcast %cst_36 : f32 to vector<2x128xf32>
      %42 = arith.addf %41, %40 : vector<2x128xf32>
      %43 = arith.divf %41, %42 : vector<2x128xf32>
      %44 = vector.extract_strided_slice %29 {offsets = [0, 128], sizes = [2, 128], strides = [1, 1]} : vector<2x512xf32> to vector<2x128xf32>
      %45 = arith.negf %44 : vector<2x128xf32>
      %46 = math.exp %45 : vector<2x128xf32>
      %cst_37 = arith.constant 1.000000e+00 : f32
      %47 = vector.broadcast %cst_37 : f32 to vector<2x128xf32>
      %48 = arith.addf %47, %46 : vector<2x128xf32>
      %49 = arith.divf %47, %48 : vector<2x128xf32>
      %50 = vector.extract_strided_slice %29 {offsets = [0, 256], sizes = [2, 128], strides = [1, 1]} : vector<2x512xf32> to vector<2x128xf32>
      %51 = math.tanh %50 : vector<2x128xf32>
      %52 = vector.extract_strided_slice %29 {offsets = [0, 384], sizes = [2, 128], strides = [1, 1]} : vector<2x512xf32> to vector<2x128xf32>
      %53 = arith.negf %52 : vector<2x128xf32>
      %54 = math.exp %53 : vector<2x128xf32>
      %cst_38 = arith.constant 1.000000e+00 : f32
      %55 = vector.broadcast %cst_38 : f32 to vector<2x128xf32>
      %56 = arith.addf %55, %54 : vector<2x128xf32>
      %57 = arith.divf %55, %56 : vector<2x128xf32>
      %58 = arith.mulf %49, %arg23 : vector<2x128xf32>
      %59 = arith.mulf %43, %51 : vector<2x128xf32>
      %60 = arith.addf %58, %59 : vector<2x128xf32>
      %61 = math.tanh %60 : vector<2x128xf32>
      %62 = arith.mulf %57, %61 : vector<2x128xf32>
      %63 = vector.extract_strided_slice %37 {offsets = [0, 0], sizes = [2, 128], strides = [1, 1]} : vector<2x512xf32> to vector<2x128xf32>
      %64 = arith.negf %63 : vector<2x128xf32>
      %65 = math.exp %64 : vector<2x128xf32>
      %cst_39 = arith.constant 1.000000e+00 : f32
      %66 = vector.broadcast %cst_39 : f32 to vector<2x128xf32>
      %67 = arith.addf %66, %65 : vector<2x128xf32>
      %68 = arith.divf %66, %67 : vector<2x128xf32>
      %69 = vector.extract_strided_slice %37 {offsets = [0, 128], sizes = [2, 128], strides = [1, 1]} : vector<2x512xf32> to vector<2x128xf32>
      %70 = arith.negf %69 : vector<2x128xf32>
      %71 = math.exp %70 : vector<2x128xf32>
      %cst_40 = arith.constant 1.000000e+00 : f32
      %72 = vector.broadcast %cst_40 : f32 to vector<2x128xf32>
      %73 = arith.addf %72, %71 : vector<2x128xf32>
      %74 = arith.divf %72, %73 : vector<2x128xf32>
      %75 = vector.extract_strided_slice %37 {offsets = [0, 256], sizes = [2, 128], strides = [1, 1]} : vector<2x512xf32> to vector<2x128xf32>
      %76 = math.tanh %75 : vector<2x128xf32>
      %77 = vector.extract_strided_slice %37 {offsets = [0, 384], sizes = [2, 128], strides = [1, 1]} : vector<2x512xf32> to vector<2x128xf32>
      %78 = arith.negf %77 : vector<2x128xf32>
      %79 = math.exp %78 : vector<2x128xf32>
      %cst_41 = arith.constant 1.000000e+00 : f32
      %80 = vector.broadcast %cst_41 : f32 to vector<2x128xf32>
      %81 = arith.addf %80, %79 : vector<2x128xf32>
      %82 = arith.divf %80, %81 : vector<2x128xf32>
      %83 = arith.mulf %74, %arg25 : vector<2x128xf32>
      %84 = arith.mulf %68, %76 : vector<2x128xf32>
      %85 = arith.addf %83, %84 : vector<2x128xf32>
      %86 = math.tanh %85 : vector<2x128xf32>
      %87 = arith.mulf %82, %86 : vector<2x128xf32>
      %88 = arith.index_cast %22 : i32 to index
      %c0_42 = arith.constant 0 : index
      %c0_43 = arith.constant 0 : index
      %89 = vector.load %arg18[%88, %c0_42, %c0_43] : memref<32x2x128xf32, #tpu.memory_space<vmem>>, vector<1x2x128xf32>
      %90 = vector.shape_cast %89 : vector<1x2x128xf32> to vector<2x128xf32>
      %91 = vector.shape_cast %62 : vector<2x128xf32> to vector<1x2x128xf32>
      tpu.vector_store %arg18[%88, %c0_42, %c0_43], %91 {strides = array<i32>} : memref<32x2x128xf32, #tpu.memory_space<vmem>>, vector<1x2x128xf32>,
      %c31_i32_44 = arith.constant 31 : i32
      %92 = arith.subi %c31_i32_44, %22 : i32
      %93 = arith.index_cast %92 : i32 to index
      %c0_45 = arith.constant 0 : index
      %c0_46 = arith.constant 0 : index
      %94 = vector.load %arg19[%93, %c0_45, %c0_46] : memref<32x2x128xf32, #tpu.memory_space<vmem>>, vector<1x2x128xf32>
      %95 = vector.shape_cast %94 : vector<1x2x128xf32> to vector<2x128xf32>
      %96 = vector.shape_cast %87 : vector<2x128xf32> to vector<1x2x128xf32>
      tpu.vector_store %arg19[%93, %c0_45, %c0_46], %96 {strides = array<i32>} : memref<32x2x128xf32, #tpu.memory_space<vmem>>, vector<1x2x128xf32>,
      %c1_i32_47 = arith.constant 1 : i32
      %97 = arith.addi %21, %c1_i32_47 : i32
      %98 = arith.index_cast %97 : i32 to index
      %c0_48 = arith.constant 0 : index
      %c0_49 = arith.constant 0 : index
      %99 = vector.load %arg16[%98, %c0_48, %c0_49] : memref<32x2x512xf32, #tpu.memory_space<vmem>>, vector<1x2x512xf32>
      %100 = vector.shape_cast %99 : vector<1x2x512xf32> to vector<2x512xf32>
      %101 = arith.truncf %62 : vector<2x128xf32> to vector<2x128xbf16>
      %c0_50 = arith.constant 0 : index
      %c0_51 = arith.constant 0 : index
      %102 = vector.load %arg6[%c0_50, %c0_51] : memref<128x512xbf16, #tpu.memory_space<vmem>>, vector<128x512xbf16>
      %cst_52 = arith.constant dense<0.000000e+00> : vector<2x512xf32>
      %103 = tpu.matmul %101, %102, %cst_52 {dimension_numbers = #tpu.dot_dimension_numbers<[1], [0], [0], [1], [0, 0, 1, 1], [], []>} : vector<2x128xbf16>, vector<128x512xbf16>, vector<2x512xf32> -> vector<2x512xf32>
      %104 = arith.addf %100, %103 : vector<2x512xf32>
      %c31_i32_53 = arith.constant 31 : i32
      %105 = arith.subi %c31_i32_53, %97 : i32
      %106 = arith.index_cast %105 : i32 to index
      %c0_54 = arith.constant 0 : index
      %c0_55 = arith.constant 0 : index
      %107 = vector.load %arg17[%106, %c0_54, %c0_55] : memref<32x2x512xf32, #tpu.memory_space<vmem>>, vector<1x2x512xf32>
      %108 = vector.shape_cast %107 : vector<1x2x512xf32> to vector<2x512xf32>
      %109 = arith.truncf %87 : vector<2x128xf32> to vector<2x128xbf16>
      %c0_56 = arith.constant 0 : index
      %c0_57 = arith.constant 0 : index
      %110 = vector.load %arg7[%c0_56, %c0_57] : memref<128x512xbf16, #tpu.memory_space<vmem>>, vector<128x512xbf16>
      %cst_58 = arith.constant dense<0.000000e+00> : vector<2x512xf32>
      %111 = tpu.matmul %109, %110, %cst_58 {dimension_numbers = #tpu.dot_dimension_numbers<[1], [0], [0], [1], [0, 0, 1, 1], [], []>} : vector<2x128xbf16>, vector<128x512xbf16>, vector<2x512xf32> -> vector<2x512xf32>
      %112 = arith.addf %108, %111 : vector<2x512xf32>
      %113 = vector.extract_strided_slice %104 {offsets = [0, 0], sizes = [2, 128], strides = [1, 1]} : vector<2x512xf32> to vector<2x128xf32>
      %114 = arith.negf %113 : vector<2x128xf32>
      %115 = math.exp %114 : vector<2x128xf32>
      %cst_59 = arith.constant 1.000000e+00 : f32
      %116 = vector.broadcast %cst_59 : f32 to vector<2x128xf32>
      %117 = arith.addf %116, %115 : vector<2x128xf32>
      %118 = arith.divf %116, %117 : vector<2x128xf32>
      %119 = vector.extract_strided_slice %104 {offsets = [0, 128], sizes = [2, 128], strides = [1, 1]} : vector<2x512xf32> to vector<2x128xf32>
      %120 = arith.negf %119 : vector<2x128xf32>
      %121 = math.exp %120 : vector<2x128xf32>
      %cst_60 = arith.constant 1.000000e+00 : f32
      %122 = vector.broadcast %cst_60 : f32 to vector<2x128xf32>
      %123 = arith.addf %122, %121 : vector<2x128xf32>
      %124 = arith.divf %122, %123 : vector<2x128xf32>
      %125 = vector.extract_strided_slice %104 {offsets = [0, 256], sizes = [2, 128], strides = [1, 1]} : vector<2x512xf32> to vector<2x128xf32>
      %126 = math.tanh %125 : vector<2x128xf32>
      %127 = vector.extract_strided_slice %104 {offsets = [0, 384], sizes = [2, 128], strides = [1, 1]} : vector<2x512xf32> to vector<2x128xf32>
      %128 = arith.negf %127 : vector<2x128xf32>
      %129 = math.exp %128 : vector<2x128xf32>
      %cst_61 = arith.constant 1.000000e+00 : f32
      %130 = vector.broadcast %cst_61 : f32 to vector<2x128xf32>
      %131 = arith.addf %130, %129 : vector<2x128xf32>
      %132 = arith.divf %130, %131 : vector<2x128xf32>
      %133 = arith.mulf %124, %60 : vector<2x128xf32>
      %134 = arith.mulf %118, %126 : vector<2x128xf32>
      %135 = arith.addf %133, %134 : vector<2x128xf32>
      %136 = math.tanh %135 : vector<2x128xf32>
      %137 = arith.mulf %132, %136 : vector<2x128xf32>
      %138 = vector.extract_strided_slice %112 {offsets = [0, 0], sizes = [2, 128], strides = [1, 1]} : vector<2x512xf32> to vector<2x128xf32>
      %139 = arith.negf %138 : vector<2x128xf32>
      %140 = math.exp %139 : vector<2x128xf32>
      %cst_62 = arith.constant 1.000000e+00 : f32
      %141 = vector.broadcast %cst_62 : f32 to vector<2x128xf32>
      %142 = arith.addf %141, %140 : vector<2x128xf32>
      %143 = arith.divf %141, %142 : vector<2x128xf32>
      %144 = vector.extract_strided_slice %112 {offsets = [0, 128], sizes = [2, 128], strides = [1, 1]} : vector<2x512xf32> to vector<2x128xf32>
      %145 = arith.negf %144 : vector<2x128xf32>
      %146 = math.exp %145 : vector<2x128xf32>
      %cst_63 = arith.constant 1.000000e+00 : f32
      %147 = vector.broadcast %cst_63 : f32 to vector<2x128xf32>
      %148 = arith.addf %147, %146 : vector<2x128xf32>
      %149 = arith.divf %147, %148 : vector<2x128xf32>
      %150 = vector.extract_strided_slice %112 {offsets = [0, 256], sizes = [2, 128], strides = [1, 1]} : vector<2x512xf32> to vector<2x128xf32>
      %151 = math.tanh %150 : vector<2x128xf32>
      %152 = vector.extract_strided_slice %112 {offsets = [0, 384], sizes = [2, 128], strides = [1, 1]} : vector<2x512xf32> to vector<2x128xf32>
      %153 = arith.negf %152 : vector<2x128xf32>
      %154 = math.exp %153 : vector<2x128xf32>
      %cst_64 = arith.constant 1.000000e+00 : f32
      %155 = vector.broadcast %cst_64 : f32 to vector<2x128xf32>
      %156 = arith.addf %155, %154 : vector<2x128xf32>
      %157 = arith.divf %155, %156 : vector<2x128xf32>
      %158 = arith.mulf %149, %85 : vector<2x128xf32>
      %159 = arith.mulf %143, %151 : vector<2x128xf32>
      %160 = arith.addf %158, %159 : vector<2x128xf32>
      %161 = math.tanh %160 : vector<2x128xf32>
      %162 = arith.mulf %157, %161 : vector<2x128xf32>
      %163 = arith.index_cast %97 : i32 to index
      %c0_65 = arith.constant 0 : index
      %c0_66 = arith.constant 0 : index
      %164 = vector.load %arg18[%163, %c0_65, %c0_66] : memref<32x2x128xf32, #tpu.memory_space<vmem>>, vector<1x2x128xf32>
      %165 = vector.shape_cast %164 : vector<1x2x128xf32> to vector<2x128xf32>
      %166 = vector.shape_cast %137 : vector<2x128xf32> to vector<1x2x128xf32>
      tpu.vector_store %arg18[%163, %c0_65, %c0_66], %166 {strides = array<i32>} : memref<32x2x128xf32, #tpu.memory_space<vmem>>, vector<1x2x128xf32>,
      %c31_i32_67 = arith.constant 31 : i32
      %167 = arith.subi %c31_i32_67, %97 : i32
      %168 = arith.index_cast %167 : i32 to index
      %c0_68 = arith.constant 0 : index
      %c0_69 = arith.constant 0 : index
      %169 = vector.load %arg19[%168, %c0_68, %c0_69] : memref<32x2x128xf32, #tpu.memory_space<vmem>>, vector<1x2x128xf32>
      %170 = vector.shape_cast %169 : vector<1x2x128xf32> to vector<2x128xf32>
      %171 = vector.shape_cast %162 : vector<2x128xf32> to vector<1x2x128xf32>
      tpu.vector_store %arg19[%168, %c0_68, %c0_69], %171 {strides = array<i32>} : memref<32x2x128xf32, #tpu.memory_space<vmem>>, vector<1x2x128xf32>,
      %c2_i32 = arith.constant 2 : i32
      %172 = arith.addi %21, %c2_i32 : i32
      %173 = arith.index_cast %172 : i32 to index
      %c0_70 = arith.constant 0 : index
      %c0_71 = arith.constant 0 : index
      %174 = vector.load %arg16[%173, %c0_70, %c0_71] : memref<32x2x512xf32, #tpu.memory_space<vmem>>, vector<1x2x512xf32>
      %175 = vector.shape_cast %174 : vector<1x2x512xf32> to vector<2x512xf32>
      %176 = arith.truncf %137 : vector<2x128xf32> to vector<2x128xbf16>
      %c0_72 = arith.constant 0 : index
      %c0_73 = arith.constant 0 : index
      %177 = vector.load %arg6[%c0_72, %c0_73] : memref<128x512xbf16, #tpu.memory_space<vmem>>, vector<128x512xbf16>
      %cst_74 = arith.constant dense<0.000000e+00> : vector<2x512xf32>
      %178 = tpu.matmul %176, %177, %cst_74 {dimension_numbers = #tpu.dot_dimension_numbers<[1], [0], [0], [1], [0, 0, 1, 1], [], []>} : vector<2x128xbf16>, vector<128x512xbf16>, vector<2x512xf32> -> vector<2x512xf32>
      %179 = arith.addf %175, %178 : vector<2x512xf32>
      %c31_i32_75 = arith.constant 31 : i32
      %180 = arith.subi %c31_i32_75, %172 : i32
      %181 = arith.index_cast %180 : i32 to index
      %c0_76 = arith.constant 0 : index
      %c0_77 = arith.constant 0 : index
      %182 = vector.load %arg17[%181, %c0_76, %c0_77] : memref<32x2x512xf32, #tpu.memory_space<vmem>>, vector<1x2x512xf32>
      %183 = vector.shape_cast %182 : vector<1x2x512xf32> to vector<2x512xf32>
      %184 = arith.truncf %162 : vector<2x128xf32> to vector<2x128xbf16>
      %c0_78 = arith.constant 0 : index
      %c0_79 = arith.constant 0 : index
      %185 = vector.load %arg7[%c0_78, %c0_79] : memref<128x512xbf16, #tpu.memory_space<vmem>>, vector<128x512xbf16>
      %cst_80 = arith.constant dense<0.000000e+00> : vector<2x512xf32>
      %186 = tpu.matmul %184, %185, %cst_80 {dimension_numbers = #tpu.dot_dimension_numbers<[1], [0], [0], [1], [0, 0, 1, 1], [], []>} : vector<2x128xbf16>, vector<128x512xbf16>, vector<2x512xf32> -> vector<2x512xf32>
      %187 = arith.addf %183, %186 : vector<2x512xf32>
      %188 = vector.extract_strided_slice %179 {offsets = [0, 0], sizes = [2, 128], strides = [1, 1]} : vector<2x512xf32> to vector<2x128xf32>
      %189 = arith.negf %188 : vector<2x128xf32>
      %190 = math.exp %189 : vector<2x128xf32>
      %cst_81 = arith.constant 1.000000e+00 : f32
      %191 = vector.broadcast %cst_81 : f32 to vector<2x128xf32>
      %192 = arith.addf %191, %190 : vector<2x128xf32>
      %193 = arith.divf %191, %192 : vector<2x128xf32>
      %194 = vector.extract_strided_slice %179 {offsets = [0, 128], sizes = [2, 128], strides = [1, 1]} : vector<2x512xf32> to vector<2x128xf32>
      %195 = arith.negf %194 : vector<2x128xf32>
      %196 = math.exp %195 : vector<2x128xf32>
      %cst_82 = arith.constant 1.000000e+00 : f32
      %197 = vector.broadcast %cst_82 : f32 to vector<2x128xf32>
      %198 = arith.addf %197, %196 : vector<2x128xf32>
      %199 = arith.divf %197, %198 : vector<2x128xf32>
      %200 = vector.extract_strided_slice %179 {offsets = [0, 256], sizes = [2, 128], strides = [1, 1]} : vector<2x512xf32> to vector<2x128xf32>
      %201 = math.tanh %200 : vector<2x128xf32>
      %202 = vector.extract_strided_slice %179 {offsets = [0, 384], sizes = [2, 128], strides = [1, 1]} : vector<2x512xf32> to vector<2x128xf32>
      %203 = arith.negf %202 : vector<2x128xf32>
      %204 = math.exp %203 : vector<2x128xf32>
      %cst_83 = arith.constant 1.000000e+00 : f32
      %205 = vector.broadcast %cst_83 : f32 to vector<2x128xf32>
      %206 = arith.addf %205, %204 : vector<2x128xf32>
      %207 = arith.divf %205, %206 : vector<2x128xf32>
      %208 = arith.mulf %199, %135 : vector<2x128xf32>
      %209 = arith.mulf %193, %201 : vector<2x128xf32>
      %210 = arith.addf %208, %209 : vector<2x128xf32>
      %211 = math.tanh %210 : vector<2x128xf32>
      %212 = arith.mulf %207, %211 : vector<2x128xf32>
      %213 = vector.extract_strided_slice %187 {offsets = [0, 0], sizes = [2, 128], strides = [1, 1]} : vector<2x512xf32> to vector<2x128xf32>
      %214 = arith.negf %213 : vector<2x128xf32>
      %215 = math.exp %214 : vector<2x128xf32>
      %cst_84 = arith.constant 1.000000e+00 : f32
      %216 = vector.broadcast %cst_84 : f32 to vector<2x128xf32>
      %217 = arith.addf %216, %215 : vector<2x128xf32>
      %218 = arith.divf %216, %217 : vector<2x128xf32>
      %219 = vector.extract_strided_slice %187 {offsets = [0, 128], sizes = [2, 128], strides = [1, 1]} : vector<2x512xf32> to vector<2x128xf32>
      %220 = arith.negf %219 : vector<2x128xf32>
      %221 = math.exp %220 : vector<2x128xf32>
      %cst_85 = arith.constant 1.000000e+00 : f32
      %222 = vector.broadcast %cst_85 : f32 to vector<2x128xf32>
      %223 = arith.addf %222, %221 : vector<2x128xf32>
      %224 = arith.divf %222, %223 : vector<2x128xf32>
      %225 = vector.extract_strided_slice %187 {offsets = [0, 256], sizes = [2, 128], strides = [1, 1]} : vector<2x512xf32> to vector<2x128xf32>
      %226 = math.tanh %225 : vector<2x128xf32>
      %227 = vector.extract_strided_slice %187 {offsets = [0, 384], sizes = [2, 128], strides = [1, 1]} : vector<2x512xf32> to vector<2x128xf32>
      %228 = arith.negf %227 : vector<2x128xf32>
      %229 = math.exp %228 : vector<2x128xf32>
      %cst_86 = arith.constant 1.000000e+00 : f32
      %230 = vector.broadcast %cst_86 : f32 to vector<2x128xf32>
      %231 = arith.addf %230, %229 : vector<2x128xf32>
      %232 = arith.divf %230, %231 : vector<2x128xf32>
      %233 = arith.mulf %224, %160 : vector<2x128xf32>
      %234 = arith.mulf %218, %226 : vector<2x128xf32>
      %235 = arith.addf %233, %234 : vector<2x128xf32>
      %236 = math.tanh %235 : vector<2x128xf32>
      %237 = arith.mulf %232, %236 : vector<2x128xf32>
      %238 = arith.index_cast %172 : i32 to index
      %c0_87 = arith.constant 0 : index
      %c0_88 = arith.constant 0 : index
      %239 = vector.load %arg18[%238, %c0_87, %c0_88] : memref<32x2x128xf32, #tpu.memory_space<vmem>>, vector<1x2x128xf32>
      %240 = vector.shape_cast %239 : vector<1x2x128xf32> to vector<2x128xf32>
      %241 = vector.shape_cast %212 : vector<2x128xf32> to vector<1x2x128xf32>
      tpu.vector_store %arg18[%238, %c0_87, %c0_88], %241 {strides = array<i32>} : memref<32x2x128xf32, #tpu.memory_space<vmem>>, vector<1x2x128xf32>,
      %c31_i32_89 = arith.constant 31 : i32
      %242 = arith.subi %c31_i32_89, %172 : i32
      %243 = arith.index_cast %242 : i32 to index
      %c0_90 = arith.constant 0 : index
      %c0_91 = arith.constant 0 : index
      %244 = vector.load %arg19[%243, %c0_90, %c0_91] : memref<32x2x128xf32, #tpu.memory_space<vmem>>, vector<1x2x128xf32>
      %245 = vector.shape_cast %244 : vector<1x2x128xf32> to vector<2x128xf32>
      %246 = vector.shape_cast %237 : vector<2x128xf32> to vector<1x2x128xf32>
      tpu.vector_store %arg19[%243, %c0_90, %c0_91], %246 {strides = array<i32>} : memref<32x2x128xf32, #tpu.memory_space<vmem>>, vector<1x2x128xf32>,
      %c3_i32 = arith.constant 3 : i32
      %247 = arith.addi %21, %c3_i32 : i32
      %248 = arith.index_cast %247 : i32 to index
      %c0_92 = arith.constant 0 : index
      %c0_93 = arith.constant 0 : index
      %249 = vector.load %arg16[%248, %c0_92, %c0_93] : memref<32x2x512xf32, #tpu.memory_space<vmem>>, vector<1x2x512xf32>
      %250 = vector.shape_cast %249 : vector<1x2x512xf32> to vector<2x512xf32>
      %251 = arith.truncf %212 : vector<2x128xf32> to vector<2x128xbf16>
      %c0_94 = arith.constant 0 : index
      %c0_95 = arith.constant 0 : index
      %252 = vector.load %arg6[%c0_94, %c0_95] : memref<128x512xbf16, #tpu.memory_space<vmem>>, vector<128x512xbf16>
      %cst_96 = arith.constant dense<0.000000e+00> : vector<2x512xf32>
      %253 = tpu.matmul %251, %252, %cst_96 {dimension_numbers = #tpu.dot_dimension_numbers<[1], [0], [0], [1], [0, 0, 1, 1], [], []>} : vector<2x128xbf16>, vector<128x512xbf16>, vector<2x512xf32> -> vector<2x512xf32>
      %254 = arith.addf %250, %253 : vector<2x512xf32>
      %c31_i32_97 = arith.constant 31 : i32
      %255 = arith.subi %c31_i32_97, %247 : i32
      %256 = arith.index_cast %255 : i32 to index
      %c0_98 = arith.constant 0 : index
      %c0_99 = arith.constant 0 : index
      %257 = vector.load %arg17[%256, %c0_98, %c0_99] : memref<32x2x512xf32, #tpu.memory_space<vmem>>, vector<1x2x512xf32>
      %258 = vector.shape_cast %257 : vector<1x2x512xf32> to vector<2x512xf32>
      %259 = arith.truncf %237 : vector<2x128xf32> to vector<2x128xbf16>
      %c0_100 = arith.constant 0 : index
      %c0_101 = arith.constant 0 : index
      %260 = vector.load %arg7[%c0_100, %c0_101] : memref<128x512xbf16, #tpu.memory_space<vmem>>, vector<128x512xbf16>
      %cst_102 = arith.constant dense<0.000000e+00> : vector<2x512xf32>
      %261 = tpu.matmul %259, %260, %cst_102 {dimension_numbers = #tpu.dot_dimension_numbers<[1], [0], [0], [1], [0, 0, 1, 1], [], []>} : vector<2x128xbf16>, vector<128x512xbf16>, vector<2x512xf32> -> vector<2x512xf32>
      %262 = arith.addf %258, %261 : vector<2x512xf32>
      %263 = vector.extract_strided_slice %254 {offsets = [0, 0], sizes = [2, 128], strides = [1, 1]} : vector<2x512xf32> to vector<2x128xf32>
      %264 = arith.negf %263 : vector<2x128xf32>
      %265 = math.exp %264 : vector<2x128xf32>
      %cst_103 = arith.constant 1.000000e+00 : f32
      %266 = vector.broadcast %cst_103 : f32 to vector<2x128xf32>
      %267 = arith.addf %266, %265 : vector<2x128xf32>
      %268 = arith.divf %266, %267 : vector<2x128xf32>
      %269 = vector.extract_strided_slice %254 {offsets = [0, 128], sizes = [2, 128], strides = [1, 1]} : vector<2x512xf32> to vector<2x128xf32>
      %270 = arith.negf %269 : vector<2x128xf32>
      %271 = math.exp %270 : vector<2x128xf32>
      %cst_104 = arith.constant 1.000000e+00 : f32
      %272 = vector.broadcast %cst_104 : f32 to vector<2x128xf32>
      %273 = arith.addf %272, %271 : vector<2x128xf32>
      %274 = arith.divf %272, %273 : vector<2x128xf32>
      %275 = vector.extract_strided_slice %254 {offsets = [0, 256], sizes = [2, 128], strides = [1, 1]} : vector<2x512xf32> to vector<2x128xf32>
      %276 = math.tanh %275 : vector<2x128xf32>
      %277 = vector.extract_strided_slice %254 {offsets = [0, 384], sizes = [2, 128], strides = [1, 1]} : vector<2x512xf32> to vector<2x128xf32>
      %278 = arith.negf %277 : vector<2x128xf32>
      %279 = math.exp %278 : vector<2x128xf32>
      %cst_105 = arith.constant 1.000000e+00 : f32
      %280 = vector.broadcast %cst_105 : f32 to vector<2x128xf32>
      %281 = arith.addf %280, %279 : vector<2x128xf32>
      %282 = arith.divf %280, %281 : vector<2x128xf32>
      %283 = arith.mulf %274, %210 : vector<2x128xf32>
      %284 = arith.mulf %268, %276 : vector<2x128xf32>
      %285 = arith.addf %283, %284 : vector<2x128xf32>
      %286 = math.tanh %285 : vector<2x128xf32>
      %287 = arith.mulf %282, %286 : vector<2x128xf32>
      %288 = vector.extract_strided_slice %262 {offsets = [0, 0], sizes = [2, 128], strides = [1, 1]} : vector<2x512xf32> to vector<2x128xf32>
      %289 = arith.negf %288 : vector<2x128xf32>
      %290 = math.exp %289 : vector<2x128xf32>
      %cst_106 = arith.constant 1.000000e+00 : f32
      %291 = vector.broadcast %cst_106 : f32 to vector<2x128xf32>
      %292 = arith.addf %291, %290 : vector<2x128xf32>
      %293 = arith.divf %291, %292 : vector<2x128xf32>
      %294 = vector.extract_strided_slice %262 {offsets = [0, 128], sizes = [2, 128], strides = [1, 1]} : vector<2x512xf32> to vector<2x128xf32>
      %295 = arith.negf %294 : vector<2x128xf32>
      %296 = math.exp %295 : vector<2x128xf32>
      %cst_107 = arith.constant 1.000000e+00 : f32
      %297 = vector.broadcast %cst_107 : f32 to vector<2x128xf32>
      %298 = arith.addf %297, %296 : vector<2x128xf32>
      %299 = arith.divf %297, %298 : vector<2x128xf32>
      %300 = vector.extract_strided_slice %262 {offsets = [0, 256], sizes = [2, 128], strides = [1, 1]} : vector<2x512xf32> to vector<2x128xf32>
      %301 = math.tanh %300 : vector<2x128xf32>
      %302 = vector.extract_strided_slice %262 {offsets = [0, 384], sizes = [2, 128], strides = [1, 1]} : vector<2x512xf32> to vector<2x128xf32>
      %303 = arith.negf %302 : vector<2x128xf32>
      %304 = math.exp %303 : vector<2x128xf32>
      %cst_108 = arith.constant 1.000000e+00 : f32
      %305 = vector.broadcast %cst_108 : f32 to vector<2x128xf32>
      %306 = arith.addf %305, %304 : vector<2x128xf32>
      %307 = arith.divf %305, %306 : vector<2x128xf32>
      %308 = arith.mulf %299, %235 : vector<2x128xf32>
      %309 = arith.mulf %293, %301 : vector<2x128xf32>
      %310 = arith.addf %308, %309 : vector<2x128xf32>
      %311 = math.tanh %310 : vector<2x128xf32>
      %312 = arith.mulf %307, %311 : vector<2x128xf32>
      %313 = arith.index_cast %247 : i32 to index
      %c0_109 = arith.constant 0 : index
      %c0_110 = arith.constant 0 : index
      %314 = vector.load %arg18[%313, %c0_109, %c0_110] : memref<32x2x128xf32, #tpu.memory_space<vmem>>, vector<1x2x128xf32>
      %315 = vector.shape_cast %314 : vector<1x2x128xf32> to vector<2x128xf32>
      %316 = vector.shape_cast %287 : vector<2x128xf32> to vector<1x2x128xf32>
      tpu.vector_store %arg18[%313, %c0_109, %c0_110], %316 {strides = array<i32>} : memref<32x2x128xf32, #tpu.memory_space<vmem>>, vector<1x2x128xf32>,
      %c31_i32_111 = arith.constant 31 : i32
      %317 = arith.subi %c31_i32_111, %247 : i32
      %318 = arith.index_cast %317 : i32 to index
      %c0_112 = arith.constant 0 : index
      %c0_113 = arith.constant 0 : index
      %319 = vector.load %arg19[%318, %c0_112, %c0_113] : memref<32x2x128xf32, #tpu.memory_space<vmem>>, vector<1x2x128xf32>
      %320 = vector.shape_cast %319 : vector<1x2x128xf32> to vector<2x128xf32>
      %321 = vector.shape_cast %312 : vector<2x128xf32> to vector<1x2x128xf32>
      tpu.vector_store %arg19[%318, %c0_112, %c0_113], %321 {strides = array<i32>} : memref<32x2x128xf32, #tpu.memory_space<vmem>>, vector<1x2x128xf32>,
      scf.yield %287, %285, %312, %310 : vector<2x128xf32>, vector<2x128xf32>, vector<2x128xf32>, vector<2x128xf32>
    }
    %c8_i32_7 = arith.constant 8 : i32
    %c0_8 = arith.constant 0 : index
    %c0_9 = arith.constant 0 : index
    %9 = vector.load %arg10[%c0_8, %c0_9] : memref<1x512xf32, #tpu.memory_space<vmem>>, vector<1x512xf32>
    %c0_i32_10 = arith.constant 0 : i32
    %c32_i32_11 = arith.constant 32 : i32
    %10 = arith.addi %c0_i32_10, %c32_i32_11 : i32
    %c1_i32_12 = arith.constant 1 : i32
    scf.for %arg21 = %c0_i32_10 to %10 step %c1_i32_12  : i32 {
      %21 = arith.index_cast %arg21 : i32 to index
      %c0_25 = arith.constant 0 : index
      %c0_26 = arith.constant 0 : index
      %22 = vector.load %arg18[%21, %c0_25, %c0_26] : memref<32x2x128xf32, #tpu.memory_space<vmem>>, vector<1x2x128xf32>
      %23 = vector.shape_cast %22 : vector<1x2x128xf32> to vector<2x128xf32>
      %24 = arith.truncf %23 : vector<2x128xf32> to vector<2x128xbf16>
      %25 = arith.index_cast %arg21 : i32 to index
      %c0_27 = arith.constant 0 : index
      %c0_28 = arith.constant 0 : index
      %26 = vector.load %arg19[%25, %c0_27, %c0_28] : memref<32x2x128xf32, #tpu.memory_space<vmem>>, vector<1x2x128xf32>
      %27 = vector.shape_cast %26 : vector<1x2x128xf32> to vector<2x128xf32>
      %28 = arith.truncf %27 : vector<2x128xf32> to vector<2x128xbf16>
      %c0_29 = arith.constant 0 : index
      %c0_30 = arith.constant 0 : index
      %29 = vector.load %arg8[%c0_29, %c0_30] : memref<128x512xbf16, #tpu.memory_space<vmem>>, vector<128x512xbf16>
      %cst_31 = arith.constant dense<0.000000e+00> : vector<2x512xf32>
      %30 = tpu.matmul %24, %29, %cst_31 {dimension_numbers = #tpu.dot_dimension_numbers<[1], [0], [0], [1], [0, 0, 1, 1], [], []>} : vector<2x128xbf16>, vector<128x512xbf16>, vector<2x512xf32> -> vector<2x512xf32>
      %c0_32 = arith.constant 0 : index
      %c0_33 = arith.constant 0 : index
      %31 = vector.load %arg9[%c0_32, %c0_33] : memref<128x512xbf16, #tpu.memory_space<vmem>>, vector<128x512xbf16>
      %cst_34 = arith.constant dense<0.000000e+00> : vector<2x512xf32>
      %32 = tpu.matmul %28, %31, %cst_34 {dimension_numbers = #tpu.dot_dimension_numbers<[1], [0], [0], [1], [0, 0, 1, 1], [], []>} : vector<2x128xbf16>, vector<128x512xbf16>, vector<2x512xf32> -> vector<2x512xf32>
      %33 = arith.addf %30, %32 : vector<2x512xf32>
      %34 = vector.broadcast %9 : vector<1x512xf32> to vector<2x512xf32>
      %35 = arith.addf %33, %34 : vector<2x512xf32>
      %36 = arith.index_cast %arg21 : i32 to index
      %c0_35 = arith.constant 0 : index
      %c0_36 = arith.constant 0 : index
      %37 = vector.load %arg20[%36, %c0_35, %c0_36] : memref<32x2x512xf32, #tpu.memory_space<vmem>>, vector<1x2x512xf32>
      %38 = vector.shape_cast %37 : vector<1x2x512xf32> to vector<2x512xf32>
      %39 = vector.shape_cast %35 : vector<2x512xf32> to vector<1x2x512xf32>
      tpu.vector_store %arg20[%36, %c0_35, %c0_36], %39 {strides = array<i32>} : memref<32x2x512xf32, #tpu.memory_space<vmem>>, vector<1x2x512xf32>,
    }
    %c32_i32_13 = arith.constant 32 : i32
    %c0_i32_14 = arith.constant 0 : i32
    %c8_i32_15 = arith.constant 8 : i32
    %11 = arith.addi %c0_i32_14, %c8_i32_15 : i32
    %c1_i32_16 = arith.constant 1 : i32
    %12:3 = scf.for %arg21 = %c0_i32_14 to %11 step %c1_i32_16 iter_args(%arg22 = %6, %arg23 = %6, %arg24 = %6) -> (vector<2x128xf32>, vector<2x128xf32>, vector<2x128xf32>)  : i32 {
      %c4_i32 = arith.constant 4 : i32
      %21 = arith.muli %arg21, %c4_i32 : i32
      %c0_i32_25 = arith.constant 0 : i32
      %22 = arith.addi %21, %c0_i32_25 : i32
      %c31_i32 = arith.constant 31 : i32
      %23 = arith.subi %c31_i32, %22 : i32
      %24 = arith.index_cast %23 : i32 to index
      %c0_26 = arith.constant 0 : index
      %c0_27 = arith.constant 0 : index
      %25 = vector.load %arg20[%24, %c0_26, %c0_27] : memref<32x2x512xf32, #tpu.memory_space<vmem>>, vector<1x2x512xf32>
      %26 = vector.shape_cast %25 : vector<1x2x512xf32> to vector<2x512xf32>
      %27 = arith.truncf %arg22 : vector<2x128xf32> to vector<2x128xbf16>
      %c0_28 = arith.constant 0 : index
      %c0_29 = arith.constant 0 : index
      %28 = vector.load %arg11[%c0_28, %c0_29] : memref<128x512xbf16, #tpu.memory_space<vmem>>, vector<128x512xbf16>
      %cst_30 = arith.constant dense<0.000000e+00> : vector<2x512xf32>
      %29 = tpu.matmul %27, %28, %cst_30 {dimension_numbers = #tpu.dot_dimension_numbers<[1], [0], [0], [1], [0, 0, 1, 1], [], []>} : vector<2x128xbf16>, vector<128x512xbf16>, vector<2x512xf32> -> vector<2x512xf32>
      %30 = arith.addf %26, %29 : vector<2x512xf32>
      %31 = vector.extract_strided_slice %30 {offsets = [0, 0], sizes = [2, 128], strides = [1, 1]} : vector<2x512xf32> to vector<2x128xf32>
      %32 = arith.negf %31 : vector<2x128xf32>
      %33 = math.exp %32 : vector<2x128xf32>
      %cst_31 = arith.constant 1.000000e+00 : f32
      %34 = vector.broadcast %cst_31 : f32 to vector<2x128xf32>
      %35 = arith.addf %34, %33 : vector<2x128xf32>
      %36 = arith.divf %34, %35 : vector<2x128xf32>
      %37 = vector.extract_strided_slice %30 {offsets = [0, 128], sizes = [2, 128], strides = [1, 1]} : vector<2x512xf32> to vector<2x128xf32>
      %38 = arith.negf %37 : vector<2x128xf32>
      %39 = math.exp %38 : vector<2x128xf32>
      %cst_32 = arith.constant 1.000000e+00 : f32
      %40 = vector.broadcast %cst_32 : f32 to vector<2x128xf32>
      %41 = arith.addf %40, %39 : vector<2x128xf32>
      %42 = arith.divf %40, %41 : vector<2x128xf32>
      %43 = vector.extract_strided_slice %30 {offsets = [0, 256], sizes = [2, 128], strides = [1, 1]} : vector<2x512xf32> to vector<2x128xf32>
      %44 = math.tanh %43 : vector<2x128xf32>
      %45 = vector.extract_strided_slice %30 {offsets = [0, 384], sizes = [2, 128], strides = [1, 1]} : vector<2x512xf32> to vector<2x128xf32>
      %46 = arith.negf %45 : vector<2x128xf32>
      %47 = math.exp %46 : vector<2x128xf32>
      %cst_33 = arith.constant 1.000000e+00 : f32
      %48 = vector.broadcast %cst_33 : f32 to vector<2x128xf32>
      %49 = arith.addf %48, %47 : vector<2x128xf32>
      %50 = arith.divf %48, %49 : vector<2x128xf32>
      %51 = arith.mulf %42, %arg23 : vector<2x128xf32>
      %52 = arith.mulf %36, %44 : vector<2x128xf32>
      %53 = arith.addf %51, %52 : vector<2x128xf32>
      %54 = math.tanh %53 : vector<2x128xf32>
      %55 = arith.mulf %50, %54 : vector<2x128xf32>
      %56 = vector.extract_strided_slice %55 {offsets = [0, 48], sizes = [2, 1], strides = [1, 1]} : vector<2x128xf32> to vector<2x1xf32>
      %57 = arith.index_cast %23 : i32 to index
      %c0_34 = arith.constant 0 : index
      %c0_35 = arith.constant 0 : index
      %58 = vector.load %arg12[%57, %c0_34, %c0_35] : memref<32x1x128xf32, #tpu.memory_space<vmem>>, vector<1x1x128xf32>
      %59 = vector.shape_cast %58 : vector<1x1x128xf32> to vector<1x128xf32>
      %60 = vector.broadcast %56 : vector<2x1xf32> to vector<2x128xf32>
      %61 = vector.broadcast %59 : vector<1x128xf32> to vector<2x128xf32>
      %62 = arith.mulf %60, %61 : vector<2x128xf32>
      %63 = arith.addf %arg24, %62 : vector<2x128xf32>
      %c1_i32_36 = arith.constant 1 : i32
      %64 = arith.addi %21, %c1_i32_36 : i32
      %c31_i32_37 = arith.constant 31 : i32
      %65 = arith.subi %c31_i32_37, %64 : i32
      %66 = arith.index_cast %65 : i32 to index
      %c0_38 = arith.constant 0 : index
      %c0_39 = arith.constant 0 : index
      %67 = vector.load %arg20[%66, %c0_38, %c0_39] : memref<32x2x512xf32, #tpu.memory_space<vmem>>, vector<1x2x512xf32>
      %68 = vector.shape_cast %67 : vector<1x2x512xf32> to vector<2x512xf32>
      %69 = arith.truncf %55 : vector<2x128xf32> to vector<2x128xbf16>
      %c0_40 = arith.constant 0 : index
      %c0_41 = arith.constant 0 : index
      %70 = vector.load %arg11[%c0_40, %c0_41] : memref<128x512xbf16, #tpu.memory_space<vmem>>, vector<128x512xbf16>
      %cst_42 = arith.constant dense<0.000000e+00> : vector<2x512xf32>
      %71 = tpu.matmul %69, %70, %cst_42 {dimension_numbers = #tpu.dot_dimension_numbers<[1], [0], [0], [1], [0, 0, 1, 1], [], []>} : vector<2x128xbf16>, vector<128x512xbf16>, vector<2x512xf32> -> vector<2x512xf32>
      %72 = arith.addf %68, %71 : vector<2x512xf32>
      %73 = vector.extract_strided_slice %72 {offsets = [0, 0], sizes = [2, 128], strides = [1, 1]} : vector<2x512xf32> to vector<2x128xf32>
      %74 = arith.negf %73 : vector<2x128xf32>
      %75 = math.exp %74 : vector<2x128xf32>
      %cst_43 = arith.constant 1.000000e+00 : f32
      %76 = vector.broadcast %cst_43 : f32 to vector<2x128xf32>
      %77 = arith.addf %76, %75 : vector<2x128xf32>
      %78 = arith.divf %76, %77 : vector<2x128xf32>
      %79 = vector.extract_strided_slice %72 {offsets = [0, 128], sizes = [2, 128], strides = [1, 1]} : vector<2x512xf32> to vector<2x128xf32>
      %80 = arith.negf %79 : vector<2x128xf32>
      %81 = math.exp %80 : vector<2x128xf32>
      %cst_44 = arith.constant 1.000000e+00 : f32
      %82 = vector.broadcast %cst_44 : f32 to vector<2x128xf32>
      %83 = arith.addf %82, %81 : vector<2x128xf32>
      %84 = arith.divf %82, %83 : vector<2x128xf32>
      %85 = vector.extract_strided_slice %72 {offsets = [0, 256], sizes = [2, 128], strides = [1, 1]} : vector<2x512xf32> to vector<2x128xf32>
      %86 = math.tanh %85 : vector<2x128xf32>
      %87 = vector.extract_strided_slice %72 {offsets = [0, 384], sizes = [2, 128], strides = [1, 1]} : vector<2x512xf32> to vector<2x128xf32>
      %88 = arith.negf %87 : vector<2x128xf32>
      %89 = math.exp %88 : vector<2x128xf32>
      %cst_45 = arith.constant 1.000000e+00 : f32
      %90 = vector.broadcast %cst_45 : f32 to vector<2x128xf32>
      %91 = arith.addf %90, %89 : vector<2x128xf32>
      %92 = arith.divf %90, %91 : vector<2x128xf32>
      %93 = arith.mulf %84, %53 : vector<2x128xf32>
      %94 = arith.mulf %78, %86 : vector<2x128xf32>
      %95 = arith.addf %93, %94 : vector<2x128xf32>
      %96 = math.tanh %95 : vector<2x128xf32>
      %97 = arith.mulf %92, %96 : vector<2x128xf32>
      %98 = vector.extract_strided_slice %97 {offsets = [0, 48], sizes = [2, 1], strides = [1, 1]} : vector<2x128xf32> to vector<2x1xf32>
      %99 = arith.index_cast %65 : i32 to index
      %c0_46 = arith.constant 0 : index
      %c0_47 = arith.constant 0 : index
      %100 = vector.load %arg12[%99, %c0_46, %c0_47] : memref<32x1x128xf32, #tpu.memory_space<vmem>>, vector<1x1x128xf32>
      %101 = vector.shape_cast %100 : vector<1x1x128xf32> to vector<1x128xf32>
      %102 = vector.broadcast %98 : vector<2x1xf32> to vector<2x128xf32>
      %103 = vector.broadcast %101 : vector<1x128xf32> to vector<2x128xf32>
      %104 = arith.mulf %102, %103 : vector<2x128xf32>
      %105 = arith.addf %63, %104 : vector<2x128xf32>
      %c2_i32 = arith.constant 2 : i32
      %106 = arith.addi %21, %c2_i32 : i32
      %c31_i32_48 = arith.constant 31 : i32
      %107 = arith.subi %c31_i32_48, %106 : i32
      %108 = arith.index_cast %107 : i32 to index
      %c0_49 = arith.constant 0 : index
      %c0_50 = arith.constant 0 : index
      %109 = vector.load %arg20[%108, %c0_49, %c0_50] : memref<32x2x512xf32, #tpu.memory_space<vmem>>, vector<1x2x512xf32>
      %110 = vector.shape_cast %109 : vector<1x2x512xf32> to vector<2x512xf32>
      %111 = arith.truncf %97 : vector<2x128xf32> to vector<2x128xbf16>
      %c0_51 = arith.constant 0 : index
      %c0_52 = arith.constant 0 : index
      %112 = vector.load %arg11[%c0_51, %c0_52] : memref<128x512xbf16, #tpu.memory_space<vmem>>, vector<128x512xbf16>
      %cst_53 = arith.constant dense<0.000000e+00> : vector<2x512xf32>
      %113 = tpu.matmul %111, %112, %cst_53 {dimension_numbers = #tpu.dot_dimension_numbers<[1], [0], [0], [1], [0, 0, 1, 1], [], []>} : vector<2x128xbf16>, vector<128x512xbf16>, vector<2x512xf32> -> vector<2x512xf32>
      %114 = arith.addf %110, %113 : vector<2x512xf32>
      %115 = vector.extract_strided_slice %114 {offsets = [0, 0], sizes = [2, 128], strides = [1, 1]} : vector<2x512xf32> to vector<2x128xf32>
      %116 = arith.negf %115 : vector<2x128xf32>
      %117 = math.exp %116 : vector<2x128xf32>
      %cst_54 = arith.constant 1.000000e+00 : f32
      %118 = vector.broadcast %cst_54 : f32 to vector<2x128xf32>
      %119 = arith.addf %118, %117 : vector<2x128xf32>
      %120 = arith.divf %118, %119 : vector<2x128xf32>
      %121 = vector.extract_strided_slice %114 {offsets = [0, 128], sizes = [2, 128], strides = [1, 1]} : vector<2x512xf32> to vector<2x128xf32>
      %122 = arith.negf %121 : vector<2x128xf32>
      %123 = math.exp %122 : vector<2x128xf32>
      %cst_55 = arith.constant 1.000000e+00 : f32
      %124 = vector.broadcast %cst_55 : f32 to vector<2x128xf32>
      %125 = arith.addf %124, %123 : vector<2x128xf32>
      %126 = arith.divf %124, %125 : vector<2x128xf32>
      %127 = vector.extract_strided_slice %114 {offsets = [0, 256], sizes = [2, 128], strides = [1, 1]} : vector<2x512xf32> to vector<2x128xf32>
      %128 = math.tanh %127 : vector<2x128xf32>
      %129 = vector.extract_strided_slice %114 {offsets = [0, 384], sizes = [2, 128], strides = [1, 1]} : vector<2x512xf32> to vector<2x128xf32>
      %130 = arith.negf %129 : vector<2x128xf32>
      %131 = math.exp %130 : vector<2x128xf32>
      %cst_56 = arith.constant 1.000000e+00 : f32
      %132 = vector.broadcast %cst_56 : f32 to vector<2x128xf32>
      %133 = arith.addf %132, %131 : vector<2x128xf32>
      %134 = arith.divf %132, %133 : vector<2x128xf32>
      %135 = arith.mulf %126, %95 : vector<2x128xf32>
      %136 = arith.mulf %120, %128 : vector<2x128xf32>
      %137 = arith.addf %135, %136 : vector<2x128xf32>
      %138 = math.tanh %137 : vector<2x128xf32>
      %139 = arith.mulf %134, %138 : vector<2x128xf32>
      %140 = vector.extract_strided_slice %139 {offsets = [0, 48], sizes = [2, 1], strides = [1, 1]} : vector<2x128xf32> to vector<2x1xf32>
      %141 = arith.index_cast %107 : i32 to index
      %c0_57 = arith.constant 0 : index
      %c0_58 = arith.constant 0 : index
      %142 = vector.load %arg12[%141, %c0_57, %c0_58] : memref<32x1x128xf32, #tpu.memory_space<vmem>>, vector<1x1x128xf32>
      %143 = vector.shape_cast %142 : vector<1x1x128xf32> to vector<1x128xf32>
      %144 = vector.broadcast %140 : vector<2x1xf32> to vector<2x128xf32>
      %145 = vector.broadcast %143 : vector<1x128xf32> to vector<2x128xf32>
      %146 = arith.mulf %144, %145 : vector<2x128xf32>
      %147 = arith.addf %105, %146 : vector<2x128xf32>
      %c3_i32 = arith.constant 3 : i32
      %148 = arith.addi %21, %c3_i32 : i32
      %c31_i32_59 = arith.constant 31 : i32
      %149 = arith.subi %c31_i32_59, %148 : i32
      %150 = arith.index_cast %149 : i32 to index
      %c0_60 = arith.constant 0 : index
      %c0_61 = arith.constant 0 : index
      %151 = vector.load %arg20[%150, %c0_60, %c0_61] : memref<32x2x512xf32, #tpu.memory_space<vmem>>, vector<1x2x512xf32>
      %152 = vector.shape_cast %151 : vector<1x2x512xf32> to vector<2x512xf32>
      %153 = arith.truncf %139 : vector<2x128xf32> to vector<2x128xbf16>
      %c0_62 = arith.constant 0 : index
      %c0_63 = arith.constant 0 : index
      %154 = vector.load %arg11[%c0_62, %c0_63] : memref<128x512xbf16, #tpu.memory_space<vmem>>, vector<128x512xbf16>
      %cst_64 = arith.constant dense<0.000000e+00> : vector<2x512xf32>
      %155 = tpu.matmul %153, %154, %cst_64 {dimension_numbers = #tpu.dot_dimension_numbers<[1], [0], [0], [1], [0, 0, 1, 1], [], []>} : vector<2x128xbf16>, vector<128x512xbf16>, vector<2x512xf32> -> vector<2x512xf32>
      %156 = arith.addf %152, %155 : vector<2x512xf32>
      %157 = vector.extract_strided_slice %156 {offsets = [0, 0], sizes = [2, 128], strides = [1, 1]} : vector<2x512xf32> to vector<2x128xf32>
      %158 = arith.negf %157 : vector<2x128xf32>
      %159 = math.exp %158 : vector<2x128xf32>
      %cst_65 = arith.constant 1.000000e+00 : f32
      %160 = vector.broadcast %cst_65 : f32 to vector<2x128xf32>
      %161 = arith.addf %160, %159 : vector<2x128xf32>
      %162 = arith.divf %160, %161 : vector<2x128xf32>
      %163 = vector.extract_strided_slice %156 {offsets = [0, 128], sizes = [2, 128], strides = [1, 1]} : vector<2x512xf32> to vector<2x128xf32>
      %164 = arith.negf %163 : vector<2x128xf32>
      %165 = math.exp %164 : vector<2x128xf32>
      %cst_66 = arith.constant 1.000000e+00 : f32
      %166 = vector.broadcast %cst_66 : f32 to vector<2x128xf32>
      %167 = arith.addf %166, %165 : vector<2x128xf32>
      %168 = arith.divf %166, %167 : vector<2x128xf32>
      %169 = vector.extract_strided_slice %156 {offsets = [0, 256], sizes = [2, 128], strides = [1, 1]} : vector<2x512xf32> to vector<2x128xf32>
      %170 = math.tanh %169 : vector<2x128xf32>
      %171 = vector.extract_strided_slice %156 {offsets = [0, 384], sizes = [2, 128], strides = [1, 1]} : vector<2x512xf32> to vector<2x128xf32>
      %172 = arith.negf %171 : vector<2x128xf32>
      %173 = math.exp %172 : vector<2x128xf32>
      %cst_67 = arith.constant 1.000000e+00 : f32
      %174 = vector.broadcast %cst_67 : f32 to vector<2x128xf32>
      %175 = arith.addf %174, %173 : vector<2x128xf32>
      %176 = arith.divf %174, %175 : vector<2x128xf32>
      %177 = arith.mulf %168, %137 : vector<2x128xf32>
      %178 = arith.mulf %162, %170 : vector<2x128xf32>
      %179 = arith.addf %177, %178 : vector<2x128xf32>
      %180 = math.tanh %179 : vector<2x128xf32>
      %181 = arith.mulf %176, %180 : vector<2x128xf32>
      %182 = vector.extract_strided_slice %181 {offsets = [0, 48], sizes = [2, 1], strides = [1, 1]} : vector<2x128xf32> to vector<2x1xf32>
      %183 = arith.index_cast %149 : i32 to index
      %c0_68 = arith.constant 0 : index
      %c0_69 = arith.constant 0 : index
      %184 = vector.load %arg12[%183, %c0_68, %c0_69] : memref<32x1x128xf32, #tpu.memory_space<vmem>>, vector<1x1x128xf32>
      %185 = vector.shape_cast %184 : vector<1x1x128xf32> to vector<1x128xf32>
      %186 = vector.broadcast %182 : vector<2x1xf32> to vector<2x128xf32>
      %187 = vector.broadcast %185 : vector<1x128xf32> to vector<2x128xf32>
      %188 = arith.mulf %186, %187 : vector<2x128xf32>
      %189 = arith.addf %147, %188 : vector<2x128xf32>
      scf.yield %181, %179, %189 : vector<2x128xf32>, vector<2x128xf32>, vector<2x128xf32>
    }
    %c8_i32_17 = arith.constant 8 : i32
    %c0_18 = arith.constant 0 : index
    %c0_19 = arith.constant 0 : index
    %13 = vector.load %arg13[%c0_18, %c0_19] : memref<3x128xf32, #tpu.memory_space<vmem>>, vector<3x128xf32>
    %cst_20 = arith.constant dense<0.000000e+00> : vector<2x128xf32>
    %14 = tpu.matmul %3, %13, %cst_20 {dimension_numbers = #tpu.dot_dimension_numbers<[1], [0], [0], [1], [0, 0, 1, 1], [], []>} : vector<2x3xf32>, vector<3x128xf32>, vector<2x128xf32> -> vector<2x128xf32>
    %c0_21 = arith.constant 0 : index
    %c0_22 = arith.constant 0 : index
    %15 = vector.load %arg14[%c0_21, %c0_22] : memref<1x128xf32, #tpu.memory_space<vmem>>, vector<1x128xf32>
    %16 = vector.broadcast %15 : vector<1x128xf32> to vector<2x128xf32>
    %17 = arith.addf %14, %16 : vector<2x128xf32>
    %18 = arith.addf %17, %12#2 : vector<2x128xf32>
    %19 = vector.extract_strided_slice %18 {offsets = [0, 0], sizes = [2, 2], strides = [1, 1]} : vector<2x128xf32> to vector<2x2xf32>
    %c0_23 = arith.constant 0 : index
    %c0_24 = arith.constant 0 : index
    %20 = vector.load %arg15[%c0_23, %c0_24] : memref<2x2xf32, #tpu.memory_space<vmem>>, vector<2x2xf32>
    tpu.vector_store %arg15[%c0_23, %c0_24], %19 {strides = array<i32>} : memref<2x2xf32, #tpu.memory_space<vmem>>, vector<2x2xf32>,
    return
  }
  func.func @transform_0(%arg0: i32) -> (i32, i32, i32) {
    %c0_i32 = arith.constant 0 : i32
    %c0_i32_0 = arith.constant 0 : i32
    %c0_i32_1 = arith.constant 0 : i32
    %c0_i32_2 = arith.constant 0 : i32
    return %c0_i32, %c0_i32_0, %c0_i32_1 : i32, i32, i32
  }
  func.func @transform_1(%arg0: i32) -> (i32, i32, i32) {
    %c0_i32 = arith.constant 0 : i32
    %c0_i32_0 = arith.constant 0 : i32
    %c0_i32_1 = arith.constant 0 : i32
    %c0_i32_2 = arith.constant 0 : i32
    return %c0_i32, %c0_i32_0, %c0_i32_1 : i32, i32, i32
  }
  func.func @transform_2(%arg0: i32) -> (i32, i32, i32) {
    %c0_i32 = arith.constant 0 : i32
    %c0_i32_0 = arith.constant 0 : i32
    %c0_i32_1 = arith.constant 0 : i32
    %c0_i32_2 = arith.constant 0 : i32
    return %c0_i32, %c0_i32_0, %c0_i32_1 : i32, i32, i32
  }
  func.func @transform_3(%arg0: i32) -> (i32, i32, i32) {
    %c0_i32 = arith.constant 0 : i32
    %c0_i32_0 = arith.constant 0 : i32
    %c0_i32_1 = arith.constant 0 : i32
    %c0_i32_2 = arith.constant 0 : i32
    return %c0_i32, %c0_i32_0, %c0_i32_1 : i32, i32, i32
  }
  func.func @transform_4(%arg0: i32) -> (i32, i32, i32) {
    %c0_i32 = arith.constant 0 : i32
    %c0_i32_0 = arith.constant 0 : i32
    %c0_i32_1 = arith.constant 0 : i32
    %c0_i32_2 = arith.constant 0 : i32
    return %c0_i32, %c0_i32_0, %c0_i32_1 : i32, i32, i32
  }
  func.func @transform_5(%arg0: i32) -> (i32, i32) {
    %c0_i32 = arith.constant 0 : i32
    %c0_i32_0 = arith.constant 0 : i32
    %c0_i32_1 = arith.constant 0 : i32
    return %c0_i32, %c0_i32_0 : i32, i32
  }
  func.func @transform_6(%arg0: i32) -> (i32, i32) {
    %c0_i32 = arith.constant 0 : i32
    %c0_i32_0 = arith.constant 0 : i32
    %c0_i32_1 = arith.constant 0 : i32
    return %c0_i32, %c0_i32_0 : i32, i32
  }
  func.func @transform_7(%arg0: i32) -> (i32, i32) {
    %c0_i32 = arith.constant 0 : i32
    %c0_i32_0 = arith.constant 0 : i32
    %c0_i32_1 = arith.constant 0 : i32
    return %c0_i32, %c0_i32_0 : i32, i32
  }
  func.func @transform_8(%arg0: i32) -> (i32, i32) {
    %c0_i32 = arith.constant 0 : i32
    %c0_i32_0 = arith.constant 0 : i32
    %c0_i32_1 = arith.constant 0 : i32
    return %c0_i32, %c0_i32_0 : i32, i32
  }
  func.func @transform_9(%arg0: i32) -> (i32, i32) {
    %c0_i32 = arith.constant 0 : i32
    %c0_i32_0 = arith.constant 0 : i32
    %c0_i32_1 = arith.constant 0 : i32
    return %c0_i32, %c0_i32_0 : i32, i32
  }
  func.func @transform_10(%arg0: i32) -> (i32, i32) {
    %c0_i32 = arith.constant 0 : i32
    %c0_i32_0 = arith.constant 0 : i32
    %c0_i32_1 = arith.constant 0 : i32
    return %c0_i32, %c0_i32_0 : i32, i32
  }
  func.func @transform_11(%arg0: i32) -> (i32, i32, i32) {
    %c0_i32 = arith.constant 0 : i32
    %c0_i32_0 = arith.constant 0 : i32
    %c0_i32_1 = arith.constant 0 : i32
    %c0_i32_2 = arith.constant 0 : i32
    return %c0_i32, %c0_i32_0, %c0_i32_1 : i32, i32, i32
  }
  func.func @transform_12(%arg0: i32) -> (i32, i32) {
    %c0_i32 = arith.constant 0 : i32
    %c0_i32_0 = arith.constant 0 : i32
    %c0_i32_1 = arith.constant 0 : i32
    return %c0_i32, %c0_i32_0 : i32, i32
  }
  func.func @transform_13(%arg0: i32) -> (i32, i32) {
    %c0_i32 = arith.constant 0 : i32
    %c0_i32_0 = arith.constant 0 : i32
    %c0_i32_1 = arith.constant 0 : i32
    return %c0_i32, %c0_i32_0 : i32, i32
  }
  func.func @transform_14(%arg0: i32) -> (i32, i32) {
    %c0_i32 = arith.constant 0 : i32
    %c0_i32_0 = arith.constant 0 : i32
    %c0_i32_1 = arith.constant 0 : i32
    return %c0_i32, %c0_i32_0 : i32, i32
  }
}

</mosaic_0001>

<llo_original>
// kernel: model_forward.1
$region0: #{model_forward.1}
  #allocation0 [shape = 'u32[]', space=smem, size = 0x4, offset = 0x4, fixed_abs, tag = 'smem constant byte address 0x4 - core index']
  #allocation1 [shape = 'u32[144,128]{1,0:T(1,128)}', space=vmem, size = 0x12000, scoped, tag = 'internal scratch']
  #allocation2 [shape = 'f32[32,2,512]{2,1,0:T(2,128)}', space=vmem, size = 0x20000, scoped, tag = 'scratch operand']
  #allocation3 [shape = 'f32[32,2,512]{2,1,0:T(2,128)}', space=vmem, size = 0x20000, scoped, tag = 'scratch operand']
  #allocation4 [shape = 'f32[32,2,128]{2,1,0:T(2,128)}', space=vmem, size = 0x8000, scoped, tag = 'scratch operand']
  #allocation5 [shape = 'f32[32,2,128]{2,1,0:T(2,128)}', space=vmem, size = 0x8000, scoped, tag = 'scratch operand']
  #allocation6 [shape = 'f32[32,2,512]{2,1,0:T(2,128)}', space=vmem, size = 0x20000, scoped, tag = 'scratch operand']
  %s0 = inlined_call_operand.vmem [shape: f32[2,3,3136], index: 0, kind: input, shape index: {}]
  %s1 = inlined_call_operand.vmem [shape: bf16[32,3,512], index: 1, kind: input, shape index: {}]
  %s2 = inlined_call_operand.vmem [shape: bf16[32,3,512], index: 2, kind: input, shape index: {}]
  %s3 = inlined_call_operand.vmem [shape: f32[32,1,512], index: 3, kind: input, shape index: {}]
  %s4 = inlined_call_operand.hbm [shape: f32[32,1,512], index: 4, kind: input, shape index: {}]
  %s5 = inlined_call_operand.vmem [shape: bf16[128,512], index: 5, kind: input, shape index: {}]
  %s6 = inlined_call_operand.vmem [shape: bf16[128,512], index: 6, kind: input, shape index: {}]
  %s7 = inlined_call_operand.vmem [shape: bf16[128,512], index: 7, kind: input, shape index: {}]
  %s8 = inlined_call_operand.vmem [shape: bf16[128,512], index: 8, kind: input, shape index: {}]
  %s9 = inlined_call_operand.vmem [shape: f32[1,512], index: 9, kind: input, shape index: {}]
  %s10 = inlined_call_operand.vmem [shape: bf16[128,512], index: 10, kind: input, shape index: {}]
  %s11 = inlined_call_operand.vmem [shape: f32[32,1,128], index: 11, kind: input, shape index: {}]
  %s12 = inlined_call_operand.vmem [shape: f32[3,128], index: 12, kind: input, shape index: {}]
  %s13 = inlined_call_operand.vmem [shape: f32[1,128], index: 13, kind: input, shape index: {}]
  %s14 = inlined_call_operand.hbm [shape: f32[2,2], index: 14, kind: output, shape index: {}]
  %s15 = sld [smem:[#allocation0]]
  $region98: #{model_forward.1} parent=0
    _
  %s17 = ssub.s32 1, %s15
  %s18 = scalar_select 0, %s17, %s15
  $region1: #{model_forward.1} parent=0
    #allocation7 [shape = 'u8[65536]{0}', space=vmem, size = 0x10000, scoped, tag = 'input window, operand 4, single buffered']
    #allocation8 [shape = 's32[1]{0}', space=sflag, size = 0x4, scoped, tag = 'scoped memory for model_forward.1']
    #allocation9 [shape = 's32[1]{0}', space=sflag, size = 0x4, scoped, tag = 'scoped memory for model_forward.1']
    #allocation10 [shape = 'u8[1024]{0}', space=vmem, size = 0x400, scoped, tag = 'output window, operand 0, single buffered']
    %19 = vsyncpa [#allocation8], 0
    %20 = vsyncpa [#allocation9], 0
    // Predicated region
    $region2: #{model_forward.1} parent=1 // pred_check
      _
    $region3: #{model_forward.1} parent=1 // pred_check_branch
      %22 = sbr.rel (0) target = $region5
    $region4: #{model_forward.1} parent=1 // pred_region
      _
    $region5: #{model_forward.1} parent=1 // pred_fallthru
      _
    // Predicated region
    $region6: #{model_forward.1} parent=1 // pred_check
      _
    $region7: #{model_forward.1} parent=1 // pred_check_branch
      %24 = sbr.rel (0) target = $region9
    $region8: #{model_forward.1} parent=1 // pred_region
      _
    $region9: #{model_forward.1} parent=1 // pred_fallthru
      _
    // Predicated region
    $region10: #{model_forward.1} parent=1 // pred_check
      _
    $region11: #{model_forward.1} parent=1 // pred_check_branch
      %26 = sbr.rel (0) target = $region13
    $region12: #{model_forward.1} parent=1 // pred_region
      _
    $region13: #{model_forward.1} parent=1 // pred_fallthru
      _
    // Predicated region
    $region14: #{model_forward.1} parent=1 // pred_check
      _
    $region15: #{model_forward.1} parent=1 // pred_check_branch
      %28 = sbr.rel (0) target = $region17
    $region16: #{model_forward.1} parent=1 // pred_region
      _
    $region17: #{model_forward.1} parent=1 // pred_fallthru
      _
    // Predicated region
    $region18: #{model_forward.1} parent=1 // pred_check
      _
    $region19: #{model_forward.1} parent=1 // pred_check_branch
      %30 = sbr.rel (0) target = $region21
    $region20: #{model_forward.1} parent=1 // pred_region
      %s32 = ssub.s32 2048, 2048
      %33 = vsyncadd [#allocation8], %s32
      %s34 = sshll.u32 [#allocation7], 4
      %s35 = int_to_ptr.vmem [resolvable:$true] %s34
      %40 = dma.hbm_to_vmem [thread:$0]  %s4, 2048, %s35, [#allocation8], 64, 64, 4
    $region21: #{model_forward.1} parent=1 // pred_fallthru
      _
    // Predicated region
    $region22: #{model_forward.1} parent=1 // pred_check
      _
    $region23: #{model_forward.1} parent=1 // pred_check_branch
      %42 = sbr.rel (0) target = $region25
    $region24: #{model_forward.1} parent=1 // pred_region
      _
    $region25: #{model_forward.1} parent=1 // pred_fallthru
      _
    // Predicated region
    $region26: #{model_forward.1} parent=1 // pred_check
      _
    $region27: #{model_forward.1} parent=1 // pred_check_branch
      %44 = sbr.rel (0) target = $region29
    $region28: #{model_forward.1} parent=1 // pred_region
      _
    $region29: #{model_forward.1} parent=1 // pred_fallthru
      _
    // Predicated region
    $region30: #{model_forward.1} parent=1 // pred_check
      _
    $region31: #{model_forward.1} parent=1 // pred_check_branch
      %46 = sbr.rel (0) target = $region33
    $region32: #{model_forward.1} parent=1 // pred_region
      _
    $region33: #{model_forward.1} parent=1 // pred_fallthru
      _
    // Predicated region
    $region34: #{model_forward.1} parent=1 // pred_check
      _
    $region35: #{model_forward.1} parent=1 // pred_check_branch
      %48 = sbr.rel (0) target = $region37
    $region36: #{model_forward.1} parent=1 // pred_region
      _
    $region37: #{model_forward.1} parent=1 // pred_fallthru
      _
    // Predicated region
    $region38: #{model_forward.1} parent=1 // pred_check
      _
    $region39: #{model_forward.1} parent=1 // pred_check_branch
      %50 = sbr.rel (0) target = $region41
    $region40: #{model_forward.1} parent=1 // pred_region
      _
    $region41: #{model_forward.1} parent=1 // pred_fallthru
      _
    // Predicated region
    $region42: #{model_forward.1} parent=1 // pred_check
      _
    $region43: #{model_forward.1} parent=1 // pred_check_branch
      %52 = sbr.rel (0) target = $region45
    $region44: #{model_forward.1} parent=1 // pred_region
      _
    $region45: #{model_forward.1} parent=1 // pred_fallthru
      _
    // Predicated region
    $region46: #{model_forward.1} parent=1 // pred_check
      _
    $region47: #{model_forward.1} parent=1 // pred_check_branch
      %54 = sbr.rel (0) target = $region49
    $region48: #{model_forward.1} parent=1 // pred_region
      _
    $region49: #{model_forward.1} parent=1 // pred_fallthru
      _
    // Predicated region
    $region50: #{model_forward.1} parent=1 // pred_check
      _
    $region51: #{model_forward.1} parent=1 // pred_check_branch
      %56 = sbr.rel (0) target = $region53
    $region52: #{model_forward.1} parent=1 // pred_region
      _
    $region53: #{model_forward.1} parent=1 // pred_fallthru
      _
    // Predicated region
    $region54: #{model_forward.1} parent=1 // pred_check
      _
    $region55: #{model_forward.1} parent=1 // pred_check_branch
      %58 = sbr.rel (0) target = $region57
    $region56: #{model_forward.1} parent=1 // pred_region
      _
    $region57: #{model_forward.1} parent=1 // pred_fallthru
      _
    // Predicated region
    $region58: #{model_forward.1} parent=1 // pred_check
      _
    $region59: #{model_forward.1} parent=1 // pred_check_branch
      %60 = sbr.rel (0) target = $region61
    $region60: #{model_forward.1} parent=1 // pred_region
      %61 = dma.done [#allocation8], 2048
    $region61: #{model_forward.1} parent=1 // pred_fallthru
      _
    %v63 = vld [vmem:[%s0] sm:$0x77]
    %v64 = vld [vmem:[%s0 + $0x8] sm:$0x77]
    %v65 = vld [vmem:[%s0 + $0x10] sm:$0x77]
    %v66 = vld [vmem:[%s0 + $0x18] sm:$0x77]
    %v67 = vld [vmem:[%s0 + $0x20] sm:$0x77]
    %v68 = vld [vmem:[%s0 + $0x28] sm:$0x77]
    %v69 = vld [vmem:[%s0 + $0x30] sm:$0x77]
    %v70 = vld [vmem:[%s0 + $0x38] sm:$0x77]
    %v71 = vld [vmem:[%s0 + $0x40] sm:$0x77]
    %v72 = vld [vmem:[%s0 + $0x48] sm:$0x77]
    %v73 = vld [vmem:[%s0 + $0x50] sm:$0x77]
    %v74 = vld [vmem:[%s0 + $0x58] sm:$0x77]
    %v75 = vld [vmem:[%s0 + $0x60] sm:$0x7]
    %v76 = vld [vmem:[%s0 + $0x64] sm:$0x77]
    %v77 = vld [vmem:[%s0 + $0x6c] sm:$0x77]
    %v78 = vld [vmem:[%s0 + $0x74] sm:$0x77]
    %v79 = vld [vmem:[%s0 + $0x7c] sm:$0x77]
    %v80 = vld [vmem:[%s0 + $0x84] sm:$0x77]
    %v81 = vld [vmem:[%s0 + $0x8c] sm:$0x77]
    %v82 = vld [vmem:[%s0 + $0x94] sm:$0x77]
    %v83 = vld [vmem:[%s0 + $0x9c] sm:$0x77]
    %v84 = vld [vmem:[%s0 + $0xa4] sm:$0x77]
    %v85 = vld [vmem:[%s0 + $0xac] sm:$0x77]
    %v86 = vld [vmem:[%s0 + $0xb4] sm:$0x77]
    %v87 = vld [vmem:[%s0 + $0xbc] sm:$0x77]
    %v88 = vld [vmem:[%s0 + $0xc4] sm:$0x7]
    %v113 = vcombine.high %v63, %v63
    %v114 = vcombine.high %v64, %v64
    %v115 = vcombine.high %v65, %v65
    %v116 = vcombine.high %v66, %v66
    %v117 = vcombine.high %v67, %v67
    %v118 = vcombine.high %v68, %v68
    %v119 = vcombine.high %v69, %v69
    %v120 = vcombine.high %v70, %v70
    %v121 = vcombine.high %v71, %v71
    %v122 = vcombine.high %v72, %v72
    %v123 = vcombine.high %v73, %v73
    %v124 = vcombine.high %v74, %v74
    %v125 = vcombine.high %v76, %v76
    %v126 = vcombine.high %v77, %v77
    %v127 = vcombine.high %v78, %v78
    %v128 = vcombine.high %v79, %v79
    %v129 = vcombine.high %v80, %v80
    %v130 = vcombine.high %v81, %v81
    %v131 = vcombine.high %v82, %v82
    %v132 = vcombine.high %v83, %v83
    %v133 = vcombine.high %v84, %v84
    %v134 = vcombine.high %v85, %v85
    %v135 = vcombine.high %v86, %v86
    %v136 = vcombine.high %v87, %v87
    %vm161 = vcmask 1042432
    %v162 = vsel %vm161, %v63, 0.0
    %v163 = vsel %vm161, %v113, 0.0
    %v164 = vadd.f32 %v162, %v163
    %v165 = vsel %vm161, %v64, 0.0
    %v166 = vadd.f32 %v164, %v165
    %v167 = vsel %vm161, %v114, 0.0
    %v168 = vadd.f32 %v166, %v167
    %v169 = vsel %vm161, %v65, 0.0
    %v170 = vadd.f32 %v168, %v169
    %v171 = vsel %vm161, %v115, 0.0
    %v172 = vadd.f32 %v170, %v171
    %v173 = vsel %vm161, %v66, 0.0
    %v174 = vadd.f32 %v172, %v173
    %v175 = vsel %vm161, %v116, 0.0
    %v176 = vadd.f32 %v174, %v175
    %v177 = vsel %vm161, %v67, 0.0
    %v178 = vadd.f32 %v176, %v177
    %v179 = vsel %vm161, %v117, 0.0
    %v180 = vadd.f32 %v178, %v179
    %v181 = vsel %vm161, %v68, 0.0
    %v182 = vadd.f32 %v180, %v181
    %v183 = vsel %vm161, %v118, 0.0
    %v184 = vadd.f32 %v182, %v183
    %v185 = vsel %vm161, %v69, 0.0
    %v186 = vadd.f32 %v184, %v185
    %v187 = vsel %vm161, %v119, 0.0
    %v188 = vadd.f32 %v186, %v187
    %v189 = vsel %vm161, %v70, 0.0
    %v190 = vadd.f32 %v188, %v189
    %v191 = vsel %vm161, %v120, 0.0
    %v192 = vadd.f32 %v190, %v191
    %v193 = vsel %vm161, %v71, 0.0
    %v194 = vadd.f32 %v192, %v193
    %v195 = vsel %vm161, %v121, 0.0
    %v196 = vadd.f32 %v194, %v195
    %v197 = vsel %vm161, %v72, 0.0
    %v198 = vadd.f32 %v196, %v197
    %v199 = vsel %vm161, %v122, 0.0
    %v200 = vadd.f32 %v198, %v199
    %v201 = vsel %vm161, %v73, 0.0
    %v202 = vadd.f32 %v200, %v201
    %v203 = vsel %vm161, %v123, 0.0
    %v204 = vadd.f32 %v202, %v203
    %v205 = vsel %vm161, %v74, 0.0
    %v206 = vadd.f32 %v204, %v205
    %v207 = vsel %vm161, %v124, 0.0
    %v208 = vadd.f32 %v206, %v207
    %vm209 = vcmask 518144
    %v210 = vsel %vm209, %v75, 0.0
    %v211 = vadd.f32 %v208, %v210
    %212 = vadd.xlane.f32.xlu0 %v211
    %v213 = vpop.xlane.xlu0 %212
    %v214 = vsel %vm161, %v76, 0.0
    %v215 = vsel %vm161, %v125, 0.0
    %v216 = vadd.f32 %v214, %v215
    %v217 = vsel %vm161, %v77, 0.0
    %v218 = vadd.f32 %v216, %v217
    %v219 = vsel %vm161, %v126, 0.0
    %v220 = vadd.f32 %v218, %v219
    %v221 = vsel %vm161, %v78, 0.0
    %v222 = vadd.f32 %v220, %v221
    %v223 = vsel %vm161, %v127, 0.0
    %v224 = vadd.f32 %v222, %v223
    %v225 = vsel %vm161, %v79, 0.0
    %v226 = vadd.f32 %v224, %v225
    %v227 = vsel %vm161, %v128, 0.0
    %v228 = vadd.f32 %v226, %v227
    %v229 = vsel %vm161, %v80, 0.0
    %v230 = vadd.f32 %v228, %v229
    %v231 = vsel %vm161, %v129, 0.0
    %v232 = vadd.f32 %v230, %v231
    %v233 = vsel %vm161, %v81, 0.0
    %v234 = vadd.f32 %v232, %v233
    %v235 = vsel %vm161, %v130, 0.0
    %v236 = vadd.f32 %v234, %v235
    %v237 = vsel %vm161, %v82, 0.0
    %v238 = vadd.f32 %v236, %v237
    %v239 = vsel %vm161, %v131, 0.0
    %v240 = vadd.f32 %v238, %v239
    %v241 = vsel %vm161, %v83, 0.0
    %v242 = vadd.f32 %v240, %v241
    %v243 = vsel %vm161, %v132, 0.0
    %v244 = vadd.f32 %v242, %v243
    %v245 = vsel %vm161, %v84, 0.0
    %v246 = vadd.f32 %v244, %v245
    %v247 = vsel %vm161, %v133, 0.0
    %v248 = vadd.f32 %v246, %v247
    %v249 = vsel %vm161, %v85, 0.0
    %v250 = vadd.f32 %v248, %v249
    %v251 = vsel %vm161, %v134, 0.0
    %v252 = vadd.f32 %v250, %v251
    %v253 = vsel %vm161, %v86, 0.0
    %v254 = vadd.f32 %v252, %v253
    %v255 = vsel %vm161, %v135, 0.0
    %v256 = vadd.f32 %v254, %v255
    %v257 = vsel %vm161, %v87, 0.0
    %v258 = vadd.f32 %v256, %v257
    %v259 = vsel %vm161, %v136, 0.0
    %v260 = vadd.f32 %v258, %v259
    %v261 = vsel %vm209, %v88, 0.0
    %v262 = vadd.f32 %v260, %v261
    %263 = vadd.xlane.f32.xlu0 %v262
    %v264 = vpop.xlane.xlu0 %263
    %v265 = vrcp.pop 3136.0
    %v266 = vmul.f32 %v213, %v265
    %v267 = vmul.f32 %v264, %v265
    %v268 = vpack.c.bf16 %v266, %v266
    %v269 = vpack.c.bf16 %v267, %v267
    loop: start=0, step=1, limit=32
    $region62: #{model_forward.1} parent=1 // loop_pre_header
      _
    $region63: #{model_forward.1} parent=1 // loop_header
      %s271 = sphi 0, %s275
      %p272 = scmp.ge.s32.totalorder %s271, 32
    $region64: #{model_forward.1} parent=1 // loop_header_branch
      %274 = sbr.rel (%p272) target = $region68
    $region65: #{model_forward.1} parent=1 // loop_body
      %s276 = smul.u32 %s271, 4
      %s277 = smul.addr %s276, 2
      %s278 = scalar_lea.vmem %s1, %s277
      %v279 = vld [vmem:[%s278] sm:$0xff]
      %s280 = scalar_lea.vmem %s3, %s276
      %v281 = vld [vmem:[%s280] sm:$0xf]
      %v283 = vlaneseq
      %v284 = vshrl.u32 %v283, 7
      %v285 = vsub.s32 0, %v284
      %v286 = vrot.slane %v281, %v285
      %v287 = vlaneseq
      %v288 = vshrl.u32 %v287, 7
      %v289 = vsub.s32 1, %v288
      %v290 = vrot.slane %v281, %v289
      %v291 = vlaneseq
      %v292 = vshrl.u32 %v291, 7
      %v293 = vsub.s32 2, %v292
      %v294 = vrot.slane %v281, %v293
      %v295 = vlaneseq
      %v296 = vshrl.u32 %v295, 7
      %v297 = vsub.s32 3, %v296
      %v298 = vrot.slane %v281, %v297
      %v305 = vunpack.c.l.b16 %v268
      %v306 = vunpack.c.l.b16 %v269
      %v307 = vlaneseq
      %v308 = vand.u32 %v307, 127
      %v309 = vlaneseq
      %v310 = vshrl.u32 %v309, 7
      %v311 = vsub.s32 %v308, %v310
      %v312 = vrot.slane %v305, %v311
      %v313 = vlaneseq
      %v314 = vshrl.u32 %v313, 7
      %v315 = vsub.s32 %v308, %v314
      %v316 = vrot.slane %v306, %v315
      %vm317 = vcmask 1041409
      %v318 = vsel %vm317, %v316, %v312
      %v319 = vpack.c.b16 %v318, %v318
      %v321 = vcombine.high %v279, %v279
      %v323 = vunpack.c.l.s4 1983009808
      %v324 = vunpack.c.0.s8 %v323
      %v325 = vlaneseq
      %v326 = vshrl.u32 %v325, 7
      %v327 = vsub.s32 %v324, %v326
      %v328 = vrot.slane %v279, %v327
      %v330 = vunpack.c.l.s4 1983009808
      %v331 = vunpack.c.0.s8 %v330
      %v332 = vlaneseq
      %v333 = vshrl.u32 %v332, 7
      %v334 = vsub.s32 %v331, %v333
      %v335 = vrot.slane %v321, %v334
      %v336 = vcombine.high %v328, %v328
      %v337 = vcombine.high %v335, %v335
      %vm338 = vcmask 23552
      %v340 = vsel %vm338, %v319, 0
      %vm342 = vcmask 1040384
      %vm343 = vcmask 1041408
      %v344 = vsel %vm342, 4294967295, 65535
      %v345 = vsel %vm343, %v344, 0
      %v347 = vand.u32 %v328, %v345
      %v350 = vand.u32 %v336, %v345
      %v353 = vand.u32 %v335, %v345
      %v356 = vand.u32 %v337, %v345
      %358 = vmatprep.subr.bf16.mxu0 %v350
      %359 = vmatpush1.bf16.msra.mxu0 %v347
      %360 = vmatprep.subr.bf16.mxu0 0
      %361 = vmatpush1.bf16.msra.mxu0 0
      %362 = vmatprep.subr.bf16.mxu0 0
      %363 = vmatpush1.bf16.msra.mxu0 0
      %364 = vmatprep.subr.bf16.mxu0 0
      %365 = vmatpush1.bf16.msra.mxu0 0
      %366 = vmatprep.subr.bf16.mxu0 0
      %367 = vmatpush1.bf16.msra.mxu0 0
      %368 = vmatprep.subr.bf16.mxu0 0
      %369 = vmatpush1.bf16.msra.mxu0 0
      %370 = vmatprep.subr.bf16.mxu0 0
      %371 = vmatpush1.bf16.msra.mxu0 0
      %372 = vmatprep.subr.bf16.mxu0 0
      %373 = vmatpush1.bf16.msra.mxu0 0
      %374 = vmatprep.subr.bf16.mxu0 0
      %375 = vmatpush1.bf16.msra.mxu0 0
      %376 = vmatprep.subr.bf16.mxu0 0
      %377 = vmatpush1.bf16.msra.mxu0 0
      %378 = vmatprep.subr.bf16.mxu0 0
      %379 = vmatpush1.bf16.msra.mxu0 0
      %380 = vmatprep.subr.bf16.mxu0 0
      %381 = vmatpush1.bf16.msra.mxu0 0
      %382 = vmatprep.subr.bf16.mxu0 0
      %383 = vmatpush1.bf16.msra.mxu0 0
      %384 = vmatprep.subr.bf16.mxu0 0
      %385 = vmatpush1.bf16.msra.mxu0 0
      %386 = vmatprep.subr.bf16.mxu0 0
      %387 = vmatpush1.bf16.msra.mxu0 0
      %388 = vmatprep.subr.bf16.mxu0 0
      %389 = vmatpush1.bf16.msra.mxu0 0
      %390 = vmatprep.mubr.bf16.mxu0 0
      %391 = vmatmul.mubr.bf16.gmra.mrb[0].mxu0 %v340
      %v392 = vpop.f32.mrb[0].mxu0
      %v393 = vadd.f32 %v286, %v392
      %v394 = vpop.f32.mrb[0].mxu0
      %v395 = vadd.f32 %v290, %v394
      %v396 = vpop.f32.mrb[0].mxu0
      %v397 = vpop.f32.mrb[0].mxu0
      %398 = vdwg.mxu0
      %399 = vmatprep.subr.bf16.mxu0 %v356
      %400 = vmatpush1.bf16.msra.mxu0 %v353
      %401 = vmatprep.subr.bf16.mxu0 0
      %402 = vmatpush1.bf16.msra.mxu0 0
      %403 = vmatprep.subr.bf16.mxu0 0
      %404 = vmatpush1.bf16.msra.mxu0 0
      %405 = vmatprep.subr.bf16.mxu0 0
      %406 = vmatpush1.bf16.msra.mxu0 0
      %407 = vmatprep.subr.bf16.mxu0 0
      %408 = vmatpush1.bf16.msra.mxu0 0
      %409 = vmatprep.subr.bf16.mxu0 0
      %410 = vmatpush1.bf16.msra.mxu0 0
      %411 = vmatprep.subr.bf16.mxu0 0
      %412 = vmatpush1.bf16.msra.mxu0 0
      %413 = vmatprep.subr.bf16.mxu0 0
      %414 = vmatpush1.bf16.msra.mxu0 0
      %415 = vmatprep.subr.bf16.mxu0 0
      %416 = vmatpush1.bf16.msra.mxu0 0
      %417 = vmatprep.subr.bf16.mxu0 0
      %418 = vmatpush1.bf16.msra.mxu0 0
      %419 = vmatprep.subr.bf16.mxu0 0
      %420 = vmatpush1.bf16.msra.mxu0 0
      %421 = vmatprep.subr.bf16.mxu0 0
      %422 = vmatpush1.bf16.msra.mxu0 0
      %423 = vmatprep.subr.bf16.mxu0 0
      %424 = vmatpush1.bf16.msra.mxu0 0
      %425 = vmatprep.subr.bf16.mxu0 0
      %426 = vmatpush1.bf16.msra.mxu0 0
      %427 = vmatprep.subr.bf16.mxu0 0
      %428 = vmatpush1.bf16.msra.mxu0 0
      %429 = vmatprep.subr.bf16.mxu0 0
      %430 = vmatpush1.bf16.msra.mxu0 0
      %431 = vmatprep.mubr.bf16.mxu0 0
      %432 = vmatmul.mubr.bf16.gmra.mrb[0].mxu0 %v340
      %v433 = vpop.f32.mrb[0].mxu0
      %v434 = vadd.f32 %v294, %v433
      %v435 = vpop.f32.mrb[0].mxu0
      %v436 = vadd.f32 %v298, %v435
      %v437 = vpop.f32.mrb[0].mxu0
      %v438 = vpop.f32.mrb[0].mxu0
      %439 = vdwg.mxu0
      %v444 = vcombine.low %v393, %v395
      %v445 = vcombine.low %v434, %v436
      %v447 = vunpack.c.l.s4 1983009808
      %v448 = vunpack.c.0.s8 %v447
      %v449 = vlaneseq
      %v450 = vshrl.u32 %v449, 7
      %v451 = vsub.s32 %v448, %v450
      %v452 = vrot.slane %v444, %v451
      %v454 = vunpack.c.l.s4 1983009808
      %v455 = vunpack.c.0.s8 %v454
      %v456 = vlaneseq
      %v457 = vshrl.u32 %v456, 7
      %v458 = vsub.s32 %v455, %v457
      %v459 = vrot.slane %v445, %v458
      %v460 = vcombine.low %v452, %v459
      %s462 = smul.addr %s276, 2
      %s463 = scalar_lea.vmem [#allocation2], %s462
      %464 = vst [vmem:[%s463] sm:$0xff] %v460
      %s465 = smul.addr %s276, 2
      %s466 = scalar_lea.vmem %s2, %s465
      %v467 = vld [vmem:[%s466] sm:$0xff]
      %s468 = scalar_lea.vmem [#allocation7], %s276
      %v469 = vld [vmem:[%s468] sm:$0xf]
      %v471 = vlaneseq
      %v472 = vshrl.u32 %v471, 7
      %v473 = vsub.s32 0, %v472
      %v474 = vrot.slane %v469, %v473
      %v475 = vlaneseq
      %v476 = vshrl.u32 %v475, 7
      %v477 = vsub.s32 1, %v476
      %v478 = vrot.slane %v469, %v477
      %v479 = vlaneseq
      %v480 = vshrl.u32 %v479, 7
      %v481 = vsub.s32 2, %v480
      %v482 = vrot.slane %v469, %v481
      %v483 = vlaneseq
      %v484 = vshrl.u32 %v483, 7
      %v485 = vsub.s32 3, %v484
      %v486 = vrot.slane %v469, %v485
      %v492 = vcombine.high %v467, %v467
      %v494 = vunpack.c.l.s4 1983009808
      %v495 = vunpack.c.0.s8 %v494
      %v496 = vlaneseq
      %v497 = vshrl.u32 %v496, 7
      %v498 = vsub.s32 %v495, %v497
      %v499 = vrot.slane %v467, %v498
      %v501 = vunpack.c.l.s4 1983009808
      %v502 = vunpack.c.0.s8 %v501
      %v503 = vlaneseq
      %v504 = vshrl.u32 %v503, 7
      %v505 = vsub.s32 %v502, %v504
      %v506 = vrot.slane %v492, %v505
      %v507 = vcombine.high %v499, %v499
      %v508 = vcombine.high %v506, %v506
      %v510 = vand.u32 %v499, %v345
      %v513 = vand.u32 %v507, %v345
      %v516 = vand.u32 %v506, %v345
      %v519 = vand.u32 %v508, %v345
      %521 = vmatprep.subr.bf16.mxu0 %v513
      %522 = vmatpush1.bf16.msra.mxu0 %v510
      %523 = vmatprep.subr.bf16.mxu0 0
      %524 = vmatpush1.bf16.msra.mxu0 0
      %525 = vmatprep.subr.bf16.mxu0 0
      %526 = vmatpush1.bf16.msra.mxu0 0
      %527 = vmatprep.subr.bf16.mxu0 0
      %528 = vmatpush1.bf16.msra.mxu0 0
      %529 = vmatprep.subr.bf16.mxu0 0
      %530 = vmatpush1.bf16.msra.mxu0 0
      %531 = vmatprep.subr.bf16.mxu0 0
      %532 = vmatpush1.bf16.msra.mxu0 0
      %533 = vmatprep.subr.bf16.mxu0 0
      %534 = vmatpush1.bf16.msra.mxu0 0
      %535 = vmatprep.subr.bf16.mxu0 0
      %536 = vmatpush1.bf16.msra.mxu0 0
      %537 = vmatprep.subr.bf16.mxu0 0
      %538 = vmatpush1.bf16.msra.mxu0 0
      %539 = vmatprep.subr.bf16.mxu0 0
      %540 = vmatpush1.bf16.msra.mxu0 0
      %541 = vmatprep.subr.bf16.mxu0 0
      %542 = vmatpush1.bf16.msra.mxu0 0
      %543 = vmatprep.subr.bf16.mxu0 0
      %544 = vmatpush1.bf16.msra.mxu0 0
      %545 = vmatprep.subr.bf16.mxu0 0
      %546 = vmatpush1.bf16.msra.mxu0 0
      %547 = vmatprep.subr.bf16.mxu0 0
      %548 = vmatpush1.bf16.msra.mxu0 0
      %549 = vmatprep.subr.bf16.mxu0 0
      %550 = vmatpush1.bf16.msra.mxu0 0
      %551 = vmatprep.subr.bf16.mxu0 0
      %552 = vmatpush1.bf16.msra.mxu0 0
      %553 = vmatprep.mubr.bf16.mxu0 0
      %554 = vmatmul.mubr.bf16.gmra.mrb[0].mxu0 %v340
      %v555 = vpop.f32.mrb[0].mxu0
      %v556 = vadd.f32 %v474, %v555
      %v557 = vpop.f32.mrb[0].mxu0
      %v558 = vadd.f32 %v478, %v557
      %v559 = vpop.f32.mrb[0].mxu0
      %v560 = vpop.f32.mrb[0].mxu0
      %561 = vdwg.mxu0
      %562 = vmatprep.subr.bf16.mxu0 %v519
      %563 = vmatpush1.bf16.msra.mxu0 %v516
      %564 = vmatprep.subr.bf16.mxu0 0
      %565 = vmatpush1.bf16.msra.mxu0 0
      %566 = vmatprep.subr.bf16.mxu0 0
      %567 = vmatpush1.bf16.msra.mxu0 0
      %568 = vmatprep.subr.bf16.mxu0 0
      %569 = vmatpush1.bf16.msra.mxu0 0
      %570 = vmatprep.subr.bf16.mxu0 0
      %571 = vmatpush1.bf16.msra.mxu0 0
      %572 = vmatprep.subr.bf16.mxu0 0
      %573 = vmatpush1.bf16.msra.mxu0 0
      %574 = vmatprep.subr.bf16.mxu0 0
      %575 = vmatpush1.bf16.msra.mxu0 0
      %576 = vmatprep.subr.bf16.mxu0 0
      %577 = vmatpush1.bf16.msra.mxu0 0
      %578 = vmatprep.subr.bf16.mxu0 0
      %579 = vmatpush1.bf16.msra.mxu0 0
      %580 = vmatprep.subr.bf16.mxu0 0
      %581 = vmatpush1.bf16.msra.mxu0 0
      %582 = vmatprep.subr.bf16.mxu0 0
      %583 = vmatpush1.bf16.msra.mxu0 0
      %584 = vmatprep.subr.bf16.mxu0 0
      %585 = vmatpush1.bf16.msra.mxu0 0
      %586 = vmatprep.subr.bf16.mxu0 0
      %587 = vmatpush1.bf16.msra.mxu0 0
      %588 = vmatprep.subr.bf16.mxu0 0
      %589 = vmatpush1.bf16.msra.mxu0 0
      %590 = vmatprep.subr.bf16.mxu0 0
      %591 = vmatpush1.bf16.msra.mxu0 0
      %592 = vmatprep.subr.bf16.mxu0 0
      %593 = vmatpush1.bf16.msra.mxu0 0
      %594 = vmatprep.mubr.bf16.mxu0 0
      %595 = vmatmul.mubr.bf16.gmra.mrb[0].mxu0 %v340
      %v596 = vpop.f32.mrb[0].mxu0
      %v597 = vadd.f32 %v482, %v596
      %v598 = vpop.f32.mrb[0].mxu0
      %v599 = vadd.f32 %v486, %v598
      %v600 = vpop.f32.mrb[0].mxu0
      %v601 = vpop.f32.mrb[0].mxu0
      %602 = vdwg.mxu0
      %v607 = vcombine.low %v556, %v558
      %v608 = vcombine.low %v597, %v599
      %v610 = vunpack.c.l.s4 1983009808
      %v611 = vunpack.c.0.s8 %v610
      %v612 = vlaneseq
      %v613 = vshrl.u32 %v612, 7
      %v614 = vsub.s32 %v611, %v613
      %v615 = vrot.slane %v607, %v614
      %v617 = vunpack.c.l.s4 1983009808
      %v618 = vunpack.c.0.s8 %v617
      %v619 = vlaneseq
      %v620 = vshrl.u32 %v619, 7
      %v621 = vsub.s32 %v618, %v620
      %v622 = vrot.slane %v608, %v621
      %v623 = vcombine.low %v615, %v622
      %s625 = smul.addr %s276, 2
      %s626 = scalar_lea.vmem [#allocation3], %s625
      %627 = vst [vmem:[%s626] sm:$0xff] %v623
    $region66: #{model_forward.1} parent=1 // loop_footer
      %s275 = sadd.s32 1, %s271
    $region67: #{model_forward.1} parent=1 // loop_footer_branch
      %270 = sbr.rel target = $region63
    $region68: #{model_forward.1} parent=1 // loop_exit
      _
    loop: start=0, step=1, limit=8
    $region69: #{model_forward.1} parent=1 // loop_pre_header
      _
    $region70: #{model_forward.1} parent=1 // loop_header
      %s629 = sphi 0, %s633
      %p630 = scmp.ge.s32.totalorder %s629, 8
      %v634 = vphi 0.0, %v3296
      %v635 = vphi 0.0, %v3294
      %v636 = vphi 0.0, %v3327
      %v637 = vphi 0.0, %v3325
    $region71: #{model_forward.1} parent=1 // loop_header_branch
      %632 = sbr.rel (%p630) target = $region75
    $region72: #{model_forward.1} parent=1 // loop_body
      %s638 = smul.u32 %s629, 4
      %s639 = smul.u32 %s638, 4
      %s640 = smul.addr %s639, 2
      %s641 = scalar_lea.vmem [#allocation2], %s640
      %v642 = vld [vmem:[%s641] sm:$0xff]
      %v643 = vpack.c.bf16 %v634, %v634
      %v644 = vld [vmem:[%s5] sm:$0xff]
      %v645 = vld [vmem:[%s5 + $0x8] sm:$0xff]
      %v646 = vld [vmem:[%s5 + $0x10] sm:$0xff]
      %v647 = vld [vmem:[%s5 + $0x18] sm:$0xff]
      %v648 = vld [vmem:[%s5 + $0x20] sm:$0xff]
      %v649 = vld [vmem:[%s5 + $0x28] sm:$0xff]
      %v650 = vld [vmem:[%s5 + $0x30] sm:$0xff]
      %v651 = vld [vmem:[%s5 + $0x38] sm:$0xff]
      %v652 = vld [vmem:[%s5 + $0x40] sm:$0xff]
      %v653 = vld [vmem:[%s5 + $0x48] sm:$0xff]
      %v654 = vld [vmem:[%s5 + $0x50] sm:$0xff]
      %v655 = vld [vmem:[%s5 + $0x58] sm:$0xff]
      %v656 = vld [vmem:[%s5 + $0x60] sm:$0xff]
      %v657 = vld [vmem:[%s5 + $0x68] sm:$0xff]
      %v658 = vld [vmem:[%s5 + $0x70] sm:$0xff]
      %v659 = vld [vmem:[%s5 + $0x78] sm:$0xff]
      %v660 = vld [vmem:[%s5 + $0x80] sm:$0xff]
      %v661 = vld [vmem:[%s5 + $0x88] sm:$0xff]
      %v662 = vld [vmem:[%s5 + $0x90] sm:$0xff]
      %v663 = vld [vmem:[%s5 + $0x98] sm:$0xff]
      %v664 = vld [vmem:[%s5 + $0xa0] sm:$0xff]
      %v665 = vld [vmem:[%s5 + $0xa8] sm:$0xff]
      %v666 = vld [vmem:[%s5 + $0xb0] sm:$0xff]
      %v667 = vld [vmem:[%s5 + $0xb8] sm:$0xff]
      %v668 = vld [vmem:[%s5 + $0xc0] sm:$0xff]
      %v669 = vld [vmem:[%s5 + $0xc8] sm:$0xff]
      %v670 = vld [vmem:[%s5 + $0xd0] sm:$0xff]
      %v671 = vld [vmem:[%s5 + $0xd8] sm:$0xff]
      %v672 = vld [vmem:[%s5 + $0xe0] sm:$0xff]
      %v673 = vld [vmem:[%s5 + $0xe8] sm:$0xff]
      %v674 = vld [vmem:[%s5 + $0xf0] sm:$0xff]
      %v675 = vld [vmem:[%s5 + $0xf8] sm:$0xff]
      %v708 = vunpack.c.l.b16 %v644
      %v709 = vunpack.c.h.b16 %v644
      %v710 = vunpack.c.l.b16 %v645
      %v711 = vunpack.c.h.b16 %v645
      %v712 = vunpack.c.l.b16 %v646
      %v713 = vunpack.c.h.b16 %v646
      %v714 = vunpack.c.l.b16 %v647
      %v715 = vunpack.c.h.b16 %v647
      %v716 = vunpack.c.l.b16 %v648
      %v717 = vunpack.c.h.b16 %v648
      %v718 = vunpack.c.l.b16 %v649
      %v719 = vunpack.c.h.b16 %v649
      %v720 = vunpack.c.l.b16 %v650
      %v721 = vunpack.c.h.b16 %v650
      %v722 = vunpack.c.l.b16 %v651
      %v723 = vunpack.c.h.b16 %v651
      %v724 = vunpack.c.l.b16 %v652
      %v725 = vunpack.c.h.b16 %v652
      %v726 = vunpack.c.l.b16 %v653
      %v727 = vunpack.c.h.b16 %v653
      %v728 = vunpack.c.l.b16 %v654
      %v729 = vunpack.c.h.b16 %v654
      %v730 = vunpack.c.l.b16 %v655
      %v731 = vunpack.c.h.b16 %v655
      %v732 = vunpack.c.l.b16 %v656
      %v733 = vunpack.c.h.b16 %v656
      %v734 = vunpack.c.l.b16 %v657
      %v735 = vunpack.c.h.b16 %v657
      %v736 = vunpack.c.l.b16 %v658
      %v737 = vunpack.c.h.b16 %v658
      %v738 = vunpack.c.l.b16 %v659
      %v739 = vunpack.c.h.b16 %v659
      %v740 = vunpack.c.l.b16 %v660
      %v741 = vunpack.c.h.b16 %v660
      %v742 = vunpack.c.l.b16 %v661
      %v743 = vunpack.c.h.b16 %v661
      %v744 = vunpack.c.l.b16 %v662
      %v745 = vunpack.c.h.b16 %v662
      %v746 = vunpack.c.l.b16 %v663
      %v747 = vunpack.c.h.b16 %v663
      %v748 = vunpack.c.l.b16 %v664
      %v749 = vunpack.c.h.b16 %v664
      %v750 = vunpack.c.l.b16 %v665
      %v751 = vunpack.c.h.b16 %v665
      %v752 = vunpack.c.l.b16 %v666
      %v753 = vunpack.c.h.b16 %v666
      %v754 = vunpack.c.l.b16 %v667
      %v755 = vunpack.c.h.b16 %v667
      %v756 = vunpack.c.l.b16 %v668
      %v757 = vunpack.c.h.b16 %v668
      %v758 = vunpack.c.l.b16 %v669
      %v759 = vunpack.c.h.b16 %v669
      %v760 = vunpack.c.l.b16 %v670
      %v761 = vunpack.c.h.b16 %v670
      %v762 = vunpack.c.l.b16 %v671
      %v763 = vunpack.c.h.b16 %v671
      %v764 = vunpack.c.l.b16 %v672
      %v765 = vunpack.c.h.b16 %v672
      %v766 = vunpack.c.l.b16 %v673
      %v767 = vunpack.c.h.b16 %v673
      %v768 = vunpack.c.l.b16 %v674
      %v769 = vunpack.c.h.b16 %v674
      %v770 = vunpack.c.l.b16 %v675
      %v771 = vunpack.c.h.b16 %v675
      %v772 = vpack.c.b16 %v712, %v708
      %v773 = vpack.c.b16 %v713, %v709
      %v774 = vpack.c.b16 %v714, %v710
      %v775 = vpack.c.b16 %v715, %v711
      %v776 = vpack.c.b16 %v720, %v716
      %v777 = vpack.c.b16 %v721, %v717
      %v778 = vpack.c.b16 %v722, %v718
      %v779 = vpack.c.b16 %v723, %v719
      %v780 = vpack.c.b16 %v728, %v724
      %v781 = vpack.c.b16 %v729, %v725
      %v782 = vpack.c.b16 %v730, %v726
      %v783 = vpack.c.b16 %v731, %v727
      %v784 = vpack.c.b16 %v736, %v732
      %v785 = vpack.c.b16 %v737, %v733
      %v786 = vpack.c.b16 %v738, %v734
      %v787 = vpack.c.b16 %v739, %v735
      %v788 = vpack.c.b16 %v744, %v740
      %v789 = vpack.c.b16 %v745, %v741
      %v790 = vpack.c.b16 %v746, %v742
      %v791 = vpack.c.b16 %v747, %v743
      %v792 = vpack.c.b16 %v752, %v748
      %v793 = vpack.c.b16 %v753, %v749
      %v794 = vpack.c.b16 %v754, %v750
      %v795 = vpack.c.b16 %v755, %v751
      %v796 = vpack.c.b16 %v760, %v756
      %v797 = vpack.c.b16 %v761, %v757
      %v798 = vpack.c.b16 %v762, %v758
      %v799 = vpack.c.b16 %v763, %v759
      %v800 = vpack.c.b16 %v768, %v764
      %v801 = vpack.c.b16 %v769, %v765
      %v802 = vpack.c.b16 %v770, %v766
      %v803 = vpack.c.b16 %v771, %v767
      %836 = vmatprep.subr.bf16.mxu0 %v773
      %837 = vmatpush1.bf16.msra.mxu0 %v772
      %838 = vmatprep.subr.bf16.mxu0 %v777
      %839 = vmatpush1.bf16.msra.mxu0 %v776
      %840 = vmatprep.subr.bf16.mxu0 %v781
      %841 = vmatpush1.bf16.msra.mxu0 %v780
      %842 = vmatprep.subr.bf16.mxu0 %v785
      %843 = vmatpush1.bf16.msra.mxu0 %v784
      %844 = vmatprep.subr.bf16.mxu0 %v789
      %845 = vmatpush1.bf16.msra.mxu0 %v788
      %846 = vmatprep.subr.bf16.mxu0 %v793
      %847 = vmatpush1.bf16.msra.mxu0 %v792
      %848 = vmatprep.subr.bf16.mxu0 %v797
      %849 = vmatpush1.bf16.msra.mxu0 %v796
      %850 = vmatprep.subr.bf16.mxu0 %v801
      %851 = vmatpush1.bf16.msra.mxu0 %v800
      %852 = vmatprep.subr.bf16.mxu0 0
      %853 = vmatpush1.bf16.msra.mxu0 0
      %854 = vmatprep.subr.bf16.mxu0 0
      %855 = vmatpush1.bf16.msra.mxu0 0
      %856 = vmatprep.subr.bf16.mxu0 0
      %857 = vmatpush1.bf16.msra.mxu0 0
      %858 = vmatprep.subr.bf16.mxu0 0
      %859 = vmatpush1.bf16.msra.mxu0 0
      %860 = vmatprep.subr.bf16.mxu0 0
      %861 = vmatpush1.bf16.msra.mxu0 0
      %862 = vmatprep.subr.bf16.mxu0 0
      %863 = vmatpush1.bf16.msra.mxu0 0
      %864 = vmatprep.subr.bf16.mxu0 0
      %865 = vmatpush1.bf16.msra.mxu0 0
      %866 = vmatprep.subr.bf16.mxu0 0
      %867 = vmatpush1.bf16.msra.mxu0 0
      %868 = vmatprep.mubr.bf16.mxu0 0
      %869 = vmatmul.mubr.bf16.gmra.mrb[0].mxu0 %v643
      %v870 = vpop.f32.mrb[0].mxu0
      %v871 = vadd.f32 0.0, %v870
      %v872 = vpop.f32.mrb[0].mxu0
      %v873 = vadd.f32 0.0, %v872
      %v874 = vpop.f32.mrb[0].mxu0
      %v875 = vpop.f32.mrb[0].mxu0
      %876 = vdwg.mxu0
      %877 = vmatprep.subr.bf16.mxu0 %v775
      %878 = vmatpush1.bf16.msra.mxu0 %v774
      %879 = vmatprep.subr.bf16.mxu0 %v779
      %880 = vmatpush1.bf16.msra.mxu0 %v778
      %881 = vmatprep.subr.bf16.mxu0 %v783
      %882 = vmatpush1.bf16.msra.mxu0 %v782
      %883 = vmatprep.subr.bf16.mxu0 %v787
      %884 = vmatpush1.bf16.msra.mxu0 %v786
      %885 = vmatprep.subr.bf16.mxu0 %v791
      %886 = vmatpush1.bf16.msra.mxu0 %v790
      %887 = vmatprep.subr.bf16.mxu0 %v795
      %888 = vmatpush1.bf16.msra.mxu0 %v794
      %889 = vmatprep.subr.bf16.mxu0 %v799
      %890 = vmatpush1.bf16.msra.mxu0 %v798
      %891 = vmatprep.subr.bf16.mxu0 %v803
      %892 = vmatpush1.bf16.msra.mxu0 %v802
      %893 = vmatprep.subr.bf16.mxu0 0
      %894 = vmatpush1.bf16.msra.mxu0 0
      %895 = vmatprep.subr.bf16.mxu0 0
      %896 = vmatpush1.bf16.msra.mxu0 0
      %897 = vmatprep.subr.bf16.mxu0 0
      %898 = vmatpush1.bf16.msra.mxu0 0
      %899 = vmatprep.subr.bf16.mxu0 0
      %900 = vmatpush1.bf16.msra.mxu0 0
      %901 = vmatprep.subr.bf16.mxu0 0
      %902 = vmatpush1.bf16.msra.mxu0 0
      %903 = vmatprep.subr.bf16.mxu0 0
      %904 = vmatpush1.bf16.msra.mxu0 0
      %905 = vmatprep.subr.bf16.mxu0 0
      %906 = vmatpush1.bf16.msra.mxu0 0
      %907 = vmatprep.subr.bf16.mxu0 0
      %908 = vmatpush1.bf16.msra.mxu0 0
      %909 = vmatprep.mubr.bf16.mxu0 0
      %910 = vmatmul.mubr.bf16.gmra.mrb[0].mxu0 %v643
      %v911 = vpop.f32.mrb[0].mxu0
      %v912 = vadd.f32 0.0, %v911
      %v913 = vpop.f32.mrb[0].mxu0
      %v914 = vadd.f32 0.0, %v913
      %v915 = vpop.f32.mrb[0].mxu0
      %v916 = vpop.f32.mrb[0].mxu0
      %917 = vdwg.mxu0
      %v922 = vcombine.low %v871, %v873
      %v923 = vcombine.low %v912, %v914
      %v925 = vunpack.c.l.s4 1983009808
      %v926 = vunpack.c.0.s8 %v925
      %v927 = vlaneseq
      %v928 = vshrl.u32 %v927, 7
      %v929 = vsub.s32 %v926, %v928
      %v930 = vrot.slane %v922, %v929
      %v932 = vunpack.c.l.s4 1983009808
      %v933 = vunpack.c.0.s8 %v932
      %v934 = vlaneseq
      %v935 = vshrl.u32 %v934, 7
      %v936 = vsub.s32 %v933, %v935
      %v937 = vrot.slane %v923, %v936
      %v938 = vcombine.low %v930, %v937
      %v940 = vadd.f32 %v642, %v938
      %s941 = ssub.s32 31, %s638
      %s942 = smul.u32 %s941, 4
      %s943 = smul.addr %s942, 2
      %s944 = scalar_lea.vmem [#allocation3], %s943
      %v945 = vld [vmem:[%s944] sm:$0xff]
      %v946 = vpack.c.bf16 %v636, %v636
      %v947 = vld [vmem:[%s6] sm:$0xff]
      %v948 = vld [vmem:[%s6 + $0x8] sm:$0xff]
      %v949 = vld [vmem:[%s6 + $0x10] sm:$0xff]
      %v950 = vld [vmem:[%s6 + $0x18] sm:$0xff]
      %v951 = vld [vmem:[%s6 + $0x20] sm:$0xff]
      %v952 = vld [vmem:[%s6 + $0x28] sm:$0xff]
      %v953 = vld [vmem:[%s6 + $0x30] sm:$0xff]
      %v954 = vld [vmem:[%s6 + $0x38] sm:$0xff]
      %v955 = vld [vmem:[%s6 + $0x40] sm:$0xff]
      %v956 = vld [vmem:[%s6 + $0x48] sm:$0xff]
      %v957 = vld [vmem:[%s6 + $0x50] sm:$0xff]
      %v958 = vld [vmem:[%s6 + $0x58] sm:$0xff]
      %v959 = vld [vmem:[%s6 + $0x60] sm:$0xff]
      %v960 = vld [vmem:[%s6 + $0x68] sm:$0xff]
      %v961 = vld [vmem:[%s6 + $0x70] sm:$0xff]
      %v962 = vld [vmem:[%s6 + $0x78] sm:$0xff]
      %v963 = vld [vmem:[%s6 + $0x80] sm:$0xff]
      %v964 = vld [vmem:[%s6 + $0x88] sm:$0xff]
      %v965 = vld [vmem:[%s6 + $0x90] sm:$0xff]
      %v966 = vld [vmem:[%s6 + $0x98] sm:$0xff]
      %v967 = vld [vmem:[%s6 + $0xa0] sm:$0xff]
      %v968 = vld [vmem:[%s6 + $0xa8] sm:$0xff]
      %v969 = vld [vmem:[%s6 + $0xb0] sm:$0xff]
      %v970 = vld [vmem:[%s6 + $0xb8] sm:$0xff]
      %v971 = vld [vmem:[%s6 + $0xc0] sm:$0xff]
      %v972 = vld [vmem:[%s6 + $0xc8] sm:$0xff]
      %v973 = vld [vmem:[%s6 + $0xd0] sm:$0xff]
      %v974 = vld [vmem:[%s6 + $0xd8] sm:$0xff]
      %v975 = vld [vmem:[%s6 + $0xe0] sm:$0xff]
      %v976 = vld [vmem:[%s6 + $0xe8] sm:$0xff]
      %v977 = vld [vmem:[%s6 + $0xf0] sm:$0xff]
      %v978 = vld [vmem:[%s6 + $0xf8] sm:$0xff]
      %v1011 = vunpack.c.l.b16 %v947
      %v1012 = vunpack.c.h.b16 %v947
      %v1013 = vunpack.c.l.b16 %v948
      %v1014 = vunpack.c.h.b16 %v948
      %v1015 = vunpack.c.l.b16 %v949
      %v1016 = vunpack.c.h.b16 %v949
      %v1017 = vunpack.c.l.b16 %v950
      %v1018 = vunpack.c.h.b16 %v950
      %v1019 = vunpack.c.l.b16 %v951
      %v1020 = vunpack.c.h.b16 %v951
      %v1021 = vunpack.c.l.b16 %v952
      %v1022 = vunpack.c.h.b16 %v952
      %v1023 = vunpack.c.l.b16 %v953
      %v1024 = vunpack.c.h.b16 %v953
      %v1025 = vunpack.c.l.b16 %v954
      %v1026 = vunpack.c.h.b16 %v954
      %v1027 = vunpack.c.l.b16 %v955
      %v1028 = vunpack.c.h.b16 %v955
      %v1029 = vunpack.c.l.b16 %v956
      %v1030 = vunpack.c.h.b16 %v956
      %v1031 = vunpack.c.l.b16 %v957
      %v1032 = vunpack.c.h.b16 %v957
      %v1033 = vunpack.c.l.b16 %v958
      %v1034 = vunpack.c.h.b16 %v958
      %v1035 = vunpack.c.l.b16 %v959
      %v1036 = vunpack.c.h.b16 %v959
      %v1037 = vunpack.c.l.b16 %v960
      %v1038 = vunpack.c.h.b16 %v960
      %v1039 = vunpack.c.l.b16 %v961
      %v1040 = vunpack.c.h.b16 %v961
      %v1041 = vunpack.c.l.b16 %v962
      %v1042 = vunpack.c.h.b16 %v962
      %v1043 = vunpack.c.l.b16 %v963
      %v1044 = vunpack.c.h.b16 %v963
      %v1045 = vunpack.c.l.b16 %v964
      %v1046 = vunpack.c.h.b16 %v964
      %v1047 = vunpack.c.l.b16 %v965
      %v1048 = vunpack.c.h.b16 %v965
      %v1049 = vunpack.c.l.b16 %v966
      %v1050 = vunpack.c.h.b16 %v966
      %v1051 = vunpack.c.l.b16 %v967
      %v1052 = vunpack.c.h.b16 %v967
      %v1053 = vunpack.c.l.b16 %v968
      %v1054 = vunpack.c.h.b16 %v968
      %v1055 = vunpack.c.l.b16 %v969
      %v1056 = vunpack.c.h.b16 %v969
      %v1057 = vunpack.c.l.b16 %v970
      %v1058 = vunpack.c.h.b16 %v970
      %v1059 = vunpack.c.l.b16 %v971
      %v1060 = vunpack.c.h.b16 %v971
      %v1061 = vunpack.c.l.b16 %v972
      %v1062 = vunpack.c.h.b16 %v972
      %v1063 = vunpack.c.l.b16 %v973
      %v1064 = vunpack.c.h.b16 %v973
      %v1065 = vunpack.c.l.b16 %v974
      %v1066 = vunpack.c.h.b16 %v974
      %v1067 = vunpack.c.l.b16 %v975
      %v1068 = vunpack.c.h.b16 %v975
      %v1069 = vunpack.c.l.b16 %v976
      %v1070 = vunpack.c.h.b16 %v976
      %v1071 = vunpack.c.l.b16 %v977
      %v1072 = vunpack.c.h.b16 %v977
      %v1073 = vunpack.c.l.b16 %v978
      %v1074 = vunpack.c.h.b16 %v978
      %v1075 = vpack.c.b16 %v1015, %v1011
      %v1076 = vpack.c.b16 %v1016, %v1012
      %v1077 = vpack.c.b16 %v1017, %v1013
      %v1078 = vpack.c.b16 %v1018, %v1014
      %v1079 = vpack.c.b16 %v1023, %v1019
      %v1080 = vpack.c.b16 %v1024, %v1020
      %v1081 = vpack.c.b16 %v1025, %v1021
      %v1082 = vpack.c.b16 %v1026, %v1022
      %v1083 = vpack.c.b16 %v1031, %v1027
      %v1084 = vpack.c.b16 %v1032, %v1028
      %v1085 = vpack.c.b16 %v1033, %v1029
      %v1086 = vpack.c.b16 %v1034, %v1030
      %v1087 = vpack.c.b16 %v1039, %v1035
      %v1088 = vpack.c.b16 %v1040, %v1036
      %v1089 = vpack.c.b16 %v1041, %v1037
      %v1090 = vpack.c.b16 %v1042, %v1038
      %v1091 = vpack.c.b16 %v1047, %v1043
      %v1092 = vpack.c.b16 %v1048, %v1044
      %v1093 = vpack.c.b16 %v1049, %v1045
      %v1094 = vpack.c.b16 %v1050, %v1046
      %v1095 = vpack.c.b16 %v1055, %v1051
      %v1096 = vpack.c.b16 %v1056, %v1052
      %v1097 = vpack.c.b16 %v1057, %v1053
      %v1098 = vpack.c.b16 %v1058, %v1054
      %v1099 = vpack.c.b16 %v1063, %v1059
      %v1100 = vpack.c.b16 %v1064, %v1060
      %v1101 = vpack.c.b16 %v1065, %v1061
      %v1102 = vpack.c.b16 %v1066, %v1062
      %v1103 = vpack.c.b16 %v1071, %v1067
      %v1104 = vpack.c.b16 %v1072, %v1068
      %v1105 = vpack.c.b16 %v1073, %v1069
      %v1106 = vpack.c.b16 %v1074, %v1070
      %1139 = vmatprep.subr.bf16.mxu0 %v1076
      %1140 = vmatpush1.bf16.msra.mxu0 %v1075
      %1141 = vmatprep.subr.bf16.mxu0 %v1080
      %1142 = vmatpush1.bf16.msra.mxu0 %v1079
      %1143 = vmatprep.subr.bf16.mxu0 %v1084
      %1144 = vmatpush1.bf16.msra.mxu0 %v1083
      %1145 = vmatprep.subr.bf16.mxu0 %v1088
      %1146 = vmatpush1.bf16.msra.mxu0 %v1087
      %1147 = vmatprep.subr.bf16.mxu0 %v1092
      %1148 = vmatpush1.bf16.msra.mxu0 %v1091
      %1149 = vmatprep.subr.bf16.mxu0 %v1096
      %1150 = vmatpush1.bf16.msra.mxu0 %v1095
      %1151 = vmatprep.subr.bf16.mxu0 %v1100
      %1152 = vmatpush1.bf16.msra.mxu0 %v1099
      %1153 = vmatprep.subr.bf16.mxu0 %v1104
      %1154 = vmatpush1.bf16.msra.mxu0 %v1103
      %1155 = vmatprep.subr.bf16.mxu0 0
      %1156 = vmatpush1.bf16.msra.mxu0 0
      %1157 = vmatprep.subr.bf16.mxu0 0
      %1158 = vmatpush1.bf16.msra.mxu0 0
      %1159 = vmatprep.subr.bf16.mxu0 0
      %1160 = vmatpush1.bf16.msra.mxu0 0
      %1161 = vmatprep.subr.bf16.mxu0 0
      %1162 = vmatpush1.bf16.msra.mxu0 0
      %1163 = vmatprep.subr.bf16.mxu0 0
      %1164 = vmatpush1.bf16.msra.mxu0 0
      %1165 = vmatprep.subr.bf16.mxu0 0
      %1166 = vmatpush1.bf16.msra.mxu0 0
      %1167 = vmatprep.subr.bf16.mxu0 0
      %1168 = vmatpush1.bf16.msra.mxu0 0
      %1169 = vmatprep.subr.bf16.mxu0 0
      %1170 = vmatpush1.bf16.msra.mxu0 0
      %1171 = vmatprep.mubr.bf16.mxu0 0
      %1172 = vmatmul.mubr.bf16.gmra.mrb[0].mxu0 %v946
      %v1173 = vpop.f32.mrb[0].mxu0
      %v1174 = vadd.f32 0.0, %v1173
      %v1175 = vpop.f32.mrb[0].mxu0
      %v1176 = vadd.f32 0.0, %v1175
      %v1177 = vpop.f32.mrb[0].mxu0
      %v1178 = vpop.f32.mrb[0].mxu0
      %1179 = vdwg.mxu0
      %1180 = vmatprep.subr.bf16.mxu0 %v1078
      %1181 = vmatpush1.bf16.msra.mxu0 %v1077
      %1182 = vmatprep.subr.bf16.mxu0 %v1082
      %1183 = vmatpush1.bf16.msra.mxu0 %v1081
      %1184 = vmatprep.subr.bf16.mxu0 %v1086
      %1185 = vmatpush1.bf16.msra.mxu0 %v1085
      %1186 = vmatprep.subr.bf16.mxu0 %v1090
      %1187 = vmatpush1.bf16.msra.mxu0 %v1089
      %1188 = vmatprep.subr.bf16.mxu0 %v1094
      %1189 = vmatpush1.bf16.msra.mxu0 %v1093
      %1190 = vmatprep.subr.bf16.mxu0 %v1098
      %1191 = vmatpush1.bf16.msra.mxu0 %v1097
      %1192 = vmatprep.subr.bf16.mxu0 %v1102
      %1193 = vmatpush1.bf16.msra.mxu0 %v1101
      %1194 = vmatprep.subr.bf16.mxu0 %v1106
      %1195 = vmatpush1.bf16.msra.mxu0 %v1105
      %1196 = vmatprep.subr.bf16.mxu0 0
      %1197 = vmatpush1.bf16.msra.mxu0 0
      %1198 = vmatprep.subr.bf16.mxu0 0
      %1199 = vmatpush1.bf16.msra.mxu0 0
      %1200 = vmatprep.subr.bf16.mxu0 0
      %1201 = vmatpush1.bf16.msra.mxu0 0
      %1202 = vmatprep.subr.bf16.mxu0 0
      %1203 = vmatpush1.bf16.msra.mxu0 0
      %1204 = vmatprep.subr.bf16.mxu0 0
      %1205 = vmatpush1.bf16.msra.mxu0 0
      %1206 = vmatprep.subr.bf16.mxu0 0
      %1207 = vmatpush1.bf16.msra.mxu0 0
      %1208 = vmatprep.subr.bf16.mxu0 0
      %1209 = vmatpush1.bf16.msra.mxu0 0
      %1210 = vmatprep.subr.bf16.mxu0 0
      %1211 = vmatpush1.bf16.msra.mxu0 0
      %1212 = vmatprep.mubr.bf16.mxu0 0
      %1213 = vmatmul.mubr.bf16.gmra.mrb[0].mxu0 %v946
      %v1214 = vpop.f32.mrb[0].mxu0
      %v1215 = vadd.f32 0.0, %v1214
      %v1216 = vpop.f32.mrb[0].mxu0
      %v1217 = vadd.f32 0.0, %v1216
      %v1218 = vpop.f32.mrb[0].mxu0
      %v1219 = vpop.f32.mrb[0].mxu0
      %1220 = vdwg.mxu0
      %v1225 = vcombine.low %v1174, %v1176
      %v1226 = vcombine.low %v1215, %v1217
      %v1228 = vunpack.c.l.s4 1983009808
      %v1229 = vunpack.c.0.s8 %v1228
      %v1230 = vlaneseq
      %v1231 = vshrl.u32 %v1230, 7
      %v1232 = vsub.s32 %v1229, %v1231
      %v1233 = vrot.slane %v1225, %v1232
      %v1235 = vunpack.c.l.s4 1983009808
      %v1236 = vunpack.c.0.s8 %v1235
      %v1237 = vlaneseq
      %v1238 = vshrl.u32 %v1237, 7
      %v1239 = vsub.s32 %v1236, %v1238
      %v1240 = vrot.slane %v1226, %v1239
      %v1241 = vcombine.low %v1233, %v1240
      %v1243 = vadd.f32 %v945, %v1241
      %v1244 = vxor.u32 %v940, 2147483648
      %v1245 = vmul.f32 %v1244, 1.442695
      %v1246 = vpow.pop %v1245
      %v1247 = vadd.f32 %v1246, 1.0
      %v1248 = vrcp.pop %v1247
      %v1249 = vmul.f32 1.0, %v1248
      %v1251 = vrot.slane %v940, 2
      %v1253 = vxor.u32 %v1251, 2147483648
      %v1254 = vmul.f32 %v1253, 1.442695
      %v1255 = vpow.pop %v1254
      %v1256 = vadd.f32 %v1255, 1.0
      %v1257 = vrcp.pop %v1256
      %v1258 = vmul.f32 1.0, %v1257
      %v1259 = vrot.slane %v940, 4
      %v1261 = vtanh.pop %v1259
      %v1262 = vrot.slane %v940, 6
      %v1264 = vxor.u32 %v1262, 2147483648
      %v1265 = vmul.f32 %v1264, 1.442695
      %v1266 = vpow.pop %v1265
      %v1267 = vadd.f32 %v1266, 1.0
      %v1268 = vrcp.pop %v1267
      %v1269 = vmul.f32 1.0, %v1268
      %v1270 = vmul.f32 %v1258, %v635
      %v1271 = vmul.f32 %v1249, %v1261
      %v1272 = vadd.f32 %v1270, %v1271
      %v1273 = vtanh.pop %v1272
      %v1274 = vmul.f32 %v1269, %v1273
      %v1275 = vxor.u32 %v1243, 2147483648
      %v1276 = vmul.f32 %v1275, 1.442695
      %v1277 = vpow.pop %v1276
      %v1278 = vadd.f32 %v1277, 1.0
      %v1279 = vrcp.pop %v1278
      %v1280 = vmul.f32 1.0, %v1279
      %v1282 = vrot.slane %v1243, 2
      %v1284 = vxor.u32 %v1282, 2147483648
      %v1285 = vmul.f32 %v1284, 1.442695
      %v1286 = vpow.pop %v1285
      %v1287 = vadd.f32 %v1286, 1.0
      %v1288 = vrcp.pop %v1287
      %v1289 = vmul.f32 1.0, %v1288
      %v1290 = vrot.slane %v1243, 4
      %v1292 = vtanh.pop %v1290
      %v1293 = vrot.slane %v1243, 6
      %v1295 = vxor.u32 %v1293, 2147483648
      %v1296 = vmul.f32 %v1295, 1.442695
      %v1297 = vpow.pop %v1296
      %v1298 = vadd.f32 %v1297, 1.0
      %v1299 = vrcp.pop %v1298
      %v1300 = vmul.f32 1.0, %v1299
      %v1301 = vmul.f32 %v1289, %v637
      %v1302 = vmul.f32 %v1280, %v1292
      %v1303 = vadd.f32 %v1301, %v1302
      %v1304 = vtanh.pop %v1303
      %v1305 = vmul.f32 %v1300, %v1304
      %s1306 = smul.u32 %s638, 2
      %s1307 = scalar_lea.vmem [#allocation4], %s1306
      %1308 = vst [vmem:[%s1307] sm:$0x3] %v1274
      %s1309 = smul.u32 %s941, 2
      %s1310 = scalar_lea.vmem [#allocation5], %s1309
      %1311 = vst [vmem:[%s1310] sm:$0x3] %v1305
      %s1312 = sadd.s32 %s638, 1
      %s1313 = smul.u32 %s1312, 4
      %s1314 = smul.addr %s1313, 2
      %s1315 = scalar_lea.vmem [#allocation2], %s1314
      %v1316 = vld [vmem:[%s1315] sm:$0xff]
      %v1317 = vpack.c.bf16 %v1274, %v1274
      %v1318 = vld [vmem:[%s5] sm:$0xff]
      %v1319 = vld [vmem:[%s5 + $0x8] sm:$0xff]
      %v1320 = vld [vmem:[%s5 + $0x10] sm:$0xff]
      %v1321 = vld [vmem:[%s5 + $0x18] sm:$0xff]
      %v1322 = vld [vmem:[%s5 + $0x20] sm:$0xff]
      %v1323 = vld [vmem:[%s5 + $0x28] sm:$0xff]
      %v1324 = vld [vmem:[%s5 + $0x30] sm:$0xff]
      %v1325 = vld [vmem:[%s5 + $0x38] sm:$0xff]
      %v1326 = vld [vmem:[%s5 + $0x40] sm:$0xff]
      %v1327 = vld [vmem:[%s5 + $0x48] sm:$0xff]
      %v1328 = vld [vmem:[%s5 + $0x50] sm:$0xff]
      %v1329 = vld [vmem:[%s5 + $0x58] sm:$0xff]
      %v1330 = vld [vmem:[%s5 + $0x60] sm:$0xff]
      %v1331 = vld [vmem:[%s5 + $0x68] sm:$0xff]
      %v1332 = vld [vmem:[%s5 + $0x70] sm:$0xff]
      %v1333 = vld [vmem:[%s5 + $0x78] sm:$0xff]
      %v1334 = vld [vmem:[%s5 + $0x80] sm:$0xff]
      %v1335 = vld [vmem:[%s5 + $0x88] sm:$0xff]
      %v1336 = vld [vmem:[%s5 + $0x90] sm:$0xff]
      %v1337 = vld [vmem:[%s5 + $0x98] sm:$0xff]
      %v1338 = vld [vmem:[%s5 + $0xa0] sm:$0xff]
      %v1339 = vld [vmem:[%s5 + $0xa8] sm:$0xff]
      %v1340 = vld [vmem:[%s5 + $0xb0] sm:$0xff]
      %v1341 = vld [vmem:[%s5 + $0xb8] sm:$0xff]
      %v1342 = vld [vmem:[%s5 + $0xc0] sm:$0xff]
      %v1343 = vld [vmem:[%s5 + $0xc8] sm:$0xff]
      %v1344 = vld [vmem:[%s5 + $0xd0] sm:$0xff]
      %v1345 = vld [vmem:[%s5 + $0xd8] sm:$0xff]
      %v1346 = vld [vmem:[%s5 + $0xe0] sm:$0xff]
      %v1347 = vld [vmem:[%s5 + $0xe8] sm:$0xff]
      %v1348 = vld [vmem:[%s5 + $0xf0] sm:$0xff]
      %v1349 = vld [vmem:[%s5 + $0xf8] sm:$0xff]
      %v1382 = vunpack.c.l.b16 %v1318
      %v1383 = vunpack.c.h.b16 %v1318
      %v1384 = vunpack.c.l.b16 %v1319
      %v1385 = vunpack.c.h.b16 %v1319
      %v1386 = vunpack.c.l.b16 %v1320
      %v1387 = vunpack.c.h.b16 %v1320
      %v1388 = vunpack.c.l.b16 %v1321
      %v1389 = vunpack.c.h.b16 %v1321
      %v1390 = vunpack.c.l.b16 %v1322
      %v1391 = vunpack.c.h.b16 %v1322
      %v1392 = vunpack.c.l.b16 %v1323
      %v1393 = vunpack.c.h.b16 %v1323
      %v1394 = vunpack.c.l.b16 %v1324
      %v1395 = vunpack.c.h.b16 %v1324
      %v1396 = vunpack.c.l.b16 %v1325
      %v1397 = vunpack.c.h.b16 %v1325
      %v1398 = vunpack.c.l.b16 %v1326
      %v1399 = vunpack.c.h.b16 %v1326
      %v1400 = vunpack.c.l.b16 %v1327
      %v1401 = vunpack.c.h.b16 %v1327
      %v1402 = vunpack.c.l.b16 %v1328
      %v1403 = vunpack.c.h.b16 %v1328
      %v1404 = vunpack.c.l.b16 %v1329
      %v1405 = vunpack.c.h.b16 %v1329
      %v1406 = vunpack.c.l.b16 %v1330
      %v1407 = vunpack.c.h.b16 %v1330
      %v1408 = vunpack.c.l.b16 %v1331
      %v1409 = vunpack.c.h.b16 %v1331
      %v1410 = vunpack.c.l.b16 %v1332
      %v1411 = vunpack.c.h.b16 %v1332
      %v1412 = vunpack.c.l.b16 %v1333
      %v1413 = vunpack.c.h.b16 %v1333
      %v1414 = vunpack.c.l.b16 %v1334
      %v1415 = vunpack.c.h.b16 %v1334
      %v1416 = vunpack.c.l.b16 %v1335
      %v1417 = vunpack.c.h.b16 %v1335
      %v1418 = vunpack.c.l.b16 %v1336
      %v1419 = vunpack.c.h.b16 %v1336
      %v1420 = vunpack.c.l.b16 %v1337
      %v1421 = vunpack.c.h.b16 %v1337
      %v1422 = vunpack.c.l.b16 %v1338
      %v1423 = vunpack.c.h.b16 %v1338
      %v1424 = vunpack.c.l.b16 %v1339
      %v1425 = vunpack.c.h.b16 %v1339
      %v1426 = vunpack.c.l.b16 %v1340
      %v1427 = vunpack.c.h.b16 %v1340
      %v1428 = vunpack.c.l.b16 %v1341
      %v1429 = vunpack.c.h.b16 %v1341
      %v1430 = vunpack.c.l.b16 %v1342
      %v1431 = vunpack.c.h.b16 %v1342
      %v1432 = vunpack.c.l.b16 %v1343
      %v1433 = vunpack.c.h.b16 %v1343
      %v1434 = vunpack.c.l.b16 %v1344
      %v1435 = vunpack.c.h.b16 %v1344
      %v1436 = vunpack.c.l.b16 %v1345
      %v1437 = vunpack.c.h.b16 %v1345
      %v1438 = vunpack.c.l.b16 %v1346
      %v1439 = vunpack.c.h.b16 %v1346
      %v1440 = vunpack.c.l.b16 %v1347
      %v1441 = vunpack.c.h.b16 %v1347
      %v1442 = vunpack.c.l.b16 %v1348
      %v1443 = vunpack.c.h.b16 %v1348
      %v1444 = vunpack.c.l.b16 %v1349
      %v1445 = vunpack.c.h.b16 %v1349
      %v1446 = vpack.c.b16 %v1386, %v1382
      %v1447 = vpack.c.b16 %v1387, %v1383
      %v1448 = vpack.c.b16 %v1388, %v1384
      %v1449 = vpack.c.b16 %v1389, %v1385
      %v1450 = vpack.c.b16 %v1394, %v1390
      %v1451 = vpack.c.b16 %v1395, %v1391
      %v1452 = vpack.c.b16 %v1396, %v1392
      %v1453 = vpack.c.b16 %v1397, %v1393
      %v1454 = vpack.c.b16 %v1402, %v1398
      %v1455 = vpack.c.b16 %v1403, %v1399
      %v1456 = vpack.c.b16 %v1404, %v1400
      %v1457 = vpack.c.b16 %v1405, %v1401
      %v1458 = vpack.c.b16 %v1410, %v1406
      %v1459 = vpack.c.b16 %v1411, %v1407
      %v1460 = vpack.c.b16 %v1412, %v1408
      %v1461 = vpack.c.b16 %v1413, %v1409
      %v1462 = vpack.c.b16 %v1418, %v1414
      %v1463 = vpack.c.b16 %v1419, %v1415
      %v1464 = vpack.c.b16 %v1420, %v1416
      %v1465 = vpack.c.b16 %v1421, %v1417
      %v1466 = vpack.c.b16 %v1426, %v1422
      %v1467 = vpack.c.b16 %v1427, %v1423
      %v1468 = vpack.c.b16 %v1428, %v1424
      %v1469 = vpack.c.b16 %v1429, %v1425
      %v1470 = vpack.c.b16 %v1434, %v1430
      %v1471 = vpack.c.b16 %v1435, %v1431
      %v1472 = vpack.c.b16 %v1436, %v1432
      %v1473 = vpack.c.b16 %v1437, %v1433
      %v1474 = vpack.c.b16 %v1442, %v1438
      %v1475 = vpack.c.b16 %v1443, %v1439
      %v1476 = vpack.c.b16 %v1444, %v1440
      %v1477 = vpack.c.b16 %v1445, %v1441
      %1510 = vmatprep.subr.bf16.mxu0 %v1447
      %1511 = vmatpush1.bf16.msra.mxu0 %v1446
      %1512 = vmatprep.subr.bf16.mxu0 %v1451
      %1513 = vmatpush1.bf16.msra.mxu0 %v1450
      %1514 = vmatprep.subr.bf16.mxu0 %v1455
      %1515 = vmatpush1.bf16.msra.mxu0 %v1454
      %1516 = vmatprep.subr.bf16.mxu0 %v1459
      %1517 = vmatpush1.bf16.msra.mxu0 %v1458
      %1518 = vmatprep.subr.bf16.mxu0 %v1463
      %1519 = vmatpush1.bf16.msra.mxu0 %v1462
      %1520 = vmatprep.subr.bf16.mxu0 %v1467
      %1521 = vmatpush1.bf16.msra.mxu0 %v1466
      %1522 = vmatprep.subr.bf16.mxu0 %v1471
      %1523 = vmatpush1.bf16.msra.mxu0 %v1470
      %1524 = vmatprep.subr.bf16.mxu0 %v1475
      %1525 = vmatpush1.bf16.msra.mxu0 %v1474
      %1526 = vmatprep.subr.bf16.mxu0 0
      %1527 = vmatpush1.bf16.msra.mxu0 0
      %1528 = vmatprep.subr.bf16.mxu0 0
      %1529 = vmatpush1.bf16.msra.mxu0 0
      %1530 = vmatprep.subr.bf16.mxu0 0
      %1531 = vmatpush1.bf16.msra.mxu0 0
      %1532 = vmatprep.subr.bf16.mxu0 0
      %1533 = vmatpush1.bf16.msra.mxu0 0
      %1534 = vmatprep.subr.bf16.mxu0 0
      %1535 = vmatpush1.bf16.msra.mxu0 0
      %1536 = vmatprep.subr.bf16.mxu0 0
      %1537 = vmatpush1.bf16.msra.mxu0 0
      %1538 = vmatprep.subr.bf16.mxu0 0
      %1539 = vmatpush1.bf16.msra.mxu0 0
      %1540 = vmatprep.subr.bf16.mxu0 0
      %1541 = vmatpush1.bf16.msra.mxu0 0
      %1542 = vmatprep.mubr.bf16.mxu0 0
      %1543 = vmatmul.mubr.bf16.gmra.mrb[0].mxu0 %v1317
      %v1544 = vpop.f32.mrb[0].mxu0
      %v1545 = vadd.f32 0.0, %v1544
      %v1546 = vpop.f32.mrb[0].mxu0
      %v1547 = vadd.f32 0.0, %v1546
      %v1548 = vpop.f32.mrb[0].mxu0
      %v1549 = vpop.f32.mrb[0].mxu0
      %1550 = vdwg.mxu0
      %1551 = vmatprep.subr.bf16.mxu0 %v1449
      %1552 = vmatpush1.bf16.msra.mxu0 %v1448
      %1553 = vmatprep.subr.bf16.mxu0 %v1453
      %1554 = vmatpush1.bf16.msra.mxu0 %v1452
      %1555 = vmatprep.subr.bf16.mxu0 %v1457
      %1556 = vmatpush1.bf16.msra.mxu0 %v1456
      %1557 = vmatprep.subr.bf16.mxu0 %v1461
      %1558 = vmatpush1.bf16.msra.mxu0 %v1460
      %1559 = vmatprep.subr.bf16.mxu0 %v1465
      %1560 = vmatpush1.bf16.msra.mxu0 %v1464
      %1561 = vmatprep.subr.bf16.mxu0 %v1469
      %1562 = vmatpush1.bf16.msra.mxu0 %v1468
      %1563 = vmatprep.subr.bf16.mxu0 %v1473
      %1564 = vmatpush1.bf16.msra.mxu0 %v1472
      %1565 = vmatprep.subr.bf16.mxu0 %v1477
      %1566 = vmatpush1.bf16.msra.mxu0 %v1476
      %1567 = vmatprep.subr.bf16.mxu0 0
      %1568 = vmatpush1.bf16.msra.mxu0 0
      %1569 = vmatprep.subr.bf16.mxu0 0
      %1570 = vmatpush1.bf16.msra.mxu0 0
      %1571 = vmatprep.subr.bf16.mxu0 0
      %1572 = vmatpush1.bf16.msra.mxu0 0
      %1573 = vmatprep.subr.bf16.mxu0 0
      %1574 = vmatpush1.bf16.msra.mxu0 0
      %1575 = vmatprep.subr.bf16.mxu0 0
      %1576 = vmatpush1.bf16.msra.mxu0 0
      %1577 = vmatprep.subr.bf16.mxu0 0
      %1578 = vmatpush1.bf16.msra.mxu0 0
      %1579 = vmatprep.subr.bf16.mxu0 0
      %1580 = vmatpush1.bf16.msra.mxu0 0
      %1581 = vmatprep.subr.bf16.mxu0 0
      %1582 = vmatpush1.bf16.msra.mxu0 0
      %1583 = vmatprep.mubr.bf16.mxu0 0
      %1584 = vmatmul.mubr.bf16.gmra.mrb[0].mxu0 %v1317
      %v1585 = vpop.f32.mrb[0].mxu0
      %v1586 = vadd.f32 0.0, %v1585
      %v1587 = vpop.f32.mrb[0].mxu0
      %v1588 = vadd.f32 0.0, %v1587
      %v1589 = vpop.f32.mrb[0].mxu0
      %v1590 = vpop.f32.mrb[0].mxu0
      %1591 = vdwg.mxu0
      %v1596 = vcombine.low %v1545, %v1547
      %v1597 = vcombine.low %v1586, %v1588
      %v1599 = vunpack.c.l.s4 1983009808
      %v1600 = vunpack.c.0.s8 %v1599
      %v1601 = vlaneseq
      %v1602 = vshrl.u32 %v1601, 7
      %v1603 = vsub.s32 %v1600, %v1602
      %v1604 = vrot.slane %v1596, %v1603
      %v1606 = vunpack.c.l.s4 1983009808
      %v1607 = vunpack.c.0.s8 %v1606
      %v1608 = vlaneseq
      %v1609 = vshrl.u32 %v1608, 7
      %v1610 = vsub.s32 %v1607, %v1609
      %v1611 = vrot.slane %v1597, %v1610
      %v1612 = vcombine.low %v1604, %v1611
      %v1614 = vadd.f32 %v1316, %v1612
      %s1615 = ssub.s32 30, %s638
      %s1616 = smul.u32 %s1615, 4
      %s1617 = smul.addr %s1616, 2
      %s1618 = scalar_lea.vmem [#allocation3], %s1617
      %v1619 = vld [vmem:[%s1618] sm:$0xff]
      %v1620 = vpack.c.bf16 %v1305, %v1305
      %v1621 = vld [vmem:[%s6] sm:$0xff]
      %v1622 = vld [vmem:[%s6 + $0x8] sm:$0xff]
      %v1623 = vld [vmem:[%s6 + $0x10] sm:$0xff]
      %v1624 = vld [vmem:[%s6 + $0x18] sm:$0xff]
      %v1625 = vld [vmem:[%s6 + $0x20] sm:$0xff]
      %v1626 = vld [vmem:[%s6 + $0x28] sm:$0xff]
      %v1627 = vld [vmem:[%s6 + $0x30] sm:$0xff]
      %v1628 = vld [vmem:[%s6 + $0x38] sm:$0xff]
      %v1629 = vld [vmem:[%s6 + $0x40] sm:$0xff]
      %v1630 = vld [vmem:[%s6 + $0x48] sm:$0xff]
      %v1631 = vld [vmem:[%s6 + $0x50] sm:$0xff]
      %v1632 = vld [vmem:[%s6 + $0x58] sm:$0xff]
      %v1633 = vld [vmem:[%s6 + $0x60] sm:$0xff]
      %v1634 = vld [vmem:[%s6 + $0x68] sm:$0xff]
      %v1635 = vld [vmem:[%s6 + $0x70] sm:$0xff]
      %v1636 = vld [vmem:[%s6 + $0x78] sm:$0xff]
      %v1637 = vld [vmem:[%s6 + $0x80] sm:$0xff]
      %v1638 = vld [vmem:[%s6 + $0x88] sm:$0xff]
      %v1639 = vld [vmem:[%s6 + $0x90] sm:$0xff]
      %v1640 = vld [vmem:[%s6 + $0x98] sm:$0xff]
      %v1641 = vld [vmem:[%s6 + $0xa0] sm:$0xff]
      %v1642 = vld [vmem:[%s6 + $0xa8] sm:$0xff]
      %v1643 = vld [vmem:[%s6 + $0xb0] sm:$0xff]
      %v1644 = vld [vmem:[%s6 + $0xb8] sm:$0xff]
      %v1645 = vld [vmem:[%s6 + $0xc0] sm:$0xff]
      %v1646 = vld [vmem:[%s6 + $0xc8] sm:$0xff]
      %v1647 = vld [vmem:[%s6 + $0xd0] sm:$0xff]
      %v1648 = vld [vmem:[%s6 + $0xd8] sm:$0xff]
      %v1649 = vld [vmem:[%s6 + $0xe0] sm:$0xff]
      %v1650 = vld [vmem:[%s6 + $0xe8] sm:$0xff]
      %v1651 = vld [vmem:[%s6 + $0xf0] sm:$0xff]
      %v1652 = vld [vmem:[%s6 + $0xf8] sm:$0xff]
      %v1685 = vunpack.c.l.b16 %v1621
      %v1686 = vunpack.c.h.b16 %v1621
      %v1687 = vunpack.c.l.b16 %v1622
      %v1688 = vunpack.c.h.b16 %v1622
      %v1689 = vunpack.c.l.b16 %v1623
      %v1690 = vunpack.c.h.b16 %v1623
      %v1691 = vunpack.c.l.b16 %v1624
      %v1692 = vunpack.c.h.b16 %v1624
      %v1693 = vunpack.c.l.b16 %v1625
      %v1694 = vunpack.c.h.b16 %v1625
      %v1695 = vunpack.c.l.b16 %v1626
      %v1696 = vunpack.c.h.b16 %v1626
      %v1697 = vunpack.c.l.b16 %v1627
      %v1698 = vunpack.c.h.b16 %v1627
      %v1699 = vunpack.c.l.b16 %v1628
      %v1700 = vunpack.c.h.b16 %v1628
      %v1701 = vunpack.c.l.b16 %v1629
      %v1702 = vunpack.c.h.b16 %v1629
      %v1703 = vunpack.c.l.b16 %v1630
      %v1704 = vunpack.c.h.b16 %v1630
      %v1705 = vunpack.c.l.b16 %v1631
      %v1706 = vunpack.c.h.b16 %v1631
      %v1707 = vunpack.c.l.b16 %v1632
      %v1708 = vunpack.c.h.b16 %v1632
      %v1709 = vunpack.c.l.b16 %v1633
      %v1710 = vunpack.c.h.b16 %v1633
      %v1711 = vunpack.c.l.b16 %v1634
      %v1712 = vunpack.c.h.b16 %v1634
      %v1713 = vunpack.c.l.b16 %v1635
      %v1714 = vunpack.c.h.b16 %v1635
      %v1715 = vunpack.c.l.b16 %v1636
      %v1716 = vunpack.c.h.b16 %v1636
      %v1717 = vunpack.c.l.b16 %v1637
      %v1718 = vunpack.c.h.b16 %v1637
      %v1719 = vunpack.c.l.b16 %v1638
      %v1720 = vunpack.c.h.b16 %v1638
      %v1721 = vunpack.c.l.b16 %v1639
      %v1722 = vunpack.c.h.b16 %v1639
      %v1723 = vunpack.c.l.b16 %v1640
      %v1724 = vunpack.c.h.b16 %v1640
      %v1725 = vunpack.c.l.b16 %v1641
      %v1726 = vunpack.c.h.b16 %v1641
      %v1727 = vunpack.c.l.b16 %v1642
      %v1728 = vunpack.c.h.b16 %v1642
      %v1729 = vunpack.c.l.b16 %v1643
      %v1730 = vunpack.c.h.b16 %v1643
      %v1731 = vunpack.c.l.b16 %v1644
      %v1732 = vunpack.c.h.b16 %v1644
      %v1733 = vunpack.c.l.b16 %v1645
      %v1734 = vunpack.c.h.b16 %v1645
      %v1735 = vunpack.c.l.b16 %v1646
      %v1736 = vunpack.c.h.b16 %v1646
      %v1737 = vunpack.c.l.b16 %v1647
      %v1738 = vunpack.c.h.b16 %v1647
      %v1739 = vunpack.c.l.b16 %v1648
      %v1740 = vunpack.c.h.b16 %v1648
      %v1741 = vunpack.c.l.b16 %v1649
      %v1742 = vunpack.c.h.b16 %v1649
      %v1743 = vunpack.c.l.b16 %v1650
      %v1744 = vunpack.c.h.b16 %v1650
      %v1745 = vunpack.c.l.b16 %v1651
      %v1746 = vunpack.c.h.b16 %v1651
      %v1747 = vunpack.c.l.b16 %v1652
      %v1748 = vunpack.c.h.b16 %v1652
      %v1749 = vpack.c.b16 %v1689, %v1685
      %v1750 = vpack.c.b16 %v1690, %v1686
      %v1751 = vpack.c.b16 %v1691, %v1687
      %v1752 = vpack.c.b16 %v1692, %v1688
      %v1753 = vpack.c.b16 %v1697, %v1693
      %v1754 = vpack.c.b16 %v1698, %v1694
      %v1755 = vpack.c.b16 %v1699, %v1695
      %v1756 = vpack.c.b16 %v1700, %v1696
      %v1757 = vpack.c.b16 %v1705, %v1701
      %v1758 = vpack.c.b16 %v1706, %v1702
      %v1759 = vpack.c.b16 %v1707, %v1703
      %v1760 = vpack.c.b16 %v1708, %v1704
      %v1761 = vpack.c.b16 %v1713, %v1709
      %v1762 = vpack.c.b16 %v1714, %v1710
      %v1763 = vpack.c.b16 %v1715, %v1711
      %v1764 = vpack.c.b16 %v1716, %v1712
      %v1765 = vpack.c.b16 %v1721, %v1717
      %v1766 = vpack.c.b16 %v1722, %v1718
      %v1767 = vpack.c.b16 %v1723, %v1719
      %v1768 = vpack.c.b16 %v1724, %v1720
      %v1769 = vpack.c.b16 %v1729, %v1725
      %v1770 = vpack.c.b16 %v1730, %v1726
      %v1771 = vpack.c.b16 %v1731, %v1727
      %v1772 = vpack.c.b16 %v1732, %v1728
      %v1773 = vpack.c.b16 %v1737, %v1733
      %v1774 = vpack.c.b16 %v1738, %v1734
      %v1775 = vpack.c.b16 %v1739, %v1735
      %v1776 = vpack.c.b16 %v1740, %v1736
      %v1777 = vpack.c.b16 %v1745, %v1741
      %v1778 = vpack.c.b16 %v1746, %v1742
      %v1779 = vpack.c.b16 %v1747, %v1743
      %v1780 = vpack.c.b16 %v1748, %v1744
      %1813 = vmatprep.subr.bf16.mxu0 %v1750
      %1814 = vmatpush1.bf16.msra.mxu0 %v1749
      %1815 = vmatprep.subr.bf16.mxu0 %v1754
      %1816 = vmatpush1.bf16.msra.mxu0 %v1753
      %1817 = vmatprep.subr.bf16.mxu0 %v1758
      %1818 = vmatpush1.bf16.msra.mxu0 %v1757
      %1819 = vmatprep.subr.bf16.mxu0 %v1762
      %1820 = vmatpush1.bf16.msra.mxu0 %v1761
      %1821 = vmatprep.subr.bf16.mxu0 %v1766
      %1822 = vmatpush1.bf16.msra.mxu0 %v1765
      %1823 = vmatprep.subr.bf16.mxu0 %v1770
      %1824 = vmatpush1.bf16.msra.mxu0 %v1769
      %1825 = vmatprep.subr.bf16.mxu0 %v1774
      %1826 = vmatpush1.bf16.msra.mxu0 %v1773
      %1827 = vmatprep.subr.bf16.mxu0 %v1778
      %1828 = vmatpush1.bf16.msra.mxu0 %v1777
      %1829 = vmatprep.subr.bf16.mxu0 0
      %1830 = vmatpush1.bf16.msra.mxu0 0
      %1831 = vmatprep.subr.bf16.mxu0 0
      %1832 = vmatpush1.bf16.msra.mxu0 0
      %1833 = vmatprep.subr.bf16.mxu0 0
      %1834 = vmatpush1.bf16.msra.mxu0 0
      %1835 = vmatprep.subr.bf16.mxu0 0
      %1836 = vmatpush1.bf16.msra.mxu0 0
      %1837 = vmatprep.subr.bf16.mxu0 0
      %1838 = vmatpush1.bf16.msra.mxu0 0
      %1839 = vmatprep.subr.bf16.mxu0 0
      %1840 = vmatpush1.bf16.msra.mxu0 0
      %1841 = vmatprep.subr.bf16.mxu0 0
      %1842 = vmatpush1.bf16.msra.mxu0 0
      %1843 = vmatprep.subr.bf16.mxu0 0
      %1844 = vmatpush1.bf16.msra.mxu0 0
      %1845 = vmatprep.mubr.bf16.mxu0 0
      %1846 = vmatmul.mubr.bf16.gmra.mrb[0].mxu0 %v1620
      %v1847 = vpop.f32.mrb[0].mxu0
      %v1848 = vadd.f32 0.0, %v1847
      %v1849 = vpop.f32.mrb[0].mxu0
      %v1850 = vadd.f32 0.0, %v1849
      %v1851 = vpop.f32.mrb[0].mxu0
      %v1852 = vpop.f32.mrb[0].mxu0
      %1853 = vdwg.mxu0
      %1854 = vmatprep.subr.bf16.mxu0 %v1752
      %1855 = vmatpush1.bf16.msra.mxu0 %v1751
      %1856 = vmatprep.subr.bf16.mxu0 %v1756
      %1857 = vmatpush1.bf16.msra.mxu0 %v1755
      %1858 = vmatprep.subr.bf16.mxu0 %v1760
      %1859 = vmatpush1.bf16.msra.mxu0 %v1759
      %1860 = vmatprep.subr.bf16.mxu0 %v1764
      %1861 = vmatpush1.bf16.msra.mxu0 %v1763
      %1862 = vmatprep.subr.bf16.mxu0 %v1768
      %1863 = vmatpush1.bf16.msra.mxu0 %v1767
      %1864 = vmatprep.subr.bf16.mxu0 %v1772
      %1865 = vmatpush1.bf16.msra.mxu0 %v1771
      %1866 = vmatprep.subr.bf16.mxu0 %v1776
      %1867 = vmatpush1.bf16.msra.mxu0 %v1775
      %1868 = vmatprep.subr.bf16.mxu0 %v1780
      %1869 = vmatpush1.bf16.msra.mxu0 %v1779
      %1870 = vmatprep.subr.bf16.mxu0 0
      %1871 = vmatpush1.bf16.msra.mxu0 0
      %1872 = vmatprep.subr.bf16.mxu0 0
      %1873 = vmatpush1.bf16.msra.mxu0 0
      %1874 = vmatprep.subr.bf16.mxu0 0
      %1875 = vmatpush1.bf16.msra.mxu0 0
      %1876 = vmatprep.subr.bf16.mxu0 0
      %1877 = vmatpush1.bf16.msra.mxu0 0
      %1878 = vmatprep.subr.bf16.mxu0 0
      %1879 = vmatpush1.bf16.msra.mxu0 0
      %1880 = vmatprep.subr.bf16.mxu0 0
      %1881 = vmatpush1.bf16.msra.mxu0 0
      %1882 = vmatprep.subr.bf16.mxu0 0
      %1883 = vmatpush1.bf16.msra.mxu0 0
      %1884 = vmatprep.subr.bf16.mxu0 0
      %1885 = vmatpush1.bf16.msra.mxu0 0
      %1886 = vmatprep.mubr.bf16.mxu0 0
      %1887 = vmatmul.mubr.bf16.gmra.mrb[0].mxu0 %v1620
      %v1888 = vpop.f32.mrb[0].mxu0
      %v1889 = vadd.f32 0.0, %v1888
      %v1890 = vpop.f32.mrb[0].mxu0
      %v1891 = vadd.f32 0.0, %v1890
      %v1892 = vpop.f32.mrb[0].mxu0
      %v1893 = vpop.f32.mrb[0].mxu0
      %1894 = vdwg.mxu0
      %v1899 = vcombine.low %v1848, %v1850
      %v1900 = vcombine.low %v1889, %v1891
      %v1902 = vunpack.c.l.s4 1983009808
      %v1903 = vunpack.c.0.s8 %v1902
      %v1904 = vlaneseq
      %v1905 = vshrl.u32 %v1904, 7
      %v1906 = vsub.s32 %v1903, %v1905
      %v1907 = vrot.slane %v1899, %v1906
      %v1909 = vunpack.c.l.s4 1983009808
      %v1910 = vunpack.c.0.s8 %v1909
      %v1911 = vlaneseq
      %v1912 = vshrl.u32 %v1911, 7
      %v1913 = vsub.s32 %v1910, %v1912
      %v1914 = vrot.slane %v1900, %v1913
      %v1915 = vcombine.low %v1907, %v1914
      %v1917 = vadd.f32 %v1619, %v1915
      %v1918 = vxor.u32 %v1614, 2147483648
      %v1919 = vmul.f32 %v1918, 1.442695
      %v1920 = vpow.pop %v1919
      %v1921 = vadd.f32 %v1920, 1.0
      %v1922 = vrcp.pop %v1921
      %v1923 = vmul.f32 1.0, %v1922
      %v1925 = vrot.slane %v1614, 2
      %v1927 = vxor.u32 %v1925, 2147483648
      %v1928 = vmul.f32 %v1927, 1.442695
      %v1929 = vpow.pop %v1928
      %v1930 = vadd.f32 %v1929, 1.0
      %v1931 = vrcp.pop %v1930
      %v1932 = vmul.f32 1.0, %v1931
      %v1933 = vrot.slane %v1614, 4
      %v1935 = vtanh.pop %v1933
      %v1936 = vrot.slane %v1614, 6
      %v1938 = vxor.u32 %v1936, 2147483648
      %v1939 = vmul.f32 %v1938, 1.442695
      %v1940 = vpow.pop %v1939
      %v1941 = vadd.f32 %v1940, 1.0
      %v1942 = vrcp.pop %v1941
      %v1943 = vmul.f32 1.0, %v1942
      %v1944 = vmul.f32 %v1932, %v1272
      %v1945 = vmul.f32 %v1923, %v1935
      %v1946 = vadd.f32 %v1944, %v1945
      %v1947 = vtanh.pop %v1946
      %v1948 = vmul.f32 %v1943, %v1947
      %v1949 = vxor.u32 %v1917, 2147483648
      %v1950 = vmul.f32 %v1949, 1.442695
      %v1951 = vpow.pop %v1950
      %v1952 = vadd.f32 %v1951, 1.0
      %v1953 = vrcp.pop %v1952
      %v1954 = vmul.f32 1.0, %v1953
      %v1956 = vrot.slane %v1917, 2
      %v1958 = vxor.u32 %v1956, 2147483648
      %v1959 = vmul.f32 %v1958, 1.442695
      %v1960 = vpow.pop %v1959
      %v1961 = vadd.f32 %v1960, 1.0
      %v1962 = vrcp.pop %v1961
      %v1963 = vmul.f32 1.0, %v1962
      %v1964 = vrot.slane %v1917, 4
      %v1966 = vtanh.pop %v1964
      %v1967 = vrot.slane %v1917, 6
      %v1969 = vxor.u32 %v1967, 2147483648
      %v1970 = vmul.f32 %v1969, 1.442695
      %v1971 = vpow.pop %v1970
      %v1972 = vadd.f32 %v1971, 1.0
      %v1973 = vrcp.pop %v1972
      %v1974 = vmul.f32 1.0, %v1973
      %v1975 = vmul.f32 %v1963, %v1303
      %v1976 = vmul.f32 %v1954, %v1966
      %v1977 = vadd.f32 %v1975, %v1976
      %v1978 = vtanh.pop %v1977
      %v1979 = vmul.f32 %v1974, %v1978
      %s1980 = smul.u32 %s1312, 2
      %s1981 = scalar_lea.vmem [#allocation4], %s1980
      %1982 = vst [vmem:[%s1981] sm:$0x3] %v1948
      %s1983 = smul.u32 %s1615, 2
      %s1984 = scalar_lea.vmem [#allocation5], %s1983
      %1985 = vst [vmem:[%s1984] sm:$0x3] %v1979
      %s1986 = sadd.s32 %s638, 2
      %s1987 = smul.u32 %s1986, 4
      %s1988 = smul.addr %s1987, 2
      %s1989 = scalar_lea.vmem [#allocation2], %s1988
      %v1990 = vld [vmem:[%s1989] sm:$0xff]
      %v1991 = vpack.c.bf16 %v1948, %v1948
      %v1992 = vld [vmem:[%s5] sm:$0xff]
      %v1993 = vld [vmem:[%s5 + $0x8] sm:$0xff]
      %v1994 = vld [vmem:[%s5 + $0x10] sm:$0xff]
      %v1995 = vld [vmem:[%s5 + $0x18] sm:$0xff]
      %v1996 = vld [vmem:[%s5 + $0x20] sm:$0xff]
      %v1997 = vld [vmem:[%s5 + $0x28] sm:$0xff]
      %v1998 = vld [vmem:[%s5 + $0x30] sm:$0xff]
      %v1999 = vld [vmem:[%s5 + $0x38] sm:$0xff]
      %v2000 = vld [vmem:[%s5 + $0x40] sm:$0xff]
      %v2001 = vld [vmem:[%s5 + $0x48] sm:$0xff]
      %v2002 = vld [vmem:[%s5 + $0x50] sm:$0xff]
      %v2003 = vld [vmem:[%s5 + $0x58] sm:$0xff]
      %v2004 = vld [vmem:[%s5 + $0x60] sm:$0xff]
      %v2005 = vld [vmem:[%s5 + $0x68] sm:$0xff]
      %v2006 = vld [vmem:[%s5 + $0x70] sm:$0xff]
      %v2007 = vld [vmem:[%s5 + $0x78] sm:$0xff]
      %v2008 = vld [vmem:[%s5 + $0x80] sm:$0xff]
      %v2009 = vld [vmem:[%s5 + $0x88] sm:$0xff]
      %v2010 = vld [vmem:[%s5 + $0x90] sm:$0xff]
      %v2011 = vld [vmem:[%s5 + $0x98] sm:$0xff]
      %v2012 = vld [vmem:[%s5 + $0xa0] sm:$0xff]
      %v2013 = vld [vmem:[%s5 + $0xa8] sm:$0xff]
      %v2014 = vld [vmem:[%s5 + $0xb0] sm:$0xff]
      %v2015 = vld [vmem:[%s5 + $0xb8] sm:$0xff]
      %v2016 = vld [vmem:[%s5 + $0xc0] sm:$0xff]
      %v2017 = vld [vmem:[%s5 + $0xc8] sm:$0xff]
      %v2018 = vld [vmem:[%s5 + $0xd0] sm:$0xff]
      %v2019 = vld [vmem:[%s5 + $0xd8] sm:$0xff]
      %v2020 = vld [vmem:[%s5 + $0xe0] sm:$0xff]
      %v2021 = vld [vmem:[%s5 + $0xe8] sm:$0xff]
      %v2022 = vld [vmem:[%s5 + $0xf0] sm:$0xff]
      %v2023 = vld [vmem:[%s5 + $0xf8] sm:$0xff]
      %v2056 = vunpack.c.l.b16 %v1992
      %v2057 = vunpack.c.h.b16 %v1992
      %v2058 = vunpack.c.l.b16 %v1993
      %v2059 = vunpack.c.h.b16 %v1993
      %v2060 = vunpack.c.l.b16 %v1994
      %v2061 = vunpack.c.h.b16 %v1994
      %v2062 = vunpack.c.l.b16 %v1995
      %v2063 = vunpack.c.h.b16 %v1995
      %v2064 = vunpack.c.l.b16 %v1996
      %v2065 = vunpack.c.h.b16 %v1996
      %v2066 = vunpack.c.l.b16 %v1997
      %v2067 = vunpack.c.h.b16 %v1997
      %v2068 = vunpack.c.l.b16 %v1998
      %v2069 = vunpack.c.h.b16 %v1998
      %v2070 = vunpack.c.l.b16 %v1999
      %v2071 = vunpack.c.h.b16 %v1999
      %v2072 = vunpack.c.l.b16 %v2000
      %v2073 = vunpack.c.h.b16 %v2000
      %v2074 = vunpack.c.l.b16 %v2001
      %v2075 = vunpack.c.h.b16 %v2001
      %v2076 = vunpack.c.l.b16 %v2002
      %v2077 = vunpack.c.h.b16 %v2002
      %v2078 = vunpack.c.l.b16 %v2003
      %v2079 = vunpack.c.h.b16 %v2003
      %v2080 = vunpack.c.l.b16 %v2004
      %v2081 = vunpack.c.h.b16 %v2004
      %v2082 = vunpack.c.l.b16 %v2005
      %v2083 = vunpack.c.h.b16 %v2005
      %v2084 = vunpack.c.l.b16 %v2006
      %v2085 = vunpack.c.h.b16 %v2006
      %v2086 = vunpack.c.l.b16 %v2007
      %v2087 = vunpack.c.h.b16 %v2007
      %v2088 = vunpack.c.l.b16 %v2008
      %v2089 = vunpack.c.h.b16 %v2008
      %v2090 = vunpack.c.l.b16 %v2009
      %v2091 = vunpack.c.h.b16 %v2009
      %v2092 = vunpack.c.l.b16 %v2010
      %v2093 = vunpack.c.h.b16 %v2010
      %v2094 = vunpack.c.l.b16 %v2011
      %v2095 = vunpack.c.h.b16 %v2011
      %v2096 = vunpack.c.l.b16 %v2012
      %v2097 = vunpack.c.h.b16 %v2012
      %v2098 = vunpack.c.l.b16 %v2013
      %v2099 = vunpack.c.h.b16 %v2013
      %v2100 = vunpack.c.l.b16 %v2014
      %v2101 = vunpack.c.h.b16 %v2014
      %v2102 = vunpack.c.l.b16 %v2015
      %v2103 = vunpack.c.h.b16 %v2015
      %v2104 = vunpack.c.l.b16 %v2016
      %v2105 = vunpack.c.h.b16 %v2016
      %v2106 = vunpack.c.l.b16 %v2017
      %v2107 = vunpack.c.h.b16 %v2017
      %v2108 = vunpack.c.l.b16 %v2018
      %v2109 = vunpack.c.h.b16 %v2018
      %v2110 = vunpack.c.l.b16 %v2019
      %v2111 = vunpack.c.h.b16 %v2019
      %v2112 = vunpack.c.l.b16 %v2020
      %v2113 = vunpack.c.h.b16 %v2020
      %v2114 = vunpack.c.l.b16 %v2021
      %v2115 = vunpack.c.h.b16 %v2021
      %v2116 = vunpack.c.l.b16 %v2022
      %v2117 = vunpack.c.h.b16 %v2022
      %v2118 = vunpack.c.l.b16 %v2023
      %v2119 = vunpack.c.h.b16 %v2023
      %v2120 = vpack.c.b16 %v2060, %v2056
      %v2121 = vpack.c.b16 %v2061, %v2057
      %v2122 = vpack.c.b16 %v2062, %v2058
      %v2123 = vpack.c.b16 %v2063, %v2059
      %v2124 = vpack.c.b16 %v2068, %v2064
      %v2125 = vpack.c.b16 %v2069, %v2065
      %v2126 = vpack.c.b16 %v2070, %v2066
      %v2127 = vpack.c.b16 %v2071, %v2067
      %v2128 = vpack.c.b16 %v2076, %v2072
      %v2129 = vpack.c.b16 %v2077, %v2073
      %v2130 = vpack.c.b16 %v2078, %v2074
      %v2131 = vpack.c.b16 %v2079, %v2075
      %v2132 = vpack.c.b16 %v2084, %v2080
      %v2133 = vpack.c.b16 %v2085, %v2081
      %v2134 = vpack.c.b16 %v2086, %v2082
      %v2135 = vpack.c.b16 %v2087, %v2083
      %v2136 = vpack.c.b16 %v2092, %v2088
      %v2137 = vpack.c.b16 %v2093, %v2089
      %v2138 = vpack.c.b16 %v2094, %v2090
      %v2139 = vpack.c.b16 %v2095, %v2091
      %v2140 = vpack.c.b16 %v2100, %v2096
      %v2141 = vpack.c.b16 %v2101, %v2097
      %v2142 = vpack.c.b16 %v2102, %v2098
      %v2143 = vpack.c.b16 %v2103, %v2099
      %v2144 = vpack.c.b16 %v2108, %v2104
      %v2145 = vpack.c.b16 %v2109, %v2105
      %v2146 = vpack.c.b16 %v2110, %v2106
      %v2147 = vpack.c.b16 %v2111, %v2107
      %v2148 = vpack.c.b16 %v2116, %v2112
      %v2149 = vpack.c.b16 %v2117, %v2113
      %v2150 = vpack.c.b16 %v2118, %v2114
      %v2151 = vpack.c.b16 %v2119, %v2115
      %2184 = vmatprep.subr.bf16.mxu0 %v2121
      %2185 = vmatpush1.bf16.msra.mxu0 %v2120
      %2186 = vmatprep.subr.bf16.mxu0 %v2125
      %2187 = vmatpush1.bf16.msra.mxu0 %v2124
      %2188 = vmatprep.subr.bf16.mxu0 %v2129
      %2189 = vmatpush1.bf16.msra.mxu0 %v2128
      %2190 = vmatprep.subr.bf16.mxu0 %v2133
      %2191 = vmatpush1.bf16.msra.mxu0 %v2132
      %2192 = vmatprep.subr.bf16.mxu0 %v2137
      %2193 = vmatpush1.bf16.msra.mxu0 %v2136
      %2194 = vmatprep.subr.bf16.mxu0 %v2141
      %2195 = vmatpush1.bf16.msra.mxu0 %v2140
      %2196 = vmatprep.subr.bf16.mxu0 %v2145
      %2197 = vmatpush1.bf16.msra.mxu0 %v2144
      %2198 = vmatprep.subr.bf16.mxu0 %v2149
      %2199 = vmatpush1.bf16.msra.mxu0 %v2148
      %2200 = vmatprep.subr.bf16.mxu0 0
      %2201 = vmatpush1.bf16.msra.mxu0 0
      %2202 = vmatprep.subr.bf16.mxu0 0
      %2203 = vmatpush1.bf16.msra.mxu0 0
      %2204 = vmatprep.subr.bf16.mxu0 0
      %2205 = vmatpush1.bf16.msra.mxu0 0
      %2206 = vmatprep.subr.bf16.mxu0 0
      %2207 = vmatpush1.bf16.msra.mxu0 0
      %2208 = vmatprep.subr.bf16.mxu0 0
      %2209 = vmatpush1.bf16.msra.mxu0 0
      %2210 = vmatprep.subr.bf16.mxu0 0
      %2211 = vmatpush1.bf16.msra.mxu0 0
      %2212 = vmatprep.subr.bf16.mxu0 0
      %2213 = vmatpush1.bf16.msra.mxu0 0
      %2214 = vmatprep.subr.bf16.mxu0 0
      %2215 = vmatpush1.bf16.msra.mxu0 0
      %2216 = vmatprep.mubr.bf16.mxu0 0
      %2217 = vmatmul.mubr.bf16.gmra.mrb[0].mxu0 %v1991
      %v2218 = vpop.f32.mrb[0].mxu0
      %v2219 = vadd.f32 0.0, %v2218
      %v2220 = vpop.f32.mrb[0].mxu0
      %v2221 = vadd.f32 0.0, %v2220
      %v2222 = vpop.f32.mrb[0].mxu0
      %v2223 = vpop.f32.mrb[0].mxu0
      %2224 = vdwg.mxu0
      %2225 = vmatprep.subr.bf16.mxu0 %v2123
      %2226 = vmatpush1.bf16.msra.mxu0 %v2122
      %2227 = vmatprep.subr.bf16.mxu0 %v2127
      %2228 = vmatpush1.bf16.msra.mxu0 %v2126
      %2229 = vmatprep.subr.bf16.mxu0 %v2131
      %2230 = vmatpush1.bf16.msra.mxu0 %v2130
      %2231 = vmatprep.subr.bf16.mxu0 %v2135
      %2232 = vmatpush1.bf16.msra.mxu0 %v2134
      %2233 = vmatprep.subr.bf16.mxu0 %v2139
      %2234 = vmatpush1.bf16.msra.mxu0 %v2138
      %2235 = vmatprep.subr.bf16.mxu0 %v2143
      %2236 = vmatpush1.bf16.msra.mxu0 %v2142
      %2237 = vmatprep.subr.bf16.mxu0 %v2147
      %2238 = vmatpush1.bf16.msra.mxu0 %v2146
      %2239 = vmatprep.subr.bf16.mxu0 %v2151
      %2240 = vmatpush1.bf16.msra.mxu0 %v2150
      %2241 = vmatprep.subr.bf16.mxu0 0
      %2242 = vmatpush1.bf16.msra.mxu0 0
      %2243 = vmatprep.subr.bf16.mxu0 0
      %2244 = vmatpush1.bf16.msra.mxu0 0
      %2245 = vmatprep.subr.bf16.mxu0 0
      %2246 = vmatpush1.bf16.msra.mxu0 0
      %2247 = vmatprep.subr.bf16.mxu0 0
      %2248 = vmatpush1.bf16.msra.mxu0 0
      %2249 = vmatprep.subr.bf16.mxu0 0
      %2250 = vmatpush1.bf16.msra.mxu0 0
      %2251 = vmatprep.subr.bf16.mxu0 0
      %2252 = vmatpush1.bf16.msra.mxu0 0
      %2253 = vmatprep.subr.bf16.mxu0 0
      %2254 = vmatpush1.bf16.msra.mxu0 0
      %2255 = vmatprep.subr.bf16.mxu0 0
      %2256 = vmatpush1.bf16.msra.mxu0 0
      %2257 = vmatprep.mubr.bf16.mxu0 0
      %2258 = vmatmul.mubr.bf16.gmra.mrb[0].mxu0 %v1991
      %v2259 = vpop.f32.mrb[0].mxu0
      %v2260 = vadd.f32 0.0, %v2259
      %v2261 = vpop.f32.mrb[0].mxu0
      %v2262 = vadd.f32 0.0, %v2261
      %v2263 = vpop.f32.mrb[0].mxu0
      %v2264 = vpop.f32.mrb[0].mxu0
      %2265 = vdwg.mxu0
      %v2270 = vcombine.low %v2219, %v2221
      %v2271 = vcombine.low %v2260, %v2262
      %v2273 = vunpack.c.l.s4 1983009808
      %v2274 = vunpack.c.0.s8 %v2273
      %v2275 = vlaneseq
      %v2276 = vshrl.u32 %v2275, 7
      %v2277 = vsub.s32 %v2274, %v2276
      %v2278 = vrot.slane %v2270, %v2277
      %v2280 = vunpack.c.l.s4 1983009808
      %v2281 = vunpack.c.0.s8 %v2280
      %v2282 = vlaneseq
      %v2283 = vshrl.u32 %v2282, 7
      %v2284 = vsub.s32 %v2281, %v2283
      %v2285 = vrot.slane %v2271, %v2284
      %v2286 = vcombine.low %v2278, %v2285
      %v2288 = vadd.f32 %v1990, %v2286
      %s2289 = ssub.s32 29, %s638
      %s2290 = smul.u32 %s2289, 4
      %s2291 = smul.addr %s2290, 2
      %s2292 = scalar_lea.vmem [#allocation3], %s2291
      %v2293 = vld [vmem:[%s2292] sm:$0xff]
      %v2294 = vpack.c.bf16 %v1979, %v1979
      %v2295 = vld [vmem:[%s6] sm:$0xff]
      %v2296 = vld [vmem:[%s6 + $0x8] sm:$0xff]
      %v2297 = vld [vmem:[%s6 + $0x10] sm:$0xff]
      %v2298 = vld [vmem:[%s6 + $0x18] sm:$0xff]
      %v2299 = vld [vmem:[%s6 + $0x20] sm:$0xff]
      %v2300 = vld [vmem:[%s6 + $0x28] sm:$0xff]
      %v2301 = vld [vmem:[%s6 + $0x30] sm:$0xff]
      %v2302 = vld [vmem:[%s6 + $0x38] sm:$0xff]
      %v2303 = vld [vmem:[%s6 + $0x40] sm:$0xff]
      %v2304 = vld [vmem:[%s6 + $0x48] sm:$0xff]
      %v2305 = vld [vmem:[%s6 + $0x50] sm:$0xff]
      %v2306 = vld [vmem:[%s6 + $0x58] sm:$0xff]
      %v2307 = vld [vmem:[%s6 + $0x60] sm:$0xff]
      %v2308 = vld [vmem:[%s6 + $0x68] sm:$0xff]
      %v2309 = vld [vmem:[%s6 + $0x70] sm:$0xff]
      %v2310 = vld [vmem:[%s6 + $0x78] sm:$0xff]
      %v2311 = vld [vmem:[%s6 + $0x80] sm:$0xff]
      %v2312 = vld [vmem:[%s6 + $0x88] sm:$0xff]
      %v2313 = vld [vmem:[%s6 + $0x90] sm:$0xff]
      %v2314 = vld [vmem:[%s6 + $0x98] sm:$0xff]
      %v2315 = vld [vmem:[%s6 + $0xa0] sm:$0xff]
      %v2316 = vld [vmem:[%s6 + $0xa8] sm:$0xff]
      %v2317 = vld [vmem:[%s6 + $0xb0] sm:$0xff]
      %v2318 = vld [vmem:[%s6 + $0xb8] sm:$0xff]
      %v2319 = vld [vmem:[%s6 + $0xc0] sm:$0xff]
      %v2320 = vld [vmem:[%s6 + $0xc8] sm:$0xff]
      %v2321 = vld [vmem:[%s6 + $0xd0] sm:$0xff]
      %v2322 = vld [vmem:[%s6 + $0xd8] sm:$0xff]
      %v2323 = vld [vmem:[%s6 + $0xe0] sm:$0xff]
      %v2324 = vld [vmem:[%s6 + $0xe8] sm:$0xff]
      %v2325 = vld [vmem:[%s6 + $0xf0] sm:$0xff]
      %v2326 = vld [vmem:[%s6 + $0xf8] sm:$0xff]
      %v2359 = vunpack.c.l.b16 %v2295
      %v2360 = vunpack.c.h.b16 %v2295
      %v2361 = vunpack.c.l.b16 %v2296
      %v2362 = vunpack.c.h.b16 %v2296
      %v2363 = vunpack.c.l.b16 %v2297
      %v2364 = vunpack.c.h.b16 %v2297
      %v2365 = vunpack.c.l.b16 %v2298
      %v2366 = vunpack.c.h.b16 %v2298
      %v2367 = vunpack.c.l.b16 %v2299
      %v2368 = vunpack.c.h.b16 %v2299
      %v2369 = vunpack.c.l.b16 %v2300
      %v2370 = vunpack.c.h.b16 %v2300
      %v2371 = vunpack.c.l.b16 %v2301
      %v2372 = vunpack.c.h.b16 %v2301
      %v2373 = vunpack.c.l.b16 %v2302
      %v2374 = vunpack.c.h.b16 %v2302
      %v2375 = vunpack.c.l.b16 %v2303
      %v2376 = vunpack.c.h.b16 %v2303
      %v2377 = vunpack.c.l.b16 %v2304
      %v2378 = vunpack.c.h.b16 %v2304
      %v2379 = vunpack.c.l.b16 %v2305
      %v2380 = vunpack.c.h.b16 %v2305
      %v2381 = vunpack.c.l.b16 %v2306
      %v2382 = vunpack.c.h.b16 %v2306
      %v2383 = vunpack.c.l.b16 %v2307
      %v2384 = vunpack.c.h.b16 %v2307
      %v2385 = vunpack.c.l.b16 %v2308
      %v2386 = vunpack.c.h.b16 %v2308
      %v2387 = vunpack.c.l.b16 %v2309
      %v2388 = vunpack.c.h.b16 %v2309
      %v2389 = vunpack.c.l.b16 %v2310
      %v2390 = vunpack.c.h.b16 %v2310
      %v2391 = vunpack.c.l.b16 %v2311
      %v2392 = vunpack.c.h.b16 %v2311
      %v2393 = vunpack.c.l.b16 %v2312
      %v2394 = vunpack.c.h.b16 %v2312
      %v2395 = vunpack.c.l.b16 %v2313
      %v2396 = vunpack.c.h.b16 %v2313
      %v2397 = vunpack.c.l.b16 %v2314
      %v2398 = vunpack.c.h.b16 %v2314
      %v2399 = vunpack.c.l.b16 %v2315
      %v2400 = vunpack.c.h.b16 %v2315
      %v2401 = vunpack.c.l.b16 %v2316
      %v2402 = vunpack.c.h.b16 %v2316
      %v2403 = vunpack.c.l.b16 %v2317
      %v2404 = vunpack.c.h.b16 %v2317
      %v2405 = vunpack.c.l.b16 %v2318
      %v2406 = vunpack.c.h.b16 %v2318
      %v2407 = vunpack.c.l.b16 %v2319
      %v2408 = vunpack.c.h.b16 %v2319
      %v2409 = vunpack.c.l.b16 %v2320
      %v2410 = vunpack.c.h.b16 %v2320
      %v2411 = vunpack.c.l.b16 %v2321
      %v2412 = vunpack.c.h.b16 %v2321
      %v2413 = vunpack.c.l.b16 %v2322
      %v2414 = vunpack.c.h.b16 %v2322
      %v2415 = vunpack.c.l.b16 %v2323
      %v2416 = vunpack.c.h.b16 %v2323
      %v2417 = vunpack.c.l.b16 %v2324
      %v2418 = vunpack.c.h.b16 %v2324
      %v2419 = vunpack.c.l.b16 %v2325
      %v2420 = vunpack.c.h.b16 %v2325
      %v2421 = vunpack.c.l.b16 %v2326
      %v2422 = vunpack.c.h.b16 %v2326
      %v2423 = vpack.c.b16 %v2363, %v2359
      %v2424 = vpack.c.b16 %v2364, %v2360
      %v2425 = vpack.c.b16 %v2365, %v2361
      %v2426 = vpack.c.b16 %v2366, %v2362
      %v2427 = vpack.c.b16 %v2371, %v2367
      %v2428 = vpack.c.b16 %v2372, %v2368
      %v2429 = vpack.c.b16 %v2373, %v2369
      %v2430 = vpack.c.b16 %v2374, %v2370
      %v2431 = vpack.c.b16 %v2379, %v2375
      %v2432 = vpack.c.b16 %v2380, %v2376
      %v2433 = vpack.c.b16 %v2381, %v2377
      %v2434 = vpack.c.b16 %v2382, %v2378
      %v2435 = vpack.c.b16 %v2387, %v2383
      %v2436 = vpack.c.b16 %v2388, %v2384
      %v2437 = vpack.c.b16 %v2389, %v2385
      %v2438 = vpack.c.b16 %v2390, %v2386
      %v2439 = vpack.c.b16 %v2395, %v2391
      %v2440 = vpack.c.b16 %v2396, %v2392
      %v2441 = vpack.c.b16 %v2397, %v2393
      %v2442 = vpack.c.b16 %v2398, %v2394
      %v2443 = vpack.c.b16 %v2403, %v2399
      %v2444 = vpack.c.b16 %v2404, %v2400
      %v2445 = vpack.c.b16 %v2405, %v2401
      %v2446 = vpack.c.b16 %v2406, %v2402
      %v2447 = vpack.c.b16 %v2411, %v2407
      %v2448 = vpack.c.b16 %v2412, %v2408
      %v2449 = vpack.c.b16 %v2413, %v2409
      %v2450 = vpack.c.b16 %v2414, %v2410
      %v2451 = vpack.c.b16 %v2419, %v2415
      %v2452 = vpack.c.b16 %v2420, %v2416
      %v2453 = vpack.c.b16 %v2421, %v2417
      %v2454 = vpack.c.b16 %v2422, %v2418
      %2487 = vmatprep.subr.bf16.mxu0 %v2424
      %2488 = vmatpush1.bf16.msra.mxu0 %v2423
      %2489 = vmatprep.subr.bf16.mxu0 %v2428
      %2490 = vmatpush1.bf16.msra.mxu0 %v2427
      %2491 = vmatprep.subr.bf16.mxu0 %v2432
      %2492 = vmatpush1.bf16.msra.mxu0 %v2431
      %2493 = vmatprep.subr.bf16.mxu0 %v2436
      %2494 = vmatpush1.bf16.msra.mxu0 %v2435
      %2495 = vmatprep.subr.bf16.mxu0 %v2440
      %2496 = vmatpush1.bf16.msra.mxu0 %v2439
      %2497 = vmatprep.subr.bf16.mxu0 %v2444
      %2498 = vmatpush1.bf16.msra.mxu0 %v2443
      %2499 = vmatprep.subr.bf16.mxu0 %v2448
      %2500 = vmatpush1.bf16.msra.mxu0 %v2447
      %2501 = vmatprep.subr.bf16.mxu0 %v2452
      %2502 = vmatpush1.bf16.msra.mxu0 %v2451
      %2503 = vmatprep.subr.bf16.mxu0 0
      %2504 = vmatpush1.bf16.msra.mxu0 0
      %2505 = vmatprep.subr.bf16.mxu0 0
      %2506 = vmatpush1.bf16.msra.mxu0 0
      %2507 = vmatprep.subr.bf16.mxu0 0
      %2508 = vmatpush1.bf16.msra.mxu0 0
      %2509 = vmatprep.subr.bf16.mxu0 0
      %2510 = vmatpush1.bf16.msra.mxu0 0
      %2511 = vmatprep.subr.bf16.mxu0 0
      %2512 = vmatpush1.bf16.msra.mxu0 0
      %2513 = vmatprep.subr.bf16.mxu0 0
      %2514 = vmatpush1.bf16.msra.mxu0 0
      %2515 = vmatprep.subr.bf16.mxu0 0
      %2516 = vmatpush1.bf16.msra.mxu0 0
      %2517 = vmatprep.subr.bf16.mxu0 0
      %2518 = vmatpush1.bf16.msra.mxu0 0
      %2519 = vmatprep.mubr.bf16.mxu0 0
      %2520 = vmatmul.mubr.bf16.gmra.mrb[0].mxu0 %v2294
      %v2521 = vpop.f32.mrb[0].mxu0
      %v2522 = vadd.f32 0.0, %v2521
      %v2523 = vpop.f32.mrb[0].mxu0
      %v2524 = vadd.f32 0.0, %v2523
      %v2525 = vpop.f32.mrb[0].mxu0
      %v2526 = vpop.f32.mrb[0].mxu0
      %2527 = vdwg.mxu0
      %2528 = vmatprep.subr.bf16.mxu0 %v2426
      %2529 = vmatpush1.bf16.msra.mxu0 %v2425
      %2530 = vmatprep.subr.bf16.mxu0 %v2430
      %2531 = vmatpush1.bf16.msra.mxu0 %v2429
      %2532 = vmatprep.subr.bf16.mxu0 %v2434
      %2533 = vmatpush1.bf16.msra.mxu0 %v2433
      %2534 = vmatprep.subr.bf16.mxu0 %v2438
      %2535 = vmatpush1.bf16.msra.mxu0 %v2437
      %2536 = vmatprep.subr.bf16.mxu0 %v2442
      %2537 = vmatpush1.bf16.msra.mxu0 %v2441
      %2538 = vmatprep.subr.bf16.mxu0 %v2446
      %2539 = vmatpush1.bf16.msra.mxu0 %v2445
      %2540 = vmatprep.subr.bf16.mxu0 %v2450
      %2541 = vmatpush1.bf16.msra.mxu0 %v2449
      %2542 = vmatprep.subr.bf16.mxu0 %v2454
      %2543 = vmatpush1.bf16.msra.mxu0 %v2453
      %2544 = vmatprep.subr.bf16.mxu0 0
      %2545 = vmatpush1.bf16.msra.mxu0 0
      %2546 = vmatprep.subr.bf16.mxu0 0
      %2547 = vmatpush1.bf16.msra.mxu0 0
      %2548 = vmatprep.subr.bf16.mxu0 0
      %2549 = vmatpush1.bf16.msra.mxu0 0
      %2550 = vmatprep.subr.bf16.mxu0 0
      %2551 = vmatpush1.bf16.msra.mxu0 0
      %2552 = vmatprep.subr.bf16.mxu0 0
      %2553 = vmatpush1.bf16.msra.mxu0 0
      %2554 = vmatprep.subr.bf16.mxu0 0
      %2555 = vmatpush1.bf16.msra.mxu0 0
      %2556 = vmatprep.subr.bf16.mxu0 0
      %2557 = vmatpush1.bf16.msra.mxu0 0
      %2558 = vmatprep.subr.bf16.mxu0 0
      %2559 = vmatpush1.bf16.msra.mxu0 0
      %2560 = vmatprep.mubr.bf16.mxu0 0
      %2561 = vmatmul.mubr.bf16.gmra.mrb[0].mxu0 %v2294
      %v2562 = vpop.f32.mrb[0].mxu0
      %v2563 = vadd.f32 0.0, %v2562
      %v2564 = vpop.f32.mrb[0].mxu0
      %v2565 = vadd.f32 0.0, %v2564
      %v2566 = vpop.f32.mrb[0].mxu0
      %v2567 = vpop.f32.mrb[0].mxu0
      %2568 = vdwg.mxu0
      %v2573 = vcombine.low %v2522, %v2524
      %v2574 = vcombine.low %v2563, %v2565
      %v2576 = vunpack.c.l.s4 1983009808
      %v2577 = vunpack.c.0.s8 %v2576
      %v2578 = vlaneseq
      %v2579 = vshrl.u32 %v2578, 7
      %v2580 = vsub.s32 %v2577, %v2579
      %v2581 = vrot.slane %v2573, %v2580
      %v2583 = vunpack.c.l.s4 1983009808
      %v2584 = vunpack.c.0.s8 %v2583
      %v2585 = vlaneseq
      %v2586 = vshrl.u32 %v2585, 7
      %v2587 = vsub.s32 %v2584, %v2586
      %v2588 = vrot.slane %v2574, %v2587
      %v2589 = vcombine.low %v2581, %v2588
      %v2591 = vadd.f32 %v2293, %v2589
      %v2592 = vxor.u32 %v2288, 2147483648
      %v2593 = vmul.f32 %v2592, 1.442695
      %v2594 = vpow.pop %v2593
      %v2595 = vadd.f32 %v2594, 1.0
      %v2596 = vrcp.pop %v2595
      %v2597 = vmul.f32 1.0, %v2596
      %v2599 = vrot.slane %v2288, 2
      %v2601 = vxor.u32 %v2599, 2147483648
      %v2602 = vmul.f32 %v2601, 1.442695
      %v2603 = vpow.pop %v2602
      %v2604 = vadd.f32 %v2603, 1.0
      %v2605 = vrcp.pop %v2604
      %v2606 = vmul.f32 1.0, %v2605
      %v2607 = vrot.slane %v2288, 4
      %v2609 = vtanh.pop %v2607
      %v2610 = vrot.slane %v2288, 6
      %v2612 = vxor.u32 %v2610, 2147483648
      %v2613 = vmul.f32 %v2612, 1.442695
      %v2614 = vpow.pop %v2613
      %v2615 = vadd.f32 %v2614, 1.0
      %v2616 = vrcp.pop %v2615
      %v2617 = vmul.f32 1.0, %v2616
      %v2618 = vmul.f32 %v2606, %v1946
      %v2619 = vmul.f32 %v2597, %v2609
      %v2620 = vadd.f32 %v2618, %v2619
      %v2621 = vtanh.pop %v2620
      %v2622 = vmul.f32 %v2617, %v2621
      %v2623 = vxor.u32 %v2591, 2147483648
      %v2624 = vmul.f32 %v2623, 1.442695
      %v2625 = vpow.pop %v2624
      %v2626 = vadd.f32 %v2625, 1.0
      %v2627 = vrcp.pop %v2626
      %v2628 = vmul.f32 1.0, %v2627
      %v2630 = vrot.slane %v2591, 2
      %v2632 = vxor.u32 %v2630, 2147483648
      %v2633 = vmul.f32 %v2632, 1.442695
      %v2634 = vpow.pop %v2633
      %v2635 = vadd.f32 %v2634, 1.0
      %v2636 = vrcp.pop %v2635
      %v2637 = vmul.f32 1.0, %v2636
      %v2638 = vrot.slane %v2591, 4
      %v2640 = vtanh.pop %v2638
      %v2641 = vrot.slane %v2591, 6
      %v2643 = vxor.u32 %v2641, 2147483648
      %v2644 = vmul.f32 %v2643, 1.442695
      %v2645 = vpow.pop %v2644
      %v2646 = vadd.f32 %v2645, 1.0
      %v2647 = vrcp.pop %v2646
      %v2648 = vmul.f32 1.0, %v2647
      %v2649 = vmul.f32 %v2637, %v1977
      %v2650 = vmul.f32 %v2628, %v2640
      %v2651 = vadd.f32 %v2649, %v2650
      %v2652 = vtanh.pop %v2651
      %v2653 = vmul.f32 %v2648, %v2652
      %s2654 = smul.u32 %s1986, 2
      %s2655 = scalar_lea.vmem [#allocation4], %s2654
      %2656 = vst [vmem:[%s2655] sm:$0x3] %v2622
      %s2657 = smul.u32 %s2289, 2
      %s2658 = scalar_lea.vmem [#allocation5], %s2657
      %2659 = vst [vmem:[%s2658] sm:$0x3] %v2653
      %s2660 = sadd.s32 %s638, 3
      %s2661 = smul.u32 %s2660, 4
      %s2662 = smul.addr %s2661, 2
      %s2663 = scalar_lea.vmem [#allocation2], %s2662
      %v2664 = vld [vmem:[%s2663] sm:$0xff]
      %v2665 = vpack.c.bf16 %v2622, %v2622
      %v2666 = vld [vmem:[%s5] sm:$0xff]
      %v2667 = vld [vmem:[%s5 + $0x8] sm:$0xff]
      %v2668 = vld [vmem:[%s5 + $0x10] sm:$0xff]
      %v2669 = vld [vmem:[%s5 + $0x18] sm:$0xff]
      %v2670 = vld [vmem:[%s5 + $0x20] sm:$0xff]
      %v2671 = vld [vmem:[%s5 + $0x28] sm:$0xff]
      %v2672 = vld [vmem:[%s5 + $0x30] sm:$0xff]
      %v2673 = vld [vmem:[%s5 + $0x38] sm:$0xff]
      %v2674 = vld [vmem:[%s5 + $0x40] sm:$0xff]
      %v2675 = vld [vmem:[%s5 + $0x48] sm:$0xff]
      %v2676 = vld [vmem:[%s5 + $0x50] sm:$0xff]
      %v2677 = vld [vmem:[%s5 + $0x58] sm:$0xff]
      %v2678 = vld [vmem:[%s5 + $0x60] sm:$0xff]
      %v2679 = vld [vmem:[%s5 + $0x68] sm:$0xff]
      %v2680 = vld [vmem:[%s5 + $0x70] sm:$0xff]
      %v2681 = vld [vmem:[%s5 + $0x78] sm:$0xff]
      %v2682 = vld [vmem:[%s5 + $0x80] sm:$0xff]
      %v2683 = vld [vmem:[%s5 + $0x88] sm:$0xff]
      %v2684 = vld [vmem:[%s5 + $0x90] sm:$0xff]
      %v2685 = vld [vmem:[%s5 + $0x98] sm:$0xff]
      %v2686 = vld [vmem:[%s5 + $0xa0] sm:$0xff]
      %v2687 = vld [vmem:[%s5 + $0xa8] sm:$0xff]
      %v2688 = vld [vmem:[%s5 + $0xb0] sm:$0xff]
      %v2689 = vld [vmem:[%s5 + $0xb8] sm:$0xff]
      %v2690 = vld [vmem:[%s5 + $0xc0] sm:$0xff]
      %v2691 = vld [vmem:[%s5 + $0xc8] sm:$0xff]
      %v2692 = vld [vmem:[%s5 + $0xd0] sm:$0xff]
      %v2693 = vld [vmem:[%s5 + $0xd8] sm:$0xff]
      %v2694 = vld [vmem:[%s5 + $0xe0] sm:$0xff]
      %v2695 = vld [vmem:[%s5 + $0xe8] sm:$0xff]
      %v2696 = vld [vmem:[%s5 + $0xf0] sm:$0xff]
      %v2697 = vld [vmem:[%s5 + $0xf8] sm:$0xff]
      %v2730 = vunpack.c.l.b16 %v2666
      %v2731 = vunpack.c.h.b16 %v2666
      %v2732 = vunpack.c.l.b16 %v2667
      %v2733 = vunpack.c.h.b16 %v2667
      %v2734 = vunpack.c.l.b16 %v2668
      %v2735 = vunpack.c.h.b16 %v2668
      %v2736 = vunpack.c.l.b16 %v2669
      %v2737 = vunpack.c.h.b16 %v2669
      %v2738 = vunpack.c.l.b16 %v2670
      %v2739 = vunpack.c.h.b16 %v2670
      %v2740 = vunpack.c.l.b16 %v2671
      %v2741 = vunpack.c.h.b16 %v2671
      %v2742 = vunpack.c.l.b16 %v2672
      %v2743 = vunpack.c.h.b16 %v2672
      %v2744 = vunpack.c.l.b16 %v2673
      %v2745 = vunpack.c.h.b16 %v2673
      %v2746 = vunpack.c.l.b16 %v2674
      %v2747 = vunpack.c.h.b16 %v2674
      %v2748 = vunpack.c.l.b16 %v2675
      %v2749 = vunpack.c.h.b16 %v2675
      %v2750 = vunpack.c.l.b16 %v2676
      %v2751 = vunpack.c.h.b16 %v2676
      %v2752 = vunpack.c.l.b16 %v2677
      %v2753 = vunpack.c.h.b16 %v2677
      %v2754 = vunpack.c.l.b16 %v2678
      %v2755 = vunpack.c.h.b16 %v2678
      %v2756 = vunpack.c.l.b16 %v2679
      %v2757 = vunpack.c.h.b16 %v2679
      %v2758 = vunpack.c.l.b16 %v2680
      %v2759 = vunpack.c.h.b16 %v2680
      %v2760 = vunpack.c.l.b16 %v2681
      %v2761 = vunpack.c.h.b16 %v2681
      %v2762 = vunpack.c.l.b16 %v2682
      %v2763 = vunpack.c.h.b16 %v2682
      %v2764 = vunpack.c.l.b16 %v2683
      %v2765 = vunpack.c.h.b16 %v2683
      %v2766 = vunpack.c.l.b16 %v2684
      %v2767 = vunpack.c.h.b16 %v2684
      %v2768 = vunpack.c.l.b16 %v2685
      %v2769 = vunpack.c.h.b16 %v2685
      %v2770 = vunpack.c.l.b16 %v2686
      %v2771 = vunpack.c.h.b16 %v2686
      %v2772 = vunpack.c.l.b16 %v2687
      %v2773 = vunpack.c.h.b16 %v2687
      %v2774 = vunpack.c.l.b16 %v2688
      %v2775 = vunpack.c.h.b16 %v2688
      %v2776 = vunpack.c.l.b16 %v2689
      %v2777 = vunpack.c.h.b16 %v2689
      %v2778 = vunpack.c.l.b16 %v2690
      %v2779 = vunpack.c.h.b16 %v2690
      %v2780 = vunpack.c.l.b16 %v2691
      %v2781 = vunpack.c.h.b16 %v2691
      %v2782 = vunpack.c.l.b16 %v2692
      %v2783 = vunpack.c.h.b16 %v2692
      %v2784 = vunpack.c.l.b16 %v2693
      %v2785 = vunpack.c.h.b16 %v2693
      %v2786 = vunpack.c.l.b16 %v2694
      %v2787 = vunpack.c.h.b16 %v2694
      %v2788 = vunpack.c.l.b16 %v2695
      %v2789 = vunpack.c.h.b16 %v2695
      %v2790 = vunpack.c.l.b16 %v2696
      %v2791 = vunpack.c.h.b16 %v2696
      %v2792 = vunpack.c.l.b16 %v2697
      %v2793 = vunpack.c.h.b16 %v2697
      %v2794 = vpack.c.b16 %v2734, %v2730
      %v2795 = vpack.c.b16 %v2735, %v2731
      %v2796 = vpack.c.b16 %v2736, %v2732
      %v2797 = vpack.c.b16 %v2737, %v2733
      %v2798 = vpack.c.b16 %v2742, %v2738
      %v2799 = vpack.c.b16 %v2743, %v2739
      %v2800 = vpack.c.b16 %v2744, %v2740
      %v2801 = vpack.c.b16 %v2745, %v2741
      %v2802 = vpack.c.b16 %v2750, %v2746
      %v2803 = vpack.c.b16 %v2751, %v2747
      %v2804 = vpack.c.b16 %v2752, %v2748
      %v2805 = vpack.c.b16 %v2753, %v2749
      %v2806 = vpack.c.b16 %v2758, %v2754
      %v2807 = vpack.c.b16 %v2759, %v2755
      %v2808 = vpack.c.b16 %v2760, %v2756
      %v2809 = vpack.c.b16 %v2761, %v2757
      %v2810 = vpack.c.b16 %v2766, %v2762
      %v2811 = vpack.c.b16 %v2767, %v2763
      %v2812 = vpack.c.b16 %v2768, %v2764
      %v2813 = vpack.c.b16 %v2769, %v2765
      %v2814 = vpack.c.b16 %v2774, %v2770
      %v2815 = vpack.c.b16 %v2775, %v2771
      %v2816 = vpack.c.b16 %v2776, %v2772
      %v2817 = vpack.c.b16 %v2777, %v2773
      %v2818 = vpack.c.b16 %v2782, %v2778
      %v2819 = vpack.c.b16 %v2783, %v2779
      %v2820 = vpack.c.b16 %v2784, %v2780
      %v2821 = vpack.c.b16 %v2785, %v2781
      %v2822 = vpack.c.b16 %v2790, %v2786
      %v2823 = vpack.c.b16 %v2791, %v2787
      %v2824 = vpack.c.b16 %v2792, %v2788
      %v2825 = vpack.c.b16 %v2793, %v2789
      %2858 = vmatprep.subr.bf16.mxu0 %v2795
      %2859 = vmatpush1.bf16.msra.mxu0 %v2794
      %2860 = vmatprep.subr.bf16.mxu0 %v2799
      %2861 = vmatpush1.bf16.msra.mxu0 %v2798
      %2862 = vmatprep.subr.bf16.mxu0 %v2803
      %2863 = vmatpush1.bf16.msra.mxu0 %v2802
      %2864 = vmatprep.subr.bf16.mxu0 %v2807
      %2865 = vmatpush1.bf16.msra.mxu0 %v2806
      %2866 = vmatprep.subr.bf16.mxu0 %v2811
      %2867 = vmatpush1.bf16.msra.mxu0 %v2810
      %2868 = vmatprep.subr.bf16.mxu0 %v2815
      %2869 = vmatpush1.bf16.msra.mxu0 %v2814
      %2870 = vmatprep.subr.bf16.mxu0 %v2819
      %2871 = vmatpush1.bf16.msra.mxu0 %v2818
      %2872 = vmatprep.subr.bf16.mxu0 %v2823
      %2873 = vmatpush1.bf16.msra.mxu0 %v2822
      %2874 = vmatprep.subr.bf16.mxu0 0
      %2875 = vmatpush1.bf16.msra.mxu0 0
      %2876 = vmatprep.subr.bf16.mxu0 0
      %2877 = vmatpush1.bf16.msra.mxu0 0
      %2878 = vmatprep.subr.bf16.mxu0 0
      %2879 = vmatpush1.bf16.msra.mxu0 0
      %2880 = vmatprep.subr.bf16.mxu0 0
      %2881 = vmatpush1.bf16.msra.mxu0 0
      %2882 = vmatprep.subr.bf16.mxu0 0
      %2883 = vmatpush1.bf16.msra.mxu0 0
      %2884 = vmatprep.subr.bf16.mxu0 0
      %2885 = vmatpush1.bf16.msra.mxu0 0
      %2886 = vmatprep.subr.bf16.mxu0 0
      %2887 = vmatpush1.bf16.msra.mxu0 0
      %2888 = vmatprep.subr.bf16.mxu0 0
      %2889 = vmatpush1.bf16.msra.mxu0 0
      %2890 = vmatprep.mubr.bf16.mxu0 0
      %2891 = vmatmul.mubr.bf16.gmra.mrb[0].mxu0 %v2665
      %v2892 = vpop.f32.mrb[0].mxu0
      %v2893 = vadd.f32 0.0, %v2892
      %v2894 = vpop.f32.mrb[0].mxu0
      %v2895 = vadd.f32 0.0, %v2894
      %v2896 = vpop.f32.mrb[0].mxu0
      %v2897 = vpop.f32.mrb[0].mxu0
      %2898 = vdwg.mxu0
      %2899 = vmatprep.subr.bf16.mxu0 %v2797
      %2900 = vmatpush1.bf16.msra.mxu0 %v2796
      %2901 = vmatprep.subr.bf16.mxu0 %v2801
      %2902 = vmatpush1.bf16.msra.mxu0 %v2800
      %2903 = vmatprep.subr.bf16.mxu0 %v2805
      %2904 = vmatpush1.bf16.msra.mxu0 %v2804
      %2905 = vmatprep.subr.bf16.mxu0 %v2809
      %2906 = vmatpush1.bf16.msra.mxu0 %v2808
      %2907 = vmatprep.subr.bf16.mxu0 %v2813
      %2908 = vmatpush1.bf16.msra.mxu0 %v2812
      %2909 = vmatprep.subr.bf16.mxu0 %v2817
      %2910 = vmatpush1.bf16.msra.mxu0 %v2816
      %2911 = vmatprep.subr.bf16.mxu0 %v2821
      %2912 = vmatpush1.bf16.msra.mxu0 %v2820
      %2913 = vmatprep.subr.bf16.mxu0 %v2825
      %2914 = vmatpush1.bf16.msra.mxu0 %v2824
      %2915 = vmatprep.subr.bf16.mxu0 0
      %2916 = vmatpush1.bf16.msra.mxu0 0
      %2917 = vmatprep.subr.bf16.mxu0 0
      %2918 = vmatpush1.bf16.msra.mxu0 0
      %2919 = vmatprep.subr.bf16.mxu0 0
      %2920 = vmatpush1.bf16.msra.mxu0 0
      %2921 = vmatprep.subr.bf16.mxu0 0
      %2922 = vmatpush1.bf16.msra.mxu0 0
      %2923 = vmatprep.subr.bf16.mxu0 0
      %2924 = vmatpush1.bf16.msra.mxu0 0
      %2925 = vmatprep.subr.bf16.mxu0 0
      %2926 = vmatpush1.bf16.msra.mxu0 0
      %2927 = vmatprep.subr.bf16.mxu0 0
      %2928 = vmatpush1.bf16.msra.mxu0 0
      %2929 = vmatprep.subr.bf16.mxu0 0
      %2930 = vmatpush1.bf16.msra.mxu0 0
      %2931 = vmatprep.mubr.bf16.mxu0 0
      %2932 = vmatmul.mubr.bf16.gmra.mrb[0].mxu0 %v2665
      %v2933 = vpop.f32.mrb[0].mxu0
      %v2934 = vadd.f32 0.0, %v2933
      %v2935 = vpop.f32.mrb[0].mxu0
      %v2936 = vadd.f32 0.0, %v2935
      %v2937 = vpop.f32.mrb[0].mxu0
      %v2938 = vpop.f32.mrb[0].mxu0
      %2939 = vdwg.mxu0
      %v2944 = vcombine.low %v2893, %v2895
      %v2945 = vcombine.low %v2934, %v2936
      %v2947 = vunpack.c.l.s4 1983009808
      %v2948 = vunpack.c.0.s8 %v2947
      %v2949 = vlaneseq
      %v2950 = vshrl.u32 %v2949, 7
      %v2951 = vsub.s32 %v2948, %v2950
      %v2952 = vrot.slane %v2944, %v2951
      %v2954 = vunpack.c.l.s4 1983009808
      %v2955 = vunpack.c.0.s8 %v2954
      %v2956 = vlaneseq
      %v2957 = vshrl.u32 %v2956, 7
      %v2958 = vsub.s32 %v2955, %v2957
      %v2959 = vrot.slane %v2945, %v2958
      %v2960 = vcombine.low %v2952, %v2959
      %v2962 = vadd.f32 %v2664, %v2960
      %s2963 = ssub.s32 28, %s638
      %s2964 = smul.u32 %s2963, 4
      %s2965 = smul.addr %s2964, 2
      %s2966 = scalar_lea.vmem [#allocation3], %s2965
      %v2967 = vld [vmem:[%s2966] sm:$0xff]
      %v2968 = vpack.c.bf16 %v2653, %v2653
      %v2969 = vld [vmem:[%s6] sm:$0xff]
      %v2970 = vld [vmem:[%s6 + $0x8] sm:$0xff]
      %v2971 = vld [vmem:[%s6 + $0x10] sm:$0xff]
      %v2972 = vld [vmem:[%s6 + $0x18] sm:$0xff]
      %v2973 = vld [vmem:[%s6 + $0x20] sm:$0xff]
      %v2974 = vld [vmem:[%s6 + $0x28] sm:$0xff]
      %v2975 = vld [vmem:[%s6 + $0x30] sm:$0xff]
      %v2976 = vld [vmem:[%s6 + $0x38] sm:$0xff]
      %v2977 = vld [vmem:[%s6 + $0x40] sm:$0xff]
      %v2978 = vld [vmem:[%s6 + $0x48] sm:$0xff]
      %v2979 = vld [vmem:[%s6 + $0x50] sm:$0xff]
      %v2980 = vld [vmem:[%s6 + $0x58] sm:$0xff]
      %v2981 = vld [vmem:[%s6 + $0x60] sm:$0xff]
      %v2982 = vld [vmem:[%s6 + $0x68] sm:$0xff]
      %v2983 = vld [vmem:[%s6 + $0x70] sm:$0xff]
      %v2984 = vld [vmem:[%s6 + $0x78] sm:$0xff]
      %v2985 = vld [vmem:[%s6 + $0x80] sm:$0xff]
      %v2986 = vld [vmem:[%s6 + $0x88] sm:$0xff]
      %v2987 = vld [vmem:[%s6 + $0x90] sm:$0xff]
      %v2988 = vld [vmem:[%s6 + $0x98] sm:$0xff]
      %v2989 = vld [vmem:[%s6 + $0xa0] sm:$0xff]
      %v2990 = vld [vmem:[%s6 + $0xa8] sm:$0xff]
      %v2991 = vld [vmem:[%s6 + $0xb0] sm:$0xff]
      %v2992 = vld [vmem:[%s6 + $0xb8] sm:$0xff]
      %v2993 = vld [vmem:[%s6 + $0xc0] sm:$0xff]
      %v2994 = vld [vmem:[%s6 + $0xc8] sm:$0xff]
      %v2995 = vld [vmem:[%s6 + $0xd0] sm:$0xff]
      %v2996 = vld [vmem:[%s6 + $0xd8] sm:$0xff]
      %v2997 = vld [vmem:[%s6 + $0xe0] sm:$0xff]
      %v2998 = vld [vmem:[%s6 + $0xe8] sm:$0xff]
      %v2999 = vld [vmem:[%s6 + $0xf0] sm:$0xff]
      %v3000 = vld [vmem:[%s6 + $0xf8] sm:$0xff]
      %v3033 = vunpack.c.l.b16 %v2969
      %v3034 = vunpack.c.h.b16 %v2969
      %v3035 = vunpack.c.l.b16 %v2970
      %v3036 = vunpack.c.h.b16 %v2970
      %v3037 = vunpack.c.l.b16 %v2971
      %v3038 = vunpack.c.h.b16 %v2971
      %v3039 = vunpack.c.l.b16 %v2972
      %v3040 = vunpack.c.h.b16 %v2972
      %v3041 = vunpack.c.l.b16 %v2973
      %v3042 = vunpack.c.h.b16 %v2973
      %v3043 = vunpack.c.l.b16 %v2974
      %v3044 = vunpack.c.h.b16 %v2974
      %v3045 = vunpack.c.l.b16 %v2975
      %v3046 = vunpack.c.h.b16 %v2975
      %v3047 = vunpack.c.l.b16 %v2976
      %v3048 = vunpack.c.h.b16 %v2976
      %v3049 = vunpack.c.l.b16 %v2977
      %v3050 = vunpack.c.h.b16 %v2977
      %v3051 = vunpack.c.l.b16 %v2978
      %v3052 = vunpack.c.h.b16 %v2978
      %v3053 = vunpack.c.l.b16 %v2979
      %v3054 = vunpack.c.h.b16 %v2979
      %v3055 = vunpack.c.l.b16 %v2980
      %v3056 = vunpack.c.h.b16 %v2980
      %v3057 = vunpack.c.l.b16 %v2981
      %v3058 = vunpack.c.h.b16 %v2981
      %v3059 = vunpack.c.l.b16 %v2982
      %v3060 = vunpack.c.h.b16 %v2982
      %v3061 = vunpack.c.l.b16 %v2983
      %v3062 = vunpack.c.h.b16 %v2983
      %v3063 = vunpack.c.l.b16 %v2984
      %v3064 = vunpack.c.h.b16 %v2984
      %v3065 = vunpack.c.l.b16 %v2985
      %v3066 = vunpack.c.h.b16 %v2985
      %v3067 = vunpack.c.l.b16 %v2986
      %v3068 = vunpack.c.h.b16 %v2986
      %v3069 = vunpack.c.l.b16 %v2987
      %v3070 = vunpack.c.h.b16 %v2987
      %v3071 = vunpack.c.l.b16 %v2988
      %v3072 = vunpack.c.h.b16 %v2988
      %v3073 = vunpack.c.l.b16 %v2989
      %v3074 = vunpack.c.h.b16 %v2989
      %v3075 = vunpack.c.l.b16 %v2990
      %v3076 = vunpack.c.h.b16 %v2990
      %v3077 = vunpack.c.l.b16 %v2991
      %v3078 = vunpack.c.h.b16 %v2991
      %v3079 = vunpack.c.l.b16 %v2992
      %v3080 = vunpack.c.h.b16 %v2992
      %v3081 = vunpack.c.l.b16 %v2993
      %v3082 = vunpack.c.h.b16 %v2993
      %v3083 = vunpack.c.l.b16 %v2994
      %v3084 = vunpack.c.h.b16 %v2994
      %v3085 = vunpack.c.l.b16 %v2995
      %v3086 = vunpack.c.h.b16 %v2995
      %v3087 = vunpack.c.l.b16 %v2996
      %v3088 = vunpack.c.h.b16 %v2996
      %v3089 = vunpack.c.l.b16 %v2997
      %v3090 = vunpack.c.h.b16 %v2997
      %v3091 = vunpack.c.l.b16 %v2998
      %v3092 = vunpack.c.h.b16 %v2998
      %v3093 = vunpack.c.l.b16 %v2999
      %v3094 = vunpack.c.h.b16 %v2999
      %v3095 = vunpack.c.l.b16 %v3000
      %v3096 = vunpack.c.h.b16 %v3000
      %v3097 = vpack.c.b16 %v3037, %v3033
      %v3098 = vpack.c.b16 %v3038, %v3034
      %v3099 = vpack.c.b16 %v3039, %v3035
      %v3100 = vpack.c.b16 %v3040, %v3036
      %v3101 = vpack.c.b16 %v3045, %v3041
      %v3102 = vpack.c.b16 %v3046, %v3042
      %v3103 = vpack.c.b16 %v3047, %v3043
      %v3104 = vpack.c.b16 %v3048, %v3044
      %v3105 = vpack.c.b16 %v3053, %v3049
      %v3106 = vpack.c.b16 %v3054, %v3050
      %v3107 = vpack.c.b16 %v3055, %v3051
      %v3108 = vpack.c.b16 %v3056, %v3052
      %v3109 = vpack.c.b16 %v3061, %v3057
      %v3110 = vpack.c.b16 %v3062, %v3058
      %v3111 = vpack.c.b16 %v3063, %v3059
      %v3112 = vpack.c.b16 %v3064, %v3060
      %v3113 = vpack.c.b16 %v3069, %v3065
      %v3114 = vpack.c.b16 %v3070, %v3066
      %v3115 = vpack.c.b16 %v3071, %v3067
      %v3116 = vpack.c.b16 %v3072, %v3068
      %v3117 = vpack.c.b16 %v3077, %v3073
      %v3118 = vpack.c.b16 %v3078, %v3074
      %v3119 = vpack.c.b16 %v3079, %v3075
      %v3120 = vpack.c.b16 %v3080, %v3076
      %v3121 = vpack.c.b16 %v3085, %v3081
      %v3122 = vpack.c.b16 %v3086, %v3082
      %v3123 = vpack.c.b16 %v3087, %v3083
      %v3124 = vpack.c.b16 %v3088, %v3084
      %v3125 = vpack.c.b16 %v3093, %v3089
      %v3126 = vpack.c.b16 %v3094, %v3090
      %v3127 = vpack.c.b16 %v3095, %v3091
      %v3128 = vpack.c.b16 %v3096, %v3092
      %3161 = vmatprep.subr.bf16.mxu0 %v3098
      %3162 = vmatpush1.bf16.msra.mxu0 %v3097
      %3163 = vmatprep.subr.bf16.mxu0 %v3102
      %3164 = vmatpush1.bf16.msra.mxu0 %v3101
      %3165 = vmatprep.subr.bf16.mxu0 %v3106
      %3166 = vmatpush1.bf16.msra.mxu0 %v3105
      %3167 = vmatprep.subr.bf16.mxu0 %v3110
      %3168 = vmatpush1.bf16.msra.mxu0 %v3109
      %3169 = vmatprep.subr.bf16.mxu0 %v3114
      %3170 = vmatpush1.bf16.msra.mxu0 %v3113
      %3171 = vmatprep.subr.bf16.mxu0 %v3118
      %3172 = vmatpush1.bf16.msra.mxu0 %v3117
      %3173 = vmatprep.subr.bf16.mxu0 %v3122
      %3174 = vmatpush1.bf16.msra.mxu0 %v3121
      %3175 = vmatprep.subr.bf16.mxu0 %v3126
      %3176 = vmatpush1.bf16.msra.mxu0 %v3125
      %3177 = vmatprep.subr.bf16.mxu0 0
      %3178 = vmatpush1.bf16.msra.mxu0 0
      %3179 = vmatprep.subr.bf16.mxu0 0
      %3180 = vmatpush1.bf16.msra.mxu0 0
      %3181 = vmatprep.subr.bf16.mxu0 0
      %3182 = vmatpush1.bf16.msra.mxu0 0
      %3183 = vmatprep.subr.bf16.mxu0 0
      %3184 = vmatpush1.bf16.msra.mxu0 0
      %3185 = vmatprep.subr.bf16.mxu0 0
      %3186 = vmatpush1.bf16.msra.mxu0 0
      %3187 = vmatprep.subr.bf16.mxu0 0
      %3188 = vmatpush1.bf16.msra.mxu0 0
      %3189 = vmatprep.subr.bf16.mxu0 0
      %3190 = vmatpush1.bf16.msra.mxu0 0
      %3191 = vmatprep.subr.bf16.mxu0 0
      %3192 = vmatpush1.bf16.msra.mxu0 0
      %3193 = vmatprep.mubr.bf16.mxu0 0
      %3194 = vmatmul.mubr.bf16.gmra.mrb[0].mxu0 %v2968
      %v3195 = vpop.f32.mrb[0].mxu0
      %v3196 = vadd.f32 0.0, %v3195
      %v3197 = vpop.f32.mrb[0].mxu0
      %v3198 = vadd.f32 0.0, %v3197
      %v3199 = vpop.f32.mrb[0].mxu0
      %v3200 = vpop.f32.mrb[0].mxu0
      %3201 = vdwg.mxu0
      %3202 = vmatprep.subr.bf16.mxu0 %v3100
      %3203 = vmatpush1.bf16.msra.mxu0 %v3099
      %3204 = vmatprep.subr.bf16.mxu0 %v3104
      %3205 = vmatpush1.bf16.msra.mxu0 %v3103
      %3206 = vmatprep.subr.bf16.mxu0 %v3108
      %3207 = vmatpush1.bf16.msra.mxu0 %v3107
      %3208 = vmatprep.subr.bf16.mxu0 %v3112
      %3209 = vmatpush1.bf16.msra.mxu0 %v3111
      %3210 = vmatprep.subr.bf16.mxu0 %v3116
      %3211 = vmatpush1.bf16.msra.mxu0 %v3115
      %3212 = vmatprep.subr.bf16.mxu0 %v3120
      %3213 = vmatpush1.bf16.msra.mxu0 %v3119
      %3214 = vmatprep.subr.bf16.mxu0 %v3124
      %3215 = vmatpush1.bf16.msra.mxu0 %v3123
      %3216 = vmatprep.subr.bf16.mxu0 %v3128
      %3217 = vmatpush1.bf16.msra.mxu0 %v3127
      %3218 = vmatprep.subr.bf16.mxu0 0
      %3219 = vmatpush1.bf16.msra.mxu0 0
      %3220 = vmatprep.subr.bf16.mxu0 0
      %3221 = vmatpush1.bf16.msra.mxu0 0
      %3222 = vmatprep.subr.bf16.mxu0 0
      %3223 = vmatpush1.bf16.msra.mxu0 0
      %3224 = vmatprep.subr.bf16.mxu0 0
      %3225 = vmatpush1.bf16.msra.mxu0 0
      %3226 = vmatprep.subr.bf16.mxu0 0
      %3227 = vmatpush1.bf16.msra.mxu0 0
      %3228 = vmatprep.subr.bf16.mxu0 0
      %3229 = vmatpush1.bf16.msra.mxu0 0
      %3230 = vmatprep.subr.bf16.mxu0 0
      %3231 = vmatpush1.bf16.msra.mxu0 0
      %3232 = vmatprep.subr.bf16.mxu0 0
      %3233 = vmatpush1.bf16.msra.mxu0 0
      %3234 = vmatprep.mubr.bf16.mxu0 0
      %3235 = vmatmul.mubr.bf16.gmra.mrb[0].mxu0 %v2968
      %v3236 = vpop.f32.mrb[0].mxu0
      %v3237 = vadd.f32 0.0, %v3236
      %v3238 = vpop.f32.mrb[0].mxu0
      %v3239 = vadd.f32 0.0, %v3238
      %v3240 = vpop.f32.mrb[0].mxu0
      %v3241 = vpop.f32.mrb[0].mxu0
      %3242 = vdwg.mxu0
      %v3247 = vcombine.low %v3196, %v3198
      %v3248 = vcombine.low %v3237, %v3239
      %v3250 = vunpack.c.l.s4 1983009808
      %v3251 = vunpack.c.0.s8 %v3250
      %v3252 = vlaneseq
      %v3253 = vshrl.u32 %v3252, 7
      %v3254 = vsub.s32 %v3251, %v3253
      %v3255 = vrot.slane %v3247, %v3254
      %v3257 = vunpack.c.l.s4 1983009808
      %v3258 = vunpack.c.0.s8 %v3257
      %v3259 = vlaneseq
      %v3260 = vshrl.u32 %v3259, 7
      %v3261 = vsub.s32 %v3258, %v3260
      %v3262 = vrot.slane %v3248, %v3261
      %v3263 = vcombine.low %v3255, %v3262
      %v3265 = vadd.f32 %v2967, %v3263
      %v3266 = vxor.u32 %v2962, 2147483648
      %v3267 = vmul.f32 %v3266, 1.442695
      %v3268 = vpow.pop %v3267
      %v3269 = vadd.f32 %v3268, 1.0
      %v3270 = vrcp.pop %v3269
      %v3271 = vmul.f32 1.0, %v3270
      %v3273 = vrot.slane %v2962, 2
      %v3275 = vxor.u32 %v3273, 2147483648
      %v3276 = vmul.f32 %v3275, 1.442695
      %v3277 = vpow.pop %v3276
      %v3278 = vadd.f32 %v3277, 1.0
      %v3279 = vrcp.pop %v3278
      %v3280 = vmul.f32 1.0, %v3279
      %v3281 = vrot.slane %v2962, 4
      %v3283 = vtanh.pop %v3281
      %v3284 = vrot.slane %v2962, 6
      %v3286 = vxor.u32 %v3284, 2147483648
      %v3287 = vmul.f32 %v3286, 1.442695
      %v3288 = vpow.pop %v3287
      %v3289 = vadd.f32 %v3288, 1.0
      %v3290 = vrcp.pop %v3289
      %v3291 = vmul.f32 1.0, %v3290
      %v3292 = vmul.f32 %v3280, %v2620
      %v3293 = vmul.f32 %v3271, %v3283
      %v3294 = vadd.f32 %v3292, %v3293
      %v3295 = vtanh.pop %v3294
      %v3296 = vmul.f32 %v3291, %v3295
      %v3297 = vxor.u32 %v3265, 2147483648
      %v3298 = vmul.f32 %v3297, 1.442695
      %v3299 = vpow.pop %v3298
      %v3300 = vadd.f32 %v3299, 1.0
      %v3301 = vrcp.pop %v3300
      %v3302 = vmul.f32 1.0, %v3301
      %v3304 = vrot.slane %v3265, 2
      %v3306 = vxor.u32 %v3304, 2147483648
      %v3307 = vmul.f32 %v3306, 1.442695
      %v3308 = vpow.pop %v3307
      %v3309 = vadd.f32 %v3308, 1.0
      %v3310 = vrcp.pop %v3309
      %v3311 = vmul.f32 1.0, %v3310
      %v3312 = vrot.slane %v3265, 4
      %v3314 = vtanh.pop %v3312
      %v3315 = vrot.slane %v3265, 6
      %v3317 = vxor.u32 %v3315, 2147483648
      %v3318 = vmul.f32 %v3317, 1.442695
      %v3319 = vpow.pop %v3318
      %v3320 = vadd.f32 %v3319, 1.0
      %v3321 = vrcp.pop %v3320
      %v3322 = vmul.f32 1.0, %v3321
      %v3323 = vmul.f32 %v3311, %v2651
      %v3324 = vmul.f32 %v3302, %v3314
      %v3325 = vadd.f32 %v3323, %v3324
      %v3326 = vtanh.pop %v3325
      %v3327 = vmul.f32 %v3322, %v3326
      %s3328 = smul.u32 %s2660, 2
      %s3329 = scalar_lea.vmem [#allocation4], %s3328
      %3330 = vst [vmem:[%s3329] sm:$0x3] %v3296
      %s3331 = smul.u32 %s2963, 2
      %s3332 = scalar_lea.vmem [#allocation5], %s3331
      %3333 = vst [vmem:[%s3332] sm:$0x3] %v3327
    $region73: #{model_forward.1} parent=1 // loop_footer
      %s633 = sadd.s32 1, %s629
    $region74: #{model_forward.1} parent=1 // loop_footer_branch
      %628 = sbr.rel target = $region70
    $region75: #{model_forward.1} parent=1 // loop_exit
      _
    %v3334 = vld [vmem:[%s9] sm:$0xf]
    loop: start=0, step=1, limit=32
    $region76: #{model_forward.1} parent=1 // loop_pre_header
      _
    $region77: #{model_forward.1} parent=1 // loop_header
      %s3336 = sphi 0, %s3340
      %p3337 = scmp.ge.s32.totalorder %s3336, 32
    $region78: #{model_forward.1} parent=1 // loop_header_branch
      %3339 = sbr.rel (%p3337) target = $region82
    $region79: #{model_forward.1} parent=1 // loop_body
      %s3341 = smul.u32 %s3336, 2
      %s3342 = scalar_lea.vmem [#allocation4], %s3341
      %v3343 = vld [vmem:[%s3342] sm:$0x3]
      %v3344 = vpack.c.bf16 %v3343, %v3343
      %s3345 = scalar_lea.vmem [#allocation5], %s3341
      %v3346 = vld [vmem:[%s3345] sm:$0x3]
      %v3347 = vpack.c.bf16 %v3346, %v3346
      %v3348 = vld [vmem:[%s7] sm:$0xff]
      %v3349 = vld [vmem:[%s7 + $0x8] sm:$0xff]
      %v3350 = vld [vmem:[%s7 + $0x10] sm:$0xff]
      %v3351 = vld [vmem:[%s7 + $0x18] sm:$0xff]
      %v3352 = vld [vmem:[%s7 + $0x20] sm:$0xff]
      %v3353 = vld [vmem:[%s7 + $0x28] sm:$0xff]
      %v3354 = vld [vmem:[%s7 + $0x30] sm:$0xff]
      %v3355 = vld [vmem:[%s7 + $0x38] sm:$0xff]
      %v3356 = vld [vmem:[%s7 + $0x40] sm:$0xff]
      %v3357 = vld [vmem:[%s7 + $0x48] sm:$0xff]
      %v3358 = vld [vmem:[%s7 + $0x50] sm:$0xff]
      %v3359 = vld [vmem:[%s7 + $0x58] sm:$0xff]
      %v3360 = vld [vmem:[%s7 + $0x60] sm:$0xff]
      %v3361 = vld [vmem:[%s7 + $0x68] sm:$0xff]
      %v3362 = vld [vmem:[%s7 + $0x70] sm:$0xff]
      %v3363 = vld [vmem:[%s7 + $0x78] sm:$0xff]
      %v3364 = vld [vmem:[%s7 + $0x80] sm:$0xff]
      %v3365 = vld [vmem:[%s7 + $0x88] sm:$0xff]
      %v3366 = vld [vmem:[%s7 + $0x90] sm:$0xff]
      %v3367 = vld [vmem:[%s7 + $0x98] sm:$0xff]
      %v3368 = vld [vmem:[%s7 + $0xa0] sm:$0xff]
      %v3369 = vld [vmem:[%s7 + $0xa8] sm:$0xff]
      %v3370 = vld [vmem:[%s7 + $0xb0] sm:$0xff]
      %v3371 = vld [vmem:[%s7 + $0xb8] sm:$0xff]
      %v3372 = vld [vmem:[%s7 + $0xc0] sm:$0xff]
      %v3373 = vld [vmem:[%s7 + $0xc8] sm:$0xff]
      %v3374 = vld [vmem:[%s7 + $0xd0] sm:$0xff]
      %v3375 = vld [vmem:[%s7 + $0xd8] sm:$0xff]
      %v3376 = vld [vmem:[%s7 + $0xe0] sm:$0xff]
      %v3377 = vld [vmem:[%s7 + $0xe8] sm:$0xff]
      %v3378 = vld [vmem:[%s7 + $0xf0] sm:$0xff]
      %v3379 = vld [vmem:[%s7 + $0xf8] sm:$0xff]
      %v3380 = vld [vmem:[%s8] sm:$0xff]
      %v3381 = vld [vmem:[%s8 + $0x8] sm:$0xff]
      %v3382 = vld [vmem:[%s8 + $0x10] sm:$0xff]
      %v3383 = vld [vmem:[%s8 + $0x18] sm:$0xff]
      %v3384 = vld [vmem:[%s8 + $0x20] sm:$0xff]
      %v3385 = vld [vmem:[%s8 + $0x28] sm:$0xff]
      %v3386 = vld [vmem:[%s8 + $0x30] sm:$0xff]
      %v3387 = vld [vmem:[%s8 + $0x38] sm:$0xff]
      %v3388 = vld [vmem:[%s8 + $0x40] sm:$0xff]
      %v3389 = vld [vmem:[%s8 + $0x48] sm:$0xff]
      %v3390 = vld [vmem:[%s8 + $0x50] sm:$0xff]
      %v3391 = vld [vmem:[%s8 + $0x58] sm:$0xff]
      %v3392 = vld [vmem:[%s8 + $0x60] sm:$0xff]
      %v3393 = vld [vmem:[%s8 + $0x68] sm:$0xff]
      %v3394 = vld [vmem:[%s8 + $0x70] sm:$0xff]
      %v3395 = vld [vmem:[%s8 + $0x78] sm:$0xff]
      %v3396 = vld [vmem:[%s8 + $0x80] sm:$0xff]
      %v3397 = vld [vmem:[%s8 + $0x88] sm:$0xff]
      %v3398 = vld [vmem:[%s8 + $0x90] sm:$0xff]
      %v3399 = vld [vmem:[%s8 + $0x98] sm:$0xff]
      %v3400 = vld [vmem:[%s8 + $0xa0] sm:$0xff]
      %v3401 = vld [vmem:[%s8 + $0xa8] sm:$0xff]
      %v3402 = vld [vmem:[%s8 + $0xb0] sm:$0xff]
      %v3403 = vld [vmem:[%s8 + $0xb8] sm:$0xff]
      %v3404 = vld [vmem:[%s8 + $0xc0] sm:$0xff]
      %v3405 = vld [vmem:[%s8 + $0xc8] sm:$0xff]
      %v3406 = vld [vmem:[%s8 + $0xd0] sm:$0xff]
      %v3407 = vld [vmem:[%s8 + $0xd8] sm:$0xff]
      %v3408 = vld [vmem:[%s8 + $0xe0] sm:$0xff]
      %v3409 = vld [vmem:[%s8 + $0xe8] sm:$0xff]
      %v3410 = vld [vmem:[%s8 + $0xf0] sm:$0xff]
      %v3411 = vld [vmem:[%s8 + $0xf8] sm:$0xff]
      %v3444 = vunpack.c.l.b16 %v3380
      %v3445 = vunpack.c.h.b16 %v3380
      %v3446 = vunpack.c.l.b16 %v3381
      %v3447 = vunpack.c.h.b16 %v3381
      %v3448 = vunpack.c.l.b16 %v3382
      %v3449 = vunpack.c.h.b16 %v3382
      %v3450 = vunpack.c.l.b16 %v3383
      %v3451 = vunpack.c.h.b16 %v3383
      %v3452 = vunpack.c.l.b16 %v3384
      %v3453 = vunpack.c.h.b16 %v3384
      %v3454 = vunpack.c.l.b16 %v3385
      %v3455 = vunpack.c.h.b16 %v3385
      %v3456 = vunpack.c.l.b16 %v3386
      %v3457 = vunpack.c.h.b16 %v3386
      %v3458 = vunpack.c.l.b16 %v3387
      %v3459 = vunpack.c.h.b16 %v3387
      %v3460 = vunpack.c.l.b16 %v3388
      %v3461 = vunpack.c.h.b16 %v3388
      %v3462 = vunpack.c.l.b16 %v3389
      %v3463 = vunpack.c.h.b16 %v3389
      %v3464 = vunpack.c.l.b16 %v3390
      %v3465 = vunpack.c.h.b16 %v3390
      %v3466 = vunpack.c.l.b16 %v3391
      %v3467 = vunpack.c.h.b16 %v3391
      %v3468 = vunpack.c.l.b16 %v3392
      %v3469 = vunpack.c.h.b16 %v3392
      %v3470 = vunpack.c.l.b16 %v3393
      %v3471 = vunpack.c.h.b16 %v3393
      %v3472 = vunpack.c.l.b16 %v3394
      %v3473 = vunpack.c.h.b16 %v3394
      %v3474 = vunpack.c.l.b16 %v3395
      %v3475 = vunpack.c.h.b16 %v3395
      %v3476 = vunpack.c.l.b16 %v3396
      %v3477 = vunpack.c.h.b16 %v3396
      %v3478 = vunpack.c.l.b16 %v3397
      %v3479 = vunpack.c.h.b16 %v3397
      %v3480 = vunpack.c.l.b16 %v3398
      %v3481 = vunpack.c.h.b16 %v3398
      %v3482 = vunpack.c.l.b16 %v3399
      %v3483 = vunpack.c.h.b16 %v3399
      %v3484 = vunpack.c.l.b16 %v3400
      %v3485 = vunpack.c.h.b16 %v3400
      %v3486 = vunpack.c.l.b16 %v3401
      %v3487 = vunpack.c.h.b16 %v3401
      %v3488 = vunpack.c.l.b16 %v3402
      %v3489 = vunpack.c.h.b16 %v3402
      %v3490 = vunpack.c.l.b16 %v3403
      %v3491 = vunpack.c.h.b16 %v3403
      %v3492 = vunpack.c.l.b16 %v3404
      %v3493 = vunpack.c.h.b16 %v3404
      %v3494 = vunpack.c.l.b16 %v3405
      %v3495 = vunpack.c.h.b16 %v3405
      %v3496 = vunpack.c.l.b16 %v3406
      %v3497 = vunpack.c.h.b16 %v3406
      %v3498 = vunpack.c.l.b16 %v3407
      %v3499 = vunpack.c.h.b16 %v3407
      %v3500 = vunpack.c.l.b16 %v3408
      %v3501 = vunpack.c.h.b16 %v3408
      %v3502 = vunpack.c.l.b16 %v3409
      %v3503 = vunpack.c.h.b16 %v3409
      %v3504 = vunpack.c.l.b16 %v3410
      %v3505 = vunpack.c.h.b16 %v3410
      %v3506 = vunpack.c.l.b16 %v3411
      %v3507 = vunpack.c.h.b16 %v3411
      %v3508 = vpack.c.b16 %v3448, %v3444
      %v3509 = vpack.c.b16 %v3449, %v3445
      %v3510 = vpack.c.b16 %v3450, %v3446
      %v3511 = vpack.c.b16 %v3451, %v3447
      %v3512 = vpack.c.b16 %v3456, %v3452
      %v3513 = vpack.c.b16 %v3457, %v3453
      %v3514 = vpack.c.b16 %v3458, %v3454
      %v3515 = vpack.c.b16 %v3459, %v3455
      %v3516 = vpack.c.b16 %v3464, %v3460
      %v3517 = vpack.c.b16 %v3465, %v3461
      %v3518 = vpack.c.b16 %v3466, %v3462
      %v3519 = vpack.c.b16 %v3467, %v3463
      %v3520 = vpack.c.b16 %v3472, %v3468
      %v3521 = vpack.c.b16 %v3473, %v3469
      %v3522 = vpack.c.b16 %v3474, %v3470
      %v3523 = vpack.c.b16 %v3475, %v3471
      %v3524 = vpack.c.b16 %v3480, %v3476
      %v3525 = vpack.c.b16 %v3481, %v3477
      %v3526 = vpack.c.b16 %v3482, %v3478
      %v3527 = vpack.c.b16 %v3483, %v3479
      %v3528 = vpack.c.b16 %v3488, %v3484
      %v3529 = vpack.c.b16 %v3489, %v3485
      %v3530 = vpack.c.b16 %v3490, %v3486
      %v3531 = vpack.c.b16 %v3491, %v3487
      %v3532 = vpack.c.b16 %v3496, %v3492
      %v3533 = vpack.c.b16 %v3497, %v3493
      %v3534 = vpack.c.b16 %v3498, %v3494
      %v3535 = vpack.c.b16 %v3499, %v3495
      %v3536 = vpack.c.b16 %v3504, %v3500
      %v3537 = vpack.c.b16 %v3505, %v3501
      %v3538 = vpack.c.b16 %v3506, %v3502
      %v3539 = vpack.c.b16 %v3507, %v3503
      %3572 = vmatprep.subr.bf16.mxu0 %v3509
      %3573 = vmatpush1.bf16.msra.mxu0 %v3508
      %3574 = vmatprep.subr.bf16.mxu0 %v3513
      %3575 = vmatpush1.bf16.msra.mxu0 %v3512
      %3576 = vmatprep.subr.bf16.mxu0 %v3517
      %3577 = vmatpush1.bf16.msra.mxu0 %v3516
      %3578 = vmatprep.subr.bf16.mxu0 %v3521
      %3579 = vmatpush1.bf16.msra.mxu0 %v3520
      %3580 = vmatprep.subr.bf16.mxu0 %v3525
      %3581 = vmatpush1.bf16.msra.mxu0 %v3524
      %3582 = vmatprep.subr.bf16.mxu0 %v3529
      %3583 = vmatpush1.bf16.msra.mxu0 %v3528
      %3584 = vmatprep.subr.bf16.mxu0 %v3533
      %3585 = vmatpush1.bf16.msra.mxu0 %v3532
      %3586 = vmatprep.subr.bf16.mxu0 %v3537
      %3587 = vmatpush1.bf16.msra.mxu0 %v3536
      %3588 = vmatprep.subr.bf16.mxu0 0
      %3589 = vmatpush1.bf16.msra.mxu0 0
      %3590 = vmatprep.subr.bf16.mxu0 0
      %3591 = vmatpush1.bf16.msra.mxu0 0
      %3592 = vmatprep.subr.bf16.mxu0 0
      %3593 = vmatpush1.bf16.msra.mxu0 0
      %3594 = vmatprep.subr.bf16.mxu0 0
      %3595 = vmatpush1.bf16.msra.mxu0 0
      %3596 = vmatprep.subr.bf16.mxu0 0
      %3597 = vmatpush1.bf16.msra.mxu0 0
      %3598 = vmatprep.subr.bf16.mxu0 0
      %3599 = vmatpush1.bf16.msra.mxu0 0
      %3600 = vmatprep.subr.bf16.mxu0 0
      %3601 = vmatpush1.bf16.msra.mxu0 0
      %3602 = vmatprep.subr.bf16.mxu0 0
      %3603 = vmatpush1.bf16.msra.mxu0 0
      %3604 = vmatprep.mubr.bf16.mxu0 0
      %3605 = vmatmul.mubr.bf16.gmra.mrb[0].mxu0 %v3347
      %v3606 = vpop.f32.mrb[0].mxu0
      %v3607 = vadd.f32 0.0, %v3606
      %v3608 = vpop.f32.mrb[0].mxu0
      %v3609 = vadd.f32 0.0, %v3608
      %v3610 = vpop.f32.mrb[0].mxu0
      %v3611 = vpop.f32.mrb[0].mxu0
      %3612 = vdwg.mxu0
      %3613 = vmatprep.subr.bf16.mxu0 %v3511
      %3614 = vmatpush1.bf16.msra.mxu0 %v3510
      %3615 = vmatprep.subr.bf16.mxu0 %v3515
      %3616 = vmatpush1.bf16.msra.mxu0 %v3514
      %3617 = vmatprep.subr.bf16.mxu0 %v3519
      %3618 = vmatpush1.bf16.msra.mxu0 %v3518
      %3619 = vmatprep.subr.bf16.mxu0 %v3523
      %3620 = vmatpush1.bf16.msra.mxu0 %v3522
      %3621 = vmatprep.subr.bf16.mxu0 %v3527
      %3622 = vmatpush1.bf16.msra.mxu0 %v3526
      %3623 = vmatprep.subr.bf16.mxu0 %v3531
      %3624 = vmatpush1.bf16.msra.mxu0 %v3530
      %3625 = vmatprep.subr.bf16.mxu0 %v3535
      %3626 = vmatpush1.bf16.msra.mxu0 %v3534
      %3627 = vmatprep.subr.bf16.mxu0 %v3539
      %3628 = vmatpush1.bf16.msra.mxu0 %v3538
      %3629 = vmatprep.subr.bf16.mxu0 0
      %3630 = vmatpush1.bf16.msra.mxu0 0
      %3631 = vmatprep.subr.bf16.mxu0 0
      %3632 = vmatpush1.bf16.msra.mxu0 0
      %3633 = vmatprep.subr.bf16.mxu0 0
      %3634 = vmatpush1.bf16.msra.mxu0 0
      %3635 = vmatprep.subr.bf16.mxu0 0
      %3636 = vmatpush1.bf16.msra.mxu0 0
      %3637 = vmatprep.subr.bf16.mxu0 0
      %3638 = vmatpush1.bf16.msra.mxu0 0
      %3639 = vmatprep.subr.bf16.mxu0 0
      %3640 = vmatpush1.bf16.msra.mxu0 0
      %3641 = vmatprep.subr.bf16.mxu0 0
      %3642 = vmatpush1.bf16.msra.mxu0 0
      %3643 = vmatprep.subr.bf16.mxu0 0
      %3644 = vmatpush1.bf16.msra.mxu0 0
      %3645 = vmatprep.mubr.bf16.mxu0 0
      %3646 = vmatmul.mubr.bf16.gmra.mrb[0].mxu0 %v3347
      %v3647 = vpop.f32.mrb[0].mxu0
      %v3648 = vadd.f32 0.0, %v3647
      %v3649 = vpop.f32.mrb[0].mxu0
      %v3650 = vadd.f32 0.0, %v3649
      %v3651 = vpop.f32.mrb[0].mxu0
      %v3652 = vpop.f32.mrb[0].mxu0
      %3653 = vdwg.mxu0
      %v3686 = vunpack.c.l.b16 %v3348
      %v3687 = vunpack.c.h.b16 %v3348
      %v3688 = vunpack.c.l.b16 %v3349
      %v3689 = vunpack.c.h.b16 %v3349
      %v3690 = vunpack.c.l.b16 %v3350
      %v3691 = vunpack.c.h.b16 %v3350
      %v3692 = vunpack.c.l.b16 %v3351
      %v3693 = vunpack.c.h.b16 %v3351
      %v3694 = vunpack.c.l.b16 %v3352
      %v3695 = vunpack.c.h.b16 %v3352
      %v3696 = vunpack.c.l.b16 %v3353
      %v3697 = vunpack.c.h.b16 %v3353
      %v3698 = vunpack.c.l.b16 %v3354
      %v3699 = vunpack.c.h.b16 %v3354
      %v3700 = vunpack.c.l.b16 %v3355
      %v3701 = vunpack.c.h.b16 %v3355
      %v3702 = vunpack.c.l.b16 %v3356
      %v3703 = vunpack.c.h.b16 %v3356
      %v3704 = vunpack.c.l.b16 %v3357
      %v3705 = vunpack.c.h.b16 %v3357
      %v3706 = vunpack.c.l.b16 %v3358
      %v3707 = vunpack.c.h.b16 %v3358
      %v3708 = vunpack.c.l.b16 %v3359
      %v3709 = vunpack.c.h.b16 %v3359
      %v3710 = vunpack.c.l.b16 %v3360
      %v3711 = vunpack.c.h.b16 %v3360
      %v3712 = vunpack.c.l.b16 %v3361
      %v3713 = vunpack.c.h.b16 %v3361
      %v3714 = vunpack.c.l.b16 %v3362
      %v3715 = vunpack.c.h.b16 %v3362
      %v3716 = vunpack.c.l.b16 %v3363
      %v3717 = vunpack.c.h.b16 %v3363
      %v3718 = vunpack.c.l.b16 %v3364
      %v3719 = vunpack.c.h.b16 %v3364
      %v3720 = vunpack.c.l.b16 %v3365
      %v3721 = vunpack.c.h.b16 %v3365
      %v3722 = vunpack.c.l.b16 %v3366
      %v3723 = vunpack.c.h.b16 %v3366
      %v3724 = vunpack.c.l.b16 %v3367
      %v3725 = vunpack.c.h.b16 %v3367
      %v3726 = vunpack.c.l.b16 %v3368
      %v3727 = vunpack.c.h.b16 %v3368
      %v3728 = vunpack.c.l.b16 %v3369
      %v3729 = vunpack.c.h.b16 %v3369
      %v3730 = vunpack.c.l.b16 %v3370
      %v3731 = vunpack.c.h.b16 %v3370
      %v3732 = vunpack.c.l.b16 %v3371
      %v3733 = vunpack.c.h.b16 %v3371
      %v3734 = vunpack.c.l.b16 %v3372
      %v3735 = vunpack.c.h.b16 %v3372
      %v3736 = vunpack.c.l.b16 %v3373
      %v3737 = vunpack.c.h.b16 %v3373
      %v3738 = vunpack.c.l.b16 %v3374
      %v3739 = vunpack.c.h.b16 %v3374
      %v3740 = vunpack.c.l.b16 %v3375
      %v3741 = vunpack.c.h.b16 %v3375
      %v3742 = vunpack.c.l.b16 %v3376
      %v3743 = vunpack.c.h.b16 %v3376
      %v3744 = vunpack.c.l.b16 %v3377
      %v3745 = vunpack.c.h.b16 %v3377
      %v3746 = vunpack.c.l.b16 %v3378
      %v3747 = vunpack.c.h.b16 %v3378
      %v3748 = vunpack.c.l.b16 %v3379
      %v3749 = vunpack.c.h.b16 %v3379
      %v3750 = vpack.c.b16 %v3690, %v3686
      %v3751 = vpack.c.b16 %v3691, %v3687
      %v3752 = vpack.c.b16 %v3692, %v3688
      %v3753 = vpack.c.b16 %v3693, %v3689
      %v3754 = vpack.c.b16 %v3698, %v3694
      %v3755 = vpack.c.b16 %v3699, %v3695
      %v3756 = vpack.c.b16 %v3700, %v3696
      %v3757 = vpack.c.b16 %v3701, %v3697
      %v3758 = vpack.c.b16 %v3706, %v3702
      %v3759 = vpack.c.b16 %v3707, %v3703
      %v3760 = vpack.c.b16 %v3708, %v3704
      %v3761 = vpack.c.b16 %v3709, %v3705
      %v3762 = vpack.c.b16 %v3714, %v3710
      %v3763 = vpack.c.b16 %v3715, %v3711
      %v3764 = vpack.c.b16 %v3716, %v3712
      %v3765 = vpack.c.b16 %v3717, %v3713
      %v3766 = vpack.c.b16 %v3722, %v3718
      %v3767 = vpack.c.b16 %v3723, %v3719
      %v3768 = vpack.c.b16 %v3724, %v3720
      %v3769 = vpack.c.b16 %v3725, %v3721
      %v3770 = vpack.c.b16 %v3730, %v3726
      %v3771 = vpack.c.b16 %v3731, %v3727
      %v3772 = vpack.c.b16 %v3732, %v3728
      %v3773 = vpack.c.b16 %v3733, %v3729
      %v3774 = vpack.c.b16 %v3738, %v3734
      %v3775 = vpack.c.b16 %v3739, %v3735
      %v3776 = vpack.c.b16 %v3740, %v3736
      %v3777 = vpack.c.b16 %v3741, %v3737
      %v3778 = vpack.c.b16 %v3746, %v3742
      %v3779 = vpack.c.b16 %v3747, %v3743
      %v3780 = vpack.c.b16 %v3748, %v3744
      %v3781 = vpack.c.b16 %v3749, %v3745
      %3814 = vmatprep.subr.bf16.mxu0 %v3751
      %3815 = vmatpush1.bf16.msra.mxu0 %v3750
      %3816 = vmatprep.subr.bf16.mxu0 %v3755
      %3817 = vmatpush1.bf16.msra.mxu0 %v3754
      %3818 = vmatprep.subr.bf16.mxu0 %v3759
      %3819 = vmatpush1.bf16.msra.mxu0 %v3758
      %3820 = vmatprep.subr.bf16.mxu0 %v3763
      %3821 = vmatpush1.bf16.msra.mxu0 %v3762
      %3822 = vmatprep.subr.bf16.mxu0 %v3767
      %3823 = vmatpush1.bf16.msra.mxu0 %v3766
      %3824 = vmatprep.subr.bf16.mxu0 %v3771
      %3825 = vmatpush1.bf16.msra.mxu0 %v3770
      %3826 = vmatprep.subr.bf16.mxu0 %v3775
      %3827 = vmatpush1.bf16.msra.mxu0 %v3774
      %3828 = vmatprep.subr.bf16.mxu0 %v3779
      %3829 = vmatpush1.bf16.msra.mxu0 %v3778
      %3830 = vmatprep.subr.bf16.mxu0 0
      %3831 = vmatpush1.bf16.msra.mxu0 0
      %3832 = vmatprep.subr.bf16.mxu0 0
      %3833 = vmatpush1.bf16.msra.mxu0 0
      %3834 = vmatprep.subr.bf16.mxu0 0
      %3835 = vmatpush1.bf16.msra.mxu0 0
      %3836 = vmatprep.subr.bf16.mxu0 0
      %3837 = vmatpush1.bf16.msra.mxu0 0
      %3838 = vmatprep.subr.bf16.mxu0 0
      %3839 = vmatpush1.bf16.msra.mxu0 0
      %3840 = vmatprep.subr.bf16.mxu0 0
      %3841 = vmatpush1.bf16.msra.mxu0 0
      %3842 = vmatprep.subr.bf16.mxu0 0
      %3843 = vmatpush1.bf16.msra.mxu0 0
      %3844 = vmatprep.subr.bf16.mxu0 0
      %3845 = vmatpush1.bf16.msra.mxu0 0
      %3846 = vmatprep.mubr.bf16.mxu0 0
      %3847 = vmatmul.mubr.bf16.gmra.mrb[0].mxu0 %v3344
      %v3848 = vpop.f32.mrb[0].mxu0
      %v3849 = vadd.f32 %v3607, %v3848
      %v3850 = vpop.f32.mrb[0].mxu0
      %v3851 = vadd.f32 %v3609, %v3850
      %v3852 = vpop.f32.mrb[0].mxu0
      %v3853 = vpop.f32.mrb[0].mxu0
      %3854 = vdwg.mxu0
      %3855 = vmatprep.subr.bf16.mxu0 %v3753
      %3856 = vmatpush1.bf16.msra.mxu0 %v3752
      %3857 = vmatprep.subr.bf16.mxu0 %v3757
      %3858 = vmatpush1.bf16.msra.mxu0 %v3756
      %3859 = vmatprep.subr.bf16.mxu0 %v3761
      %3860 = vmatpush1.bf16.msra.mxu0 %v3760
      %3861 = vmatprep.subr.bf16.mxu0 %v3765
      %3862 = vmatpush1.bf16.msra.mxu0 %v3764
      %3863 = vmatprep.subr.bf16.mxu0 %v3769
      %3864 = vmatpush1.bf16.msra.mxu0 %v3768
      %3865 = vmatprep.subr.bf16.mxu0 %v3773
      %3866 = vmatpush1.bf16.msra.mxu0 %v3772
      %3867 = vmatprep.subr.bf16.mxu0 %v3777
      %3868 = vmatpush1.bf16.msra.mxu0 %v3776
      %3869 = vmatprep.subr.bf16.mxu0 %v3781
      %3870 = vmatpush1.bf16.msra.mxu0 %v3780
      %3871 = vmatprep.subr.bf16.mxu0 0
      %3872 = vmatpush1.bf16.msra.mxu0 0
      %3873 = vmatprep.subr.bf16.mxu0 0
      %3874 = vmatpush1.bf16.msra.mxu0 0
      %3875 = vmatprep.subr.bf16.mxu0 0
      %3876 = vmatpush1.bf16.msra.mxu0 0
      %3877 = vmatprep.subr.bf16.mxu0 0
      %3878 = vmatpush1.bf16.msra.mxu0 0
      %3879 = vmatprep.subr.bf16.mxu0 0
      %3880 = vmatpush1.bf16.msra.mxu0 0
      %3881 = vmatprep.subr.bf16.mxu0 0
      %3882 = vmatpush1.bf16.msra.mxu0 0
      %3883 = vmatprep.subr.bf16.mxu0 0
      %3884 = vmatpush1.bf16.msra.mxu0 0
      %3885 = vmatprep.subr.bf16.mxu0 0
      %3886 = vmatpush1.bf16.msra.mxu0 0
      %3887 = vmatprep.mubr.bf16.mxu0 0
      %3888 = vmatmul.mubr.bf16.gmra.mrb[0].mxu0 %v3344
      %v3889 = vpop.f32.mrb[0].mxu0
      %v3890 = vadd.f32 %v3648, %v3889
      %v3891 = vpop.f32.mrb[0].mxu0
      %v3892 = vadd.f32 %v3650, %v3891
      %v3893 = vpop.f32.mrb[0].mxu0
      %v3894 = vpop.f32.mrb[0].mxu0
      %3895 = vdwg.mxu0
      %v3897 = vlaneseq
      %v3898 = vshrl.u32 %v3897, 7
      %v3899 = vsub.s32 0, %v3898
      %v3900 = vrot.slane %v3334, %v3899
      %v3901 = vlaneseq
      %v3902 = vshrl.u32 %v3901, 7
      %v3903 = vsub.s32 1, %v3902
      %v3904 = vrot.slane %v3334, %v3903
      %v3905 = vlaneseq
      %v3906 = vshrl.u32 %v3905, 7
      %v3907 = vsub.s32 2, %v3906
      %v3908 = vrot.slane %v3334, %v3907
      %v3909 = vlaneseq
      %v3910 = vshrl.u32 %v3909, 7
      %v3911 = vsub.s32 3, %v3910
      %v3912 = vrot.slane %v3334, %v3911
      %v3917 = vadd.f32 %v3849, %v3900
      %v3918 = vadd.f32 %v3851, %v3904
      %v3919 = vadd.f32 %v3890, %v3908
      %v3920 = vadd.f32 %v3892, %v3912
      %v3925 = vcombine.low %v3917, %v3918
      %v3926 = vcombine.low %v3919, %v3920
      %v3928 = vunpack.c.l.s4 1983009808
      %v3929 = vunpack.c.0.s8 %v3928
      %v3930 = vlaneseq
      %v3931 = vshrl.u32 %v3930, 7
      %v3932 = vsub.s32 %v3929, %v3931
      %v3933 = vrot.slane %v3925, %v3932
      %v3935 = vunpack.c.l.s4 1983009808
      %v3936 = vunpack.c.0.s8 %v3935
      %v3937 = vlaneseq
      %v3938 = vshrl.u32 %v3937, 7
      %v3939 = vsub.s32 %v3936, %v3938
      %v3940 = vrot.slane %v3926, %v3939
      %v3941 = vcombine.low %v3933, %v3940
      %s3943 = smul.u32 %s3336, 4
      %s3944 = smul.addr %s3943, 2
      %s3945 = scalar_lea.vmem [#allocation6], %s3944
      %3946 = vst [vmem:[%s3945] sm:$0xff] %v3941
    $region80: #{model_forward.1} parent=1 // loop_footer
      %s3340 = sadd.s32 1, %s3336
    $region81: #{model_forward.1} parent=1 // loop_footer_branch
      %3335 = sbr.rel target = $region77
    $region82: #{model_forward.1} parent=1 // loop_exit
      _
    loop: start=0, step=1, limit=8
    $region83: #{model_forward.1} parent=1 // loop_pre_header
      _
    $region84: #{model_forward.1} parent=1 // loop_header
      %s3948 = sphi 0, %s3952
      %p3949 = scmp.ge.s32.totalorder %s3948, 8
      %v3953 = vphi 0.0, %v4782
      %v3954 = vphi 0.0, %v4780
      %v3955 = vphi 0.0, %v4804
    $region85: #{model_forward.1} parent=1 // loop_header_branch
      %3951 = sbr.rel (%p3949) target = $region89
    $region86: #{model_forward.1} parent=1 // loop_body
      %s3956 = smul.u32 %s3948, 4
      %s3957 = ssub.s32 31, %s3956
      %s3958 = smul.u32 %s3957, 4
      %s3959 = smul.addr %s3958, 2
      %s3960 = scalar_lea.vmem [#allocation6], %s3959
      %v3961 = vld [vmem:[%s3960] sm:$0xff]
      %v3962 = vpack.c.bf16 %v3953, %v3953
      %v3963 = vld [vmem:[%s10] sm:$0xff]
      %v3964 = vld [vmem:[%s10 + $0x8] sm:$0xff]
      %v3965 = vld [vmem:[%s10 + $0x10] sm:$0xff]
      %v3966 = vld [vmem:[%s10 + $0x18] sm:$0xff]
      %v3967 = vld [vmem:[%s10 + $0x20] sm:$0xff]
      %v3968 = vld [vmem:[%s10 + $0x28] sm:$0xff]
      %v3969 = vld [vmem:[%s10 + $0x30] sm:$0xff]
      %v3970 = vld [vmem:[%s10 + $0x38] sm:$0xff]
      %v3971 = vld [vmem:[%s10 + $0x40] sm:$0xff]
      %v3972 = vld [vmem:[%s10 + $0x48] sm:$0xff]
      %v3973 = vld [vmem:[%s10 + $0x50] sm:$0xff]
      %v3974 = vld [vmem:[%s10 + $0x58] sm:$0xff]
      %v3975 = vld [vmem:[%s10 + $0x60] sm:$0xff]
      %v3976 = vld [vmem:[%s10 + $0x68] sm:$0xff]
      %v3977 = vld [vmem:[%s10 + $0x70] sm:$0xff]
      %v3978 = vld [vmem:[%s10 + $0x78] sm:$0xff]
      %v3979 = vld [vmem:[%s10 + $0x80] sm:$0xff]
      %v3980 = vld [vmem:[%s10 + $0x88] sm:$0xff]
      %v3981 = vld [vmem:[%s10 + $0x90] sm:$0xff]
      %v3982 = vld [vmem:[%s10 + $0x98] sm:$0xff]
      %v3983 = vld [vmem:[%s10 + $0xa0] sm:$0xff]
      %v3984 = vld [vmem:[%s10 + $0xa8] sm:$0xff]
      %v3985 = vld [vmem:[%s10 + $0xb0] sm:$0xff]
      %v3986 = vld [vmem:[%s10 + $0xb8] sm:$0xff]
      %v3987 = vld [vmem:[%s10 + $0xc0] sm:$0xff]
      %v3988 = vld [vmem:[%s10 + $0xc8] sm:$0xff]
      %v3989 = vld [vmem:[%s10 + $0xd0] sm:$0xff]
      %v3990 = vld [vmem:[%s10 + $0xd8] sm:$0xff]
      %v3991 = vld [vmem:[%s10 + $0xe0] sm:$0xff]
      %v3992 = vld [vmem:[%s10 + $0xe8] sm:$0xff]
      %v3993 = vld [vmem:[%s10 + $0xf0] sm:$0xff]
      %v3994 = vld [vmem:[%s10 + $0xf8] sm:$0xff]
      %v4027 = vunpack.c.l.b16 %v3963
      %v4028 = vunpack.c.h.b16 %v3963
      %v4029 = vunpack.c.l.b16 %v3964
      %v4030 = vunpack.c.h.b16 %v3964
      %v4031 = vunpack.c.l.b16 %v3965
      %v4032 = vunpack.c.h.b16 %v3965
      %v4033 = vunpack.c.l.b16 %v3966
      %v4034 = vunpack.c.h.b16 %v3966
      %v4035 = vunpack.c.l.b16 %v3967
      %v4036 = vunpack.c.h.b16 %v3967
      %v4037 = vunpack.c.l.b16 %v3968
      %v4038 = vunpack.c.h.b16 %v3968
      %v4039 = vunpack.c.l.b16 %v3969
      %v4040 = vunpack.c.h.b16 %v3969
      %v4041 = vunpack.c.l.b16 %v3970
      %v4042 = vunpack.c.h.b16 %v3970
      %v4043 = vunpack.c.l.b16 %v3971
      %v4044 = vunpack.c.h.b16 %v3971
      %v4045 = vunpack.c.l.b16 %v3972
      %v4046 = vunpack.c.h.b16 %v3972
      %v4047 = vunpack.c.l.b16 %v3973
      %v4048 = vunpack.c.h.b16 %v3973
      %v4049 = vunpack.c.l.b16 %v3974
      %v4050 = vunpack.c.h.b16 %v3974
      %v4051 = vunpack.c.l.b16 %v3975
      %v4052 = vunpack.c.h.b16 %v3975
      %v4053 = vunpack.c.l.b16 %v3976
      %v4054 = vunpack.c.h.b16 %v3976
      %v4055 = vunpack.c.l.b16 %v3977
      %v4056 = vunpack.c.h.b16 %v3977
      %v4057 = vunpack.c.l.b16 %v3978
      %v4058 = vunpack.c.h.b16 %v3978
      %v4059 = vunpack.c.l.b16 %v3979
      %v4060 = vunpack.c.h.b16 %v3979
      %v4061 = vunpack.c.l.b16 %v3980
      %v4062 = vunpack.c.h.b16 %v3980
      %v4063 = vunpack.c.l.b16 %v3981
      %v4064 = vunpack.c.h.b16 %v3981
      %v4065 = vunpack.c.l.b16 %v3982
      %v4066 = vunpack.c.h.b16 %v3982
      %v4067 = vunpack.c.l.b16 %v3983
      %v4068 = vunpack.c.h.b16 %v3983
      %v4069 = vunpack.c.l.b16 %v3984
      %v4070 = vunpack.c.h.b16 %v3984
      %v4071 = vunpack.c.l.b16 %v3985
      %v4072 = vunpack.c.h.b16 %v3985
      %v4073 = vunpack.c.l.b16 %v3986
      %v4074 = vunpack.c.h.b16 %v3986
      %v4075 = vunpack.c.l.b16 %v3987
      %v4076 = vunpack.c.h.b16 %v3987
      %v4077 = vunpack.c.l.b16 %v3988
      %v4078 = vunpack.c.h.b16 %v3988
      %v4079 = vunpack.c.l.b16 %v3989
      %v4080 = vunpack.c.h.b16 %v3989
      %v4081 = vunpack.c.l.b16 %v3990
      %v4082 = vunpack.c.h.b16 %v3990
      %v4083 = vunpack.c.l.b16 %v3991
      %v4084 = vunpack.c.h.b16 %v3991
      %v4085 = vunpack.c.l.b16 %v3992
      %v4086 = vunpack.c.h.b16 %v3992
      %v4087 = vunpack.c.l.b16 %v3993
      %v4088 = vunpack.c.h.b16 %v3993
      %v4089 = vunpack.c.l.b16 %v3994
      %v4090 = vunpack.c.h.b16 %v3994
      %v4091 = vpack.c.b16 %v4031, %v4027
      %v4092 = vpack.c.b16 %v4032, %v4028
      %v4093 = vpack.c.b16 %v4033, %v4029
      %v4094 = vpack.c.b16 %v4034, %v4030
      %v4095 = vpack.c.b16 %v4039, %v4035
      %v4096 = vpack.c.b16 %v4040, %v4036
      %v4097 = vpack.c.b16 %v4041, %v4037
      %v4098 = vpack.c.b16 %v4042, %v4038
      %v4099 = vpack.c.b16 %v4047, %v4043
      %v4100 = vpack.c.b16 %v4048, %v4044
      %v4101 = vpack.c.b16 %v4049, %v4045
      %v4102 = vpack.c.b16 %v4050, %v4046
      %v4103 = vpack.c.b16 %v4055, %v4051
      %v4104 = vpack.c.b16 %v4056, %v4052
      %v4105 = vpack.c.b16 %v4057, %v4053
      %v4106 = vpack.c.b16 %v4058, %v4054
      %v4107 = vpack.c.b16 %v4063, %v4059
      %v4108 = vpack.c.b16 %v4064, %v4060
      %v4109 = vpack.c.b16 %v4065, %v4061
      %v4110 = vpack.c.b16 %v4066, %v4062
      %v4111 = vpack.c.b16 %v4071, %v4067
      %v4112 = vpack.c.b16 %v4072, %v4068
      %v4113 = vpack.c.b16 %v4073, %v4069
      %v4114 = vpack.c.b16 %v4074, %v4070
      %v4115 = vpack.c.b16 %v4079, %v4075
      %v4116 = vpack.c.b16 %v4080, %v4076
      %v4117 = vpack.c.b16 %v4081, %v4077
      %v4118 = vpack.c.b16 %v4082, %v4078
      %v4119 = vpack.c.b16 %v4087, %v4083
      %v4120 = vpack.c.b16 %v4088, %v4084
      %v4121 = vpack.c.b16 %v4089, %v4085
      %v4122 = vpack.c.b16 %v4090, %v4086
      %4155 = vmatprep.subr.bf16.mxu0 %v4092
      %4156 = vmatpush1.bf16.msra.mxu0 %v4091
      %4157 = vmatprep.subr.bf16.mxu0 %v4096
      %4158 = vmatpush1.bf16.msra.mxu0 %v4095
      %4159 = vmatprep.subr.bf16.mxu0 %v4100
      %4160 = vmatpush1.bf16.msra.mxu0 %v4099
      %4161 = vmatprep.subr.bf16.mxu0 %v4104
      %4162 = vmatpush1.bf16.msra.mxu0 %v4103
      %4163 = vmatprep.subr.bf16.mxu0 %v4108
      %4164 = vmatpush1.bf16.msra.mxu0 %v4107
      %4165 = vmatprep.subr.bf16.mxu0 %v4112
      %4166 = vmatpush1.bf16.msra.mxu0 %v4111
      %4167 = vmatprep.subr.bf16.mxu0 %v4116
      %4168 = vmatpush1.bf16.msra.mxu0 %v4115
      %4169 = vmatprep.subr.bf16.mxu0 %v4120
      %4170 = vmatpush1.bf16.msra.mxu0 %v4119
      %4171 = vmatprep.subr.bf16.mxu0 0
      %4172 = vmatpush1.bf16.msra.mxu0 0
      %4173 = vmatprep.subr.bf16.mxu0 0
      %4174 = vmatpush1.bf16.msra.mxu0 0
      %4175 = vmatprep.subr.bf16.mxu0 0
      %4176 = vmatpush1.bf16.msra.mxu0 0
      %4177 = vmatprep.subr.bf16.mxu0 0
      %4178 = vmatpush1.bf16.msra.mxu0 0
      %4179 = vmatprep.subr.bf16.mxu0 0
      %4180 = vmatpush1.bf16.msra.mxu0 0
      %4181 = vmatprep.subr.bf16.mxu0 0
      %4182 = vmatpush1.bf16.msra.mxu0 0
      %4183 = vmatprep.subr.bf16.mxu0 0
      %4184 = vmatpush1.bf16.msra.mxu0 0
      %4185 = vmatprep.subr.bf16.mxu0 0
      %4186 = vmatpush1.bf16.msra.mxu0 0
      %4187 = vmatprep.mubr.bf16.mxu0 0
      %4188 = vmatmul.mubr.bf16.gmra.mrb[0].mxu0 %v3962
      %v4189 = vpop.f32.mrb[0].mxu0
      %v4190 = vadd.f32 0.0, %v4189
      %v4191 = vpop.f32.mrb[0].mxu0
      %v4192 = vadd.f32 0.0, %v4191
      %v4193 = vpop.f32.mrb[0].mxu0
      %v4194 = vpop.f32.mrb[0].mxu0
      %4195 = vdwg.mxu0
      %4196 = vmatprep.subr.bf16.mxu0 %v4094
      %4197 = vmatpush1.bf16.msra.mxu0 %v4093
      %4198 = vmatprep.subr.bf16.mxu0 %v4098
      %4199 = vmatpush1.bf16.msra.mxu0 %v4097
      %4200 = vmatprep.subr.bf16.mxu0 %v4102
      %4201 = vmatpush1.bf16.msra.mxu0 %v4101
      %4202 = vmatprep.subr.bf16.mxu0 %v4106
      %4203 = vmatpush1.bf16.msra.mxu0 %v4105
      %4204 = vmatprep.subr.bf16.mxu0 %v4110
      %4205 = vmatpush1.bf16.msra.mxu0 %v4109
      %4206 = vmatprep.subr.bf16.mxu0 %v4114
      %4207 = vmatpush1.bf16.msra.mxu0 %v4113
      %4208 = vmatprep.subr.bf16.mxu0 %v4118
      %4209 = vmatpush1.bf16.msra.mxu0 %v4117
      %4210 = vmatprep.subr.bf16.mxu0 %v4122
      %4211 = vmatpush1.bf16.msra.mxu0 %v4121
      %4212 = vmatprep.subr.bf16.mxu0 0
      %4213 = vmatpush1.bf16.msra.mxu0 0
      %4214 = vmatprep.subr.bf16.mxu0 0
      %4215 = vmatpush1.bf16.msra.mxu0 0
      %4216 = vmatprep.subr.bf16.mxu0 0
      %4217 = vmatpush1.bf16.msra.mxu0 0
      %4218 = vmatprep.subr.bf16.mxu0 0
      %4219 = vmatpush1.bf16.msra.mxu0 0
      %4220 = vmatprep.subr.bf16.mxu0 0
      %4221 = vmatpush1.bf16.msra.mxu0 0
      %4222 = vmatprep.subr.bf16.mxu0 0
      %4223 = vmatpush1.bf16.msra.mxu0 0
      %4224 = vmatprep.subr.bf16.mxu0 0
      %4225 = vmatpush1.bf16.msra.mxu0 0
      %4226 = vmatprep.subr.bf16.mxu0 0
      %4227 = vmatpush1.bf16.msra.mxu0 0
      %4228 = vmatprep.mubr.bf16.mxu0 0
      %4229 = vmatmul.mubr.bf16.gmra.mrb[0].mxu0 %v3962
      %v4230 = vpop.f32.mrb[0].mxu0
      %v4231 = vadd.f32 0.0, %v4230
      %v4232 = vpop.f32.mrb[0].mxu0
      %v4233 = vadd.f32 0.0, %v4232
      %v4234 = vpop.f32.mrb[0].mxu0
      %v4235 = vpop.f32.mrb[0].mxu0
      %4236 = vdwg.mxu0
      %v4241 = vcombine.low %v4190, %v4192
      %v4242 = vcombine.low %v4231, %v4233
      %v4244 = vunpack.c.l.s4 1983009808
      %v4245 = vunpack.c.0.s8 %v4244
      %v4246 = vlaneseq
      %v4247 = vshrl.u32 %v4246, 7
      %v4248 = vsub.s32 %v4245, %v4247
      %v4249 = vrot.slane %v4241, %v4248
      %v4251 = vunpack.c.l.s4 1983009808
      %v4252 = vunpack.c.0.s8 %v4251
      %v4253 = vlaneseq
      %v4254 = vshrl.u32 %v4253, 7
      %v4255 = vsub.s32 %v4252, %v4254
      %v4256 = vrot.slane %v4242, %v4255
      %v4257 = vcombine.low %v4249, %v4256
      %v4259 = vadd.f32 %v3961, %v4257
      %v4260 = vxor.u32 %v4259, 2147483648
      %v4261 = vmul.f32 %v4260, 1.442695
      %v4262 = vpow.pop %v4261
      %v4263 = vadd.f32 %v4262, 1.0
      %v4264 = vrcp.pop %v4263
      %v4265 = vmul.f32 1.0, %v4264
      %v4267 = vrot.slane %v4259, 2
      %v4269 = vxor.u32 %v4267, 2147483648
      %v4270 = vmul.f32 %v4269, 1.442695
      %v4271 = vpow.pop %v4270
      %v4272 = vadd.f32 %v4271, 1.0
      %v4273 = vrcp.pop %v4272
      %v4274 = vmul.f32 1.0, %v4273
      %v4275 = vrot.slane %v4259, 4
      %v4277 = vtanh.pop %v4275
      %v4278 = vrot.slane %v4259, 6
      %v4280 = vxor.u32 %v4278, 2147483648
      %v4281 = vmul.f32 %v4280, 1.442695
      %v4282 = vpow.pop %v4281
      %v4283 = vadd.f32 %v4282, 1.0
      %v4284 = vrcp.pop %v4283
      %v4285 = vmul.f32 1.0, %v4284
      %v4286 = vmul.f32 %v4274, %v3954
      %v4287 = vmul.f32 %v4265, %v4277
      %v4288 = vadd.f32 %v4286, %v4287
      %v4289 = vtanh.pop %v4288
      %v4290 = vmul.f32 %v4285, %v4289
      %s4291 = scalar_lea.vmem %s11, %s3957
      %v4292 = vld [vmem:[%s4291] sm:$0x1]
      %4294 = vset.pattern.permute.xlu0 48
      %4295 = vperm.xlu0 %4294, %v4290
      %v4296 = vpop.permute.xlu0 %4295
      %v4299 = vunpack.c.l.s4 269488144
      %v4300 = vunpack.c.0.s8 %v4299
      %v4301 = vlaneseq
      %v4302 = vshrl.u32 %v4301, 7
      %v4303 = vsub.s32 %v4300, %v4302
      %v4304 = vrot.slane %v4296, %v4303
      %v4306 = vlaneseq
      %v4307 = vshrl.u32 %v4306, 7
      %v4308 = vsub.s32 0, %v4307
      %v4309 = vrot.slane %v4292, %v4308
      %v4311 = vmul.f32 %v4304, %v4309
      %v4312 = vadd.f32 %v3955, %v4311
      %s4313 = ssub.s32 30, %s3956
      %s4314 = smul.u32 %s4313, 4
      %s4315 = smul.addr %s4314, 2
      %s4316 = scalar_lea.vmem [#allocation6], %s4315
      %v4317 = vld [vmem:[%s4316] sm:$0xff]
      %v4318 = vpack.c.bf16 %v4290, %v4290
      %4319 = vmatprep.subr.bf16.mxu0 %v4092
      %4320 = vmatpush1.bf16.msra.mxu0 %v4091
      %4321 = vmatprep.subr.bf16.mxu0 %v4096
      %4322 = vmatpush1.bf16.msra.mxu0 %v4095
      %4323 = vmatprep.subr.bf16.mxu0 %v4100
      %4324 = vmatpush1.bf16.msra.mxu0 %v4099
      %4325 = vmatprep.subr.bf16.mxu0 %v4104
      %4326 = vmatpush1.bf16.msra.mxu0 %v4103
      %4327 = vmatprep.subr.bf16.mxu0 %v4108
      %4328 = vmatpush1.bf16.msra.mxu0 %v4107
      %4329 = vmatprep.subr.bf16.mxu0 %v4112
      %4330 = vmatpush1.bf16.msra.mxu0 %v4111
      %4331 = vmatprep.subr.bf16.mxu0 %v4116
      %4332 = vmatpush1.bf16.msra.mxu0 %v4115
      %4333 = vmatprep.subr.bf16.mxu0 %v4120
      %4334 = vmatpush1.bf16.msra.mxu0 %v4119
      %4335 = vmatprep.subr.bf16.mxu0 0
      %4336 = vmatpush1.bf16.msra.mxu0 0
      %4337 = vmatprep.subr.bf16.mxu0 0
      %4338 = vmatpush1.bf16.msra.mxu0 0
      %4339 = vmatprep.subr.bf16.mxu0 0
      %4340 = vmatpush1.bf16.msra.mxu0 0
      %4341 = vmatprep.subr.bf16.mxu0 0
      %4342 = vmatpush1.bf16.msra.mxu0 0
      %4343 = vmatprep.subr.bf16.mxu0 0
      %4344 = vmatpush1.bf16.msra.mxu0 0
      %4345 = vmatprep.subr.bf16.mxu0 0
      %4346 = vmatpush1.bf16.msra.mxu0 0
      %4347 = vmatprep.subr.bf16.mxu0 0
      %4348 = vmatpush1.bf16.msra.mxu0 0
      %4349 = vmatprep.subr.bf16.mxu0 0
      %4350 = vmatpush1.bf16.msra.mxu0 0
      %4351 = vmatprep.mubr.bf16.mxu0 0
      %4352 = vmatmul.mubr.bf16.gmra.mrb[0].mxu0 %v4318
      %v4353 = vpop.f32.mrb[0].mxu0
      %v4354 = vadd.f32 0.0, %v4353
      %v4355 = vpop.f32.mrb[0].mxu0
      %v4356 = vadd.f32 0.0, %v4355
      %v4357 = vpop.f32.mrb[0].mxu0
      %v4358 = vpop.f32.mrb[0].mxu0
      %4359 = vdwg.mxu0
      %4360 = vmatprep.subr.bf16.mxu0 %v4094
      %4361 = vmatpush1.bf16.msra.mxu0 %v4093
      %4362 = vmatprep.subr.bf16.mxu0 %v4098
      %4363 = vmatpush1.bf16.msra.mxu0 %v4097
      %4364 = vmatprep.subr.bf16.mxu0 %v4102
      %4365 = vmatpush1.bf16.msra.mxu0 %v4101
      %4366 = vmatprep.subr.bf16.mxu0 %v4106
      %4367 = vmatpush1.bf16.msra.mxu0 %v4105
      %4368 = vmatprep.subr.bf16.mxu0 %v4110
      %4369 = vmatpush1.bf16.msra.mxu0 %v4109
      %4370 = vmatprep.subr.bf16.mxu0 %v4114
      %4371 = vmatpush1.bf16.msra.mxu0 %v4113
      %4372 = vmatprep.subr.bf16.mxu0 %v4118
      %4373 = vmatpush1.bf16.msra.mxu0 %v4117
      %4374 = vmatprep.subr.bf16.mxu0 %v4122
      %4375 = vmatpush1.bf16.msra.mxu0 %v4121
      %4376 = vmatprep.subr.bf16.mxu0 0
      %4377 = vmatpush1.bf16.msra.mxu0 0
      %4378 = vmatprep.subr.bf16.mxu0 0
      %4379 = vmatpush1.bf16.msra.mxu0 0
      %4380 = vmatprep.subr.bf16.mxu0 0
      %4381 = vmatpush1.bf16.msra.mxu0 0
      %4382 = vmatprep.subr.bf16.mxu0 0
      %4383 = vmatpush1.bf16.msra.mxu0 0
      %4384 = vmatprep.subr.bf16.mxu0 0
      %4385 = vmatpush1.bf16.msra.mxu0 0
      %4386 = vmatprep.subr.bf16.mxu0 0
      %4387 = vmatpush1.bf16.msra.mxu0 0
      %4388 = vmatprep.subr.bf16.mxu0 0
      %4389 = vmatpush1.bf16.msra.mxu0 0
      %4390 = vmatprep.subr.bf16.mxu0 0
      %4391 = vmatpush1.bf16.msra.mxu0 0
      %4392 = vmatprep.mubr.bf16.mxu0 0
      %4393 = vmatmul.mubr.bf16.gmra.mrb[0].mxu0 %v4318
      %v4394 = vpop.f32.mrb[0].mxu0
      %v4395 = vadd.f32 0.0, %v4394
      %v4396 = vpop.f32.mrb[0].mxu0
      %v4397 = vadd.f32 0.0, %v4396
      %v4398 = vpop.f32.mrb[0].mxu0
      %v4399 = vpop.f32.mrb[0].mxu0
      %4400 = vdwg.mxu0
      %v4405 = vcombine.low %v4354, %v4356
      %v4406 = vcombine.low %v4395, %v4397
      %v4408 = vunpack.c.l.s4 1983009808
      %v4409 = vunpack.c.0.s8 %v4408
      %v4410 = vlaneseq
      %v4411 = vshrl.u32 %v4410, 7
      %v4412 = vsub.s32 %v4409, %v4411
      %v4413 = vrot.slane %v4405, %v4412
      %v4415 = vunpack.c.l.s4 1983009808
      %v4416 = vunpack.c.0.s8 %v4415
      %v4417 = vlaneseq
      %v4418 = vshrl.u32 %v4417, 7
      %v4419 = vsub.s32 %v4416, %v4418
      %v4420 = vrot.slane %v4406, %v4419
      %v4421 = vcombine.low %v4413, %v4420
      %v4423 = vadd.f32 %v4317, %v4421
      %v4424 = vxor.u32 %v4423, 2147483648
      %v4425 = vmul.f32 %v4424, 1.442695
      %v4426 = vpow.pop %v4425
      %v4427 = vadd.f32 %v4426, 1.0
      %v4428 = vrcp.pop %v4427
      %v4429 = vmul.f32 1.0, %v4428
      %v4431 = vrot.slane %v4423, 2
      %v4433 = vxor.u32 %v4431, 2147483648
      %v4434 = vmul.f32 %v4433, 1.442695
      %v4435 = vpow.pop %v4434
      %v4436 = vadd.f32 %v4435, 1.0
      %v4437 = vrcp.pop %v4436
      %v4438 = vmul.f32 1.0, %v4437
      %v4439 = vrot.slane %v4423, 4
      %v4441 = vtanh.pop %v4439
      %v4442 = vrot.slane %v4423, 6
      %v4444 = vxor.u32 %v4442, 2147483648
      %v4445 = vmul.f32 %v4444, 1.442695
      %v4446 = vpow.pop %v4445
      %v4447 = vadd.f32 %v4446, 1.0
      %v4448 = vrcp.pop %v4447
      %v4449 = vmul.f32 1.0, %v4448
      %v4450 = vmul.f32 %v4438, %v4288
      %v4451 = vmul.f32 %v4429, %v4441
      %v4452 = vadd.f32 %v4450, %v4451
      %v4453 = vtanh.pop %v4452
      %v4454 = vmul.f32 %v4449, %v4453
      %s4455 = scalar_lea.vmem %s11, %s4313
      %v4456 = vld [vmem:[%s4455] sm:$0x1]
      %4458 = vset.pattern.permute.xlu0 48
      %4459 = vperm.xlu0 %4458, %v4454
      %v4460 = vpop.permute.xlu0 %4459
      %v4463 = vunpack.c.l.s4 269488144
      %v4464 = vunpack.c.0.s8 %v4463
      %v4465 = vlaneseq
      %v4466 = vshrl.u32 %v4465, 7
      %v4467 = vsub.s32 %v4464, %v4466
      %v4468 = vrot.slane %v4460, %v4467
      %v4470 = vlaneseq
      %v4471 = vshrl.u32 %v4470, 7
      %v4472 = vsub.s32 0, %v4471
      %v4473 = vrot.slane %v4456, %v4472
      %v4475 = vmul.f32 %v4468, %v4473
      %v4476 = vadd.f32 %v4312, %v4475
      %s4477 = ssub.s32 29, %s3956
      %s4478 = smul.u32 %s4477, 4
      %s4479 = smul.addr %s4478, 2
      %s4480 = scalar_lea.vmem [#allocation6], %s4479
      %v4481 = vld [vmem:[%s4480] sm:$0xff]
      %v4482 = vpack.c.bf16 %v4454, %v4454
      %4483 = vmatprep.subr.bf16.mxu0 %v4092
      %4484 = vmatpush1.bf16.msra.mxu0 %v4091
      %4485 = vmatprep.subr.bf16.mxu0 %v4096
      %4486 = vmatpush1.bf16.msra.mxu0 %v4095
      %4487 = vmatprep.subr.bf16.mxu0 %v4100
      %4488 = vmatpush1.bf16.msra.mxu0 %v4099
      %4489 = vmatprep.subr.bf16.mxu0 %v4104
      %4490 = vmatpush1.bf16.msra.mxu0 %v4103
      %4491 = vmatprep.subr.bf16.mxu0 %v4108
      %4492 = vmatpush1.bf16.msra.mxu0 %v4107
      %4493 = vmatprep.subr.bf16.mxu0 %v4112
      %4494 = vmatpush1.bf16.msra.mxu0 %v4111
      %4495 = vmatprep.subr.bf16.mxu0 %v4116
      %4496 = vmatpush1.bf16.msra.mxu0 %v4115
      %4497 = vmatprep.subr.bf16.mxu0 %v4120
      %4498 = vmatpush1.bf16.msra.mxu0 %v4119
      %4499 = vmatprep.subr.bf16.mxu0 0
      %4500 = vmatpush1.bf16.msra.mxu0 0
      %4501 = vmatprep.subr.bf16.mxu0 0
      %4502 = vmatpush1.bf16.msra.mxu0 0
      %4503 = vmatprep.subr.bf16.mxu0 0
      %4504 = vmatpush1.bf16.msra.mxu0 0
      %4505 = vmatprep.subr.bf16.mxu0 0
      %4506 = vmatpush1.bf16.msra.mxu0 0
      %4507 = vmatprep.subr.bf16.mxu0 0
      %4508 = vmatpush1.bf16.msra.mxu0 0
      %4509 = vmatprep.subr.bf16.mxu0 0
      %4510 = vmatpush1.bf16.msra.mxu0 0
      %4511 = vmatprep.subr.bf16.mxu0 0
      %4512 = vmatpush1.bf16.msra.mxu0 0
      %4513 = vmatprep.subr.bf16.mxu0 0
      %4514 = vmatpush1.bf16.msra.mxu0 0
      %4515 = vmatprep.mubr.bf16.mxu0 0
      %4516 = vmatmul.mubr.bf16.gmra.mrb[0].mxu0 %v4482
      %v4517 = vpop.f32.mrb[0].mxu0
      %v4518 = vadd.f32 0.0, %v4517
      %v4519 = vpop.f32.mrb[0].mxu0
      %v4520 = vadd.f32 0.0, %v4519
      %v4521 = vpop.f32.mrb[0].mxu0
      %v4522 = vpop.f32.mrb[0].mxu0
      %4523 = vdwg.mxu0
      %4524 = vmatprep.subr.bf16.mxu0 %v4094
      %4525 = vmatpush1.bf16.msra.mxu0 %v4093
      %4526 = vmatprep.subr.bf16.mxu0 %v4098
      %4527 = vmatpush1.bf16.msra.mxu0 %v4097
      %4528 = vmatprep.subr.bf16.mxu0 %v4102
      %4529 = vmatpush1.bf16.msra.mxu0 %v4101
      %4530 = vmatprep.subr.bf16.mxu0 %v4106
      %4531 = vmatpush1.bf16.msra.mxu0 %v4105
      %4532 = vmatprep.subr.bf16.mxu0 %v4110
      %4533 = vmatpush1.bf16.msra.mxu0 %v4109
      %4534 = vmatprep.subr.bf16.mxu0 %v4114
      %4535 = vmatpush1.bf16.msra.mxu0 %v4113
      %4536 = vmatprep.subr.bf16.mxu0 %v4118
      %4537 = vmatpush1.bf16.msra.mxu0 %v4117
      %4538 = vmatprep.subr.bf16.mxu0 %v4122
      %4539 = vmatpush1.bf16.msra.mxu0 %v4121
      %4540 = vmatprep.subr.bf16.mxu0 0
      %4541 = vmatpush1.bf16.msra.mxu0 0
      %4542 = vmatprep.subr.bf16.mxu0 0
      %4543 = vmatpush1.bf16.msra.mxu0 0
      %4544 = vmatprep.subr.bf16.mxu0 0
      %4545 = vmatpush1.bf16.msra.mxu0 0
      %4546 = vmatprep.subr.bf16.mxu0 0
      %4547 = vmatpush1.bf16.msra.mxu0 0
      %4548 = vmatprep.subr.bf16.mxu0 0
      %4549 = vmatpush1.bf16.msra.mxu0 0
      %4550 = vmatprep.subr.bf16.mxu0 0
      %4551 = vmatpush1.bf16.msra.mxu0 0
      %4552 = vmatprep.subr.bf16.mxu0 0
      %4553 = vmatpush1.bf16.msra.mxu0 0
      %4554 = vmatprep.subr.bf16.mxu0 0
      %4555 = vmatpush1.bf16.msra.mxu0 0
      %4556 = vmatprep.mubr.bf16.mxu0 0
      %4557 = vmatmul.mubr.bf16.gmra.mrb[0].mxu0 %v4482
      %v4558 = vpop.f32.mrb[0].mxu0
      %v4559 = vadd.f32 0.0, %v4558
      %v4560 = vpop.f32.mrb[0].mxu0
      %v4561 = vadd.f32 0.0, %v4560
      %v4562 = vpop.f32.mrb[0].mxu0
      %v4563 = vpop.f32.mrb[0].mxu0
      %4564 = vdwg.mxu0
      %v4569 = vcombine.low %v4518, %v4520
      %v4570 = vcombine.low %v4559, %v4561
      %v4572 = vunpack.c.l.s4 1983009808
      %v4573 = vunpack.c.0.s8 %v4572
      %v4574 = vlaneseq
      %v4575 = vshrl.u32 %v4574, 7
      %v4576 = vsub.s32 %v4573, %v4575
      %v4577 = vrot.slane %v4569, %v4576
      %v4579 = vunpack.c.l.s4 1983009808
      %v4580 = vunpack.c.0.s8 %v4579
      %v4581 = vlaneseq
      %v4582 = vshrl.u32 %v4581, 7
      %v4583 = vsub.s32 %v4580, %v4582
      %v4584 = vrot.slane %v4570, %v4583
      %v4585 = vcombine.low %v4577, %v4584
      %v4587 = vadd.f32 %v4481, %v4585
      %v4588 = vxor.u32 %v4587, 2147483648
      %v4589 = vmul.f32 %v4588, 1.442695
      %v4590 = vpow.pop %v4589
      %v4591 = vadd.f32 %v4590, 1.0
      %v4592 = vrcp.pop %v4591
      %v4593 = vmul.f32 1.0, %v4592
      %v4595 = vrot.slane %v4587, 2
      %v4597 = vxor.u32 %v4595, 2147483648
      %v4598 = vmul.f32 %v4597, 1.442695
      %v4599 = vpow.pop %v4598
      %v4600 = vadd.f32 %v4599, 1.0
      %v4601 = vrcp.pop %v4600
      %v4602 = vmul.f32 1.0, %v4601
      %v4603 = vrot.slane %v4587, 4
      %v4605 = vtanh.pop %v4603
      %v4606 = vrot.slane %v4587, 6
      %v4608 = vxor.u32 %v4606, 2147483648
      %v4609 = vmul.f32 %v4608, 1.442695
      %v4610 = vpow.pop %v4609
      %v4611 = vadd.f32 %v4610, 1.0
      %v4612 = vrcp.pop %v4611
      %v4613 = vmul.f32 1.0, %v4612
      %v4614 = vmul.f32 %v4602, %v4452
      %v4615 = vmul.f32 %v4593, %v4605
      %v4616 = vadd.f32 %v4614, %v4615
      %v4617 = vtanh.pop %v4616
      %v4618 = vmul.f32 %v4613, %v4617
      %s4619 = scalar_lea.vmem %s11, %s4477
      %v4620 = vld [vmem:[%s4619] sm:$0x1]
      %4622 = vset.pattern.permute.xlu0 48
      %4623 = vperm.xlu0 %4622, %v4618
      %v4624 = vpop.permute.xlu0 %4623
      %v4627 = vunpack.c.l.s4 269488144
      %v4628 = vunpack.c.0.s8 %v4627
      %v4629 = vlaneseq
      %v4630 = vshrl.u32 %v4629, 7
      %v4631 = vsub.s32 %v4628, %v4630
      %v4632 = vrot.slane %v4624, %v4631
      %v4634 = vlaneseq
      %v4635 = vshrl.u32 %v4634, 7
      %v4636 = vsub.s32 0, %v4635
      %v4637 = vrot.slane %v4620, %v4636
      %v4639 = vmul.f32 %v4632, %v4637
      %v4640 = vadd.f32 %v4476, %v4639
      %s4641 = ssub.s32 28, %s3956
      %s4642 = smul.u32 %s4641, 4
      %s4643 = smul.addr %s4642, 2
      %s4644 = scalar_lea.vmem [#allocation6], %s4643
      %v4645 = vld [vmem:[%s4644] sm:$0xff]
      %v4646 = vpack.c.bf16 %v4618, %v4618
      %4647 = vmatprep.subr.bf16.mxu0 %v4092
      %4648 = vmatpush1.bf16.msra.mxu0 %v4091
      %4649 = vmatprep.subr.bf16.mxu0 %v4096
      %4650 = vmatpush1.bf16.msra.mxu0 %v4095
      %4651 = vmatprep.subr.bf16.mxu0 %v4100
      %4652 = vmatpush1.bf16.msra.mxu0 %v4099
      %4653 = vmatprep.subr.bf16.mxu0 %v4104
      %4654 = vmatpush1.bf16.msra.mxu0 %v4103
      %4655 = vmatprep.subr.bf16.mxu0 %v4108
      %4656 = vmatpush1.bf16.msra.mxu0 %v4107
      %4657 = vmatprep.subr.bf16.mxu0 %v4112
      %4658 = vmatpush1.bf16.msra.mxu0 %v4111
      %4659 = vmatprep.subr.bf16.mxu0 %v4116
      %4660 = vmatpush1.bf16.msra.mxu0 %v4115
      %4661 = vmatprep.subr.bf16.mxu0 %v4120
      %4662 = vmatpush1.bf16.msra.mxu0 %v4119
      %4663 = vmatprep.subr.bf16.mxu0 0
      %4664 = vmatpush1.bf16.msra.mxu0 0
      %4665 = vmatprep.subr.bf16.mxu0 0
      %4666 = vmatpush1.bf16.msra.mxu0 0
      %4667 = vmatprep.subr.bf16.mxu0 0
      %4668 = vmatpush1.bf16.msra.mxu0 0
      %4669 = vmatprep.subr.bf16.mxu0 0
      %4670 = vmatpush1.bf16.msra.mxu0 0
      %4671 = vmatprep.subr.bf16.mxu0 0
      %4672 = vmatpush1.bf16.msra.mxu0 0
      %4673 = vmatprep.subr.bf16.mxu0 0
      %4674 = vmatpush1.bf16.msra.mxu0 0
      %4675 = vmatprep.subr.bf16.mxu0 0
      %4676 = vmatpush1.bf16.msra.mxu0 0
      %4677 = vmatprep.subr.bf16.mxu0 0
      %4678 = vmatpush1.bf16.msra.mxu0 0
      %4679 = vmatprep.mubr.bf16.mxu0 0
      %4680 = vmatmul.mubr.bf16.gmra.mrb[0].mxu0 %v4646
      %v4681 = vpop.f32.mrb[0].mxu0
      %v4682 = vadd.f32 0.0, %v4681
      %v4683 = vpop.f32.mrb[0].mxu0
      %v4684 = vadd.f32 0.0, %v4683
      %v4685 = vpop.f32.mrb[0].mxu0
      %v4686 = vpop.f32.mrb[0].mxu0
      %4687 = vdwg.mxu0
      %4688 = vmatprep.subr.bf16.mxu0 %v4094
      %4689 = vmatpush1.bf16.msra.mxu0 %v4093
      %4690 = vmatprep.subr.bf16.mxu0 %v4098
      %4691 = vmatpush1.bf16.msra.mxu0 %v4097
      %4692 = vmatprep.subr.bf16.mxu0 %v4102
      %4693 = vmatpush1.bf16.msra.mxu0 %v4101
      %4694 = vmatprep.subr.bf16.mxu0 %v4106
      %4695 = vmatpush1.bf16.msra.mxu0 %v4105
      %4696 = vmatprep.subr.bf16.mxu0 %v4110
      %4697 = vmatpush1.bf16.msra.mxu0 %v4109
      %4698 = vmatprep.subr.bf16.mxu0 %v4114
      %4699 = vmatpush1.bf16.msra.mxu0 %v4113
      %4700 = vmatprep.subr.bf16.mxu0 %v4118
      %4701 = vmatpush1.bf16.msra.mxu0 %v4117
      %4702 = vmatprep.subr.bf16.mxu0 %v4122
      %4703 = vmatpush1.bf16.msra.mxu0 %v4121
      %4704 = vmatprep.subr.bf16.mxu0 0
      %4705 = vmatpush1.bf16.msra.mxu0 0
      %4706 = vmatprep.subr.bf16.mxu0 0
      %4707 = vmatpush1.bf16.msra.mxu0 0
      %4708 = vmatprep.subr.bf16.mxu0 0
      %4709 = vmatpush1.bf16.msra.mxu0 0
      %4710 = vmatprep.subr.bf16.mxu0 0
      %4711 = vmatpush1.bf16.msra.mxu0 0
      %4712 = vmatprep.subr.bf16.mxu0 0
      %4713 = vmatpush1.bf16.msra.mxu0 0
      %4714 = vmatprep.subr.bf16.mxu0 0
      %4715 = vmatpush1.bf16.msra.mxu0 0
      %4716 = vmatprep.subr.bf16.mxu0 0
      %4717 = vmatpush1.bf16.msra.mxu0 0
      %4718 = vmatprep.subr.bf16.mxu0 0
      %4719 = vmatpush1.bf16.msra.mxu0 0
      %4720 = vmatprep.mubr.bf16.mxu0 0
      %4721 = vmatmul.mubr.bf16.gmra.mrb[0].mxu0 %v4646
      %v4722 = vpop.f32.mrb[0].mxu0
      %v4723 = vadd.f32 0.0, %v4722
      %v4724 = vpop.f32.mrb[0].mxu0
      %v4725 = vadd.f32 0.0, %v4724
      %v4726 = vpop.f32.mrb[0].mxu0
      %v4727 = vpop.f32.mrb[0].mxu0
      %4728 = vdwg.mxu0
      %v4733 = vcombine.low %v4682, %v4684
      %v4734 = vcombine.low %v4723, %v4725
      %v4736 = vunpack.c.l.s4 1983009808
      %v4737 = vunpack.c.0.s8 %v4736
      %v4738 = vlaneseq
      %v4739 = vshrl.u32 %v4738, 7
      %v4740 = vsub.s32 %v4737, %v4739
      %v4741 = vrot.slane %v4733, %v4740
      %v4743 = vunpack.c.l.s4 1983009808
      %v4744 = vunpack.c.0.s8 %v4743
      %v4745 = vlaneseq
      %v4746 = vshrl.u32 %v4745, 7
      %v4747 = vsub.s32 %v4744, %v4746
      %v4748 = vrot.slane %v4734, %v4747
      %v4749 = vcombine.low %v4741, %v4748
      %v4751 = vadd.f32 %v4645, %v4749
      %v4752 = vxor.u32 %v4751, 2147483648
      %v4753 = vmul.f32 %v4752, 1.442695
      %v4754 = vpow.pop %v4753
      %v4755 = vadd.f32 %v4754, 1.0
      %v4756 = vrcp.pop %v4755
      %v4757 = vmul.f32 1.0, %v4756
      %v4759 = vrot.slane %v4751, 2
      %v4761 = vxor.u32 %v4759, 2147483648
      %v4762 = vmul.f32 %v4761, 1.442695
      %v4763 = vpow.pop %v4762
      %v4764 = vadd.f32 %v4763, 1.0
      %v4765 = vrcp.pop %v4764
      %v4766 = vmul.f32 1.0, %v4765
      %v4767 = vrot.slane %v4751, 4
      %v4769 = vtanh.pop %v4767
      %v4770 = vrot.slane %v4751, 6
      %v4772 = vxor.u32 %v4770, 2147483648
      %v4773 = vmul.f32 %v4772, 1.442695
      %v4774 = vpow.pop %v4773
      %v4775 = vadd.f32 %v4774, 1.0
      %v4776 = vrcp.pop %v4775
      %v4777 = vmul.f32 1.0, %v4776
      %v4778 = vmul.f32 %v4766, %v4616
      %v4779 = vmul.f32 %v4757, %v4769
      %v4780 = vadd.f32 %v4778, %v4779
      %v4781 = vtanh.pop %v4780
      %v4782 = vmul.f32 %v4777, %v4781
      %s4783 = scalar_lea.vmem %s11, %s4641
      %v4784 = vld [vmem:[%s4783] sm:$0x1]
      %4786 = vset.pattern.permute.xlu0 48
      %4787 = vperm.xlu0 %4786, %v4782
      %v4788 = vpop.permute.xlu0 %4787
      %v4791 = vunpack.c.l.s4 269488144
      %v4792 = vunpack.c.0.s8 %v4791
      %v4793 = vlaneseq
      %v4794 = vshrl.u32 %v4793, 7
      %v4795 = vsub.s32 %v4792, %v4794
      %v4796 = vrot.slane %v4788, %v4795
      %v4798 = vlaneseq
      %v4799 = vshrl.u32 %v4798, 7
      %v4800 = vsub.s32 0, %v4799
      %v4801 = vrot.slane %v4784, %v4800
      %v4803 = vmul.f32 %v4796, %v4801
      %v4804 = vadd.f32 %v4640, %v4803
    $region87: #{model_forward.1} parent=1 // loop_footer
      %s3952 = sadd.s32 1, %s3948
    $region88: #{model_forward.1} parent=1 // loop_footer_branch
      %3947 = sbr.rel target = $region84
    $region89: #{model_forward.1} parent=1 // loop_exit
      _
    %v4805 = vld [vmem:[%s12] sm:$0x7]
    %v4806 = vld [vmem:[%s13] sm:$0x1]
    %v4808 = vlaneseq
    %v4809 = vshrl.u32 %v4808, 7
    %v4810 = vsub.s32 0, %v4809
    %v4811 = vrot.slane %v4806, %v4810
    %v4815 = vlaneseq
    %v4816 = vand.u32 %v4815, 127
    %v4817 = vlaneseq
    %v4818 = vshrl.u32 %v4817, 7
    %v4819 = vsub.s32 %v4816, %v4818
    %v4820 = vrot.slane %v266, %v4819
    %v4821 = vlaneseq
    %v4822 = vshrl.u32 %v4821, 7
    %v4823 = vsub.s32 %v4816, %v4822
    %v4824 = vrot.slane %v267, %v4823
    %vm4825 = vcmask 1041409
    %v4826 = vsel %vm4825, %v4824, %v4820
    %vm4827 = vcmask 23552
    %v4828 = vsel %vm4827, %v4826, 0
    %v4831 = vsel %vm161, %v4805, 0
    %4833 = vmatprep.subr.mxu0 0.0
    %4834 = vmatpush1.msra.mxu0 %v4831
    %4835 = vmatprep.subr.mxu0 0.0
    %4836 = vmatpush1.msra.mxu0 0.0
    %4837 = vmatprep.subr.mxu0 0.0
    %4838 = vmatpush1.msra.mxu0 0.0
    %4839 = vmatprep.subr.mxu0 0.0
    %4840 = vmatpush1.msra.mxu0 0.0
    %4841 = vmatprep.subr.mxu0 0.0
    %4842 = vmatpush1.msra.mxu0 0.0
    %4843 = vmatprep.subr.mxu0 0.0
    %4844 = vmatpush1.msra.mxu0 0.0
    %4845 = vmatprep.subr.mxu0 0.0
    %4846 = vmatpush1.msra.mxu0 0.0
    %4847 = vmatprep.subr.mxu0 0.0
    %4848 = vmatpush1.msra.mxu0 0.0
    %4849 = vmatprep.subr.mxu0 0.0
    %4850 = vmatpush1.msra.mxu0 0.0
    %4851 = vmatprep.subr.mxu0 0.0
    %4852 = vmatpush1.msra.mxu0 0.0
    %4853 = vmatprep.subr.mxu0 0.0
    %4854 = vmatpush1.msra.mxu0 0.0
    %4855 = vmatprep.subr.mxu0 0.0
    %4856 = vmatpush1.msra.mxu0 0.0
    %4857 = vmatprep.subr.mxu0 0.0
    %4858 = vmatpush1.msra.mxu0 0.0
    %4859 = vmatprep.subr.mxu0 0.0
    %4860 = vmatpush1.msra.mxu0 0.0
    %4861 = vmatprep.subr.mxu0 0.0
    %4862 = vmatpush1.msra.mxu0 0.0
    %4863 = vmatprep.subr.mxu0 0.0
    %4864 = vmatpush1.msra.mxu0 0.0
    %4865 = vmatprep.subr.mxu0 0.0
    %4866 = vmatpush1.msra.mxu0 0.0
    %4867 = vmatprep.subr.mxu0 0.0
    %4868 = vmatpush1.msra.mxu0 0.0
    %4869 = vmatprep.subr.mxu0 0.0
    %4870 = vmatpush1.msra.mxu0 0.0
    %4871 = vmatprep.subr.mxu0 0.0
    %4872 = vmatpush1.msra.mxu0 0.0
    %4873 = vmatprep.subr.mxu0 0.0
    %4874 = vmatpush1.msra.mxu0 0.0
    %4875 = vmatprep.subr.mxu0 0.0
    %4876 = vmatpush1.msra.mxu0 0.0
    %4877 = vmatprep.subr.mxu0 0.0
    %4878 = vmatpush1.msra.mxu0 0.0
    %4879 = vmatprep.subr.mxu0 0.0
    %4880 = vmatpush1.msra.mxu0 0.0
    %4881 = vmatprep.subr.mxu0 0.0
    %4882 = vmatpush1.msra.mxu0 0.0
    %4883 = vmatprep.subr.mxu0 0.0
    %4884 = vmatpush1.msra.mxu0 0.0
    %4885 = vmatprep.subr.mxu0 0.0
    %4886 = vmatpush1.msra.mxu0 0.0
    %4887 = vmatprep.subr.mxu0 0.0
    %4888 = vmatpush1.msra.mxu0 0.0
    %4889 = vmatprep.subr.mxu0 0.0
    %4890 = vmatpush1.msra.mxu0 0.0
    %4891 = vmatprep.subr.mxu0 0.0
    %4892 = vmatpush1.msra.mxu0 0.0
    %4893 = vmatprep.subr.mxu0 0.0
    %4894 = vmatpush1.msra.mxu0 0.0
    %4895 = vmatprep.subr.mxu0 0.0
    %4896 = vmatpush1.msra.mxu0 0.0
    %4897 = vmatprep.mubr.f32.mxu0 0.0
    %4898 = vmatmul.mubr.f32.gmra.mrb[0].mxu0 %v4828
    %v4899 = vpop.f32.mrb[0].mxu0
    %v4900 = vadd.f32 %v4811, %v4899
    %v4901 = vpop.f32.mrb[0].mxu0
    %4902 = vdwg.mxu0
    %v4903 = vadd.f32 %v4900, %v3955
    %vm4904 = vcmask 9216
    %4905 = vst.msk [vmem:[#allocation10] sm:$0x3] %vm4904, %v4903
    // Predicated region
    $region90: #{model_forward.1} parent=1 // pred_check
      _
    $region91: #{model_forward.1} parent=1 // pred_check_branch
      %4907 = sbr.rel (0) target = $region93
    $region92: #{model_forward.1} parent=1 // pred_region
      %s4909 = ssub.s32 32, 32
      %4910 = vsyncadd [#allocation9], %s4909
      %s4912 = sshll.u32 [#allocation10], 4
      %s4913 = int_to_ptr.vmem [resolvable:$true] %s4912
      %4915 = dma.vmem_to_hbm [thread:$0]  %s4913, 32, %s14, [#allocation9]
    $region93: #{model_forward.1} parent=1 // pred_fallthru
      _
    // Predicated region
    $region94: #{model_forward.1} parent=1 // pred_check
      _
    $region95: #{model_forward.1} parent=1 // pred_check_branch
      %4917 = sbr.rel (0) target = $region97
    $region96: #{model_forward.1} parent=1 // pred_region
      %4918 = dma.done [#allocation9], 32
    $region97: #{model_forward.1} parent=1 // pred_fallthru
      _
    %4919 = vsyncpa [#allocation8], 1
    %4920 = vsyncpa [#allocation9], 1

</llo_original>
